<compile_context>
chip_gen: v6e
topology: v6e:2x2x1
jax: 0.10.0
libtpu: 0.0.40
codegen_flags: <defaults>
</compile_context>

<pallas_src>
import functools

import jax
import jax.numpy as jnp
from jax.experimental import pallas as pl
from jax.experimental.pallas import tpu as pltpu


def _mlp_kernel(x_ref,
                w1_ref, b1_ref,
                w2_ref, b2_ref,
                w3_ref, b3_ref,
                w4mu_ref, b4mu_ref,
                w4lv_ref, b4lv_ref,
                mu_ref, logvar_ref):
    """Fused 4x Linear (+ReLU) MLP; last layer split into (mu, logvar) heads."""
    cdt = w1_ref.dtype  # bf16 compute dtype for MXU inputs

    h = jnp.dot(x_ref[...], w1_ref[...],
                preferred_element_type=jnp.float32) + b1_ref[...]
    h = jnp.maximum(h, 0.0).astype(cdt)

    h = jnp.dot(h, w2_ref[...],
                preferred_element_type=jnp.float32) + b2_ref[...]
    h = jnp.maximum(h, 0.0).astype(cdt)

    h = jnp.dot(h, w3_ref[...],
                preferred_element_type=jnp.float32) + b3_ref[...]
    h = jnp.maximum(h, 0.0).astype(cdt)

    mu = jnp.dot(h, w4mu_ref[...],
                 preferred_element_type=jnp.float32) + b4mu_ref[...]
    lv = jnp.dot(h, w4lv_ref[...],
                 preferred_element_type=jnp.float32) + b4lv_ref[...]
    mu_ref[...] = mu.astype(mu_ref.dtype)
    logvar_ref[...] = lv.astype(logvar_ref.dtype)
    # TODO(synk): the PyTorch module only host-prints a warning on NaN/Inf in
    # mu/logvar; that side-effecting print has no Pallas equivalent and is
    # intentionally omitted (values are returned unchanged either way).


def _round_up(n, m):
    return ((n + m - 1) // m) * m


@functools.partial(jax.jit, static_argnames=("batch_tile",))
def inverse_mapping_network(x, params, batch_tile=256):
    """Forward pass. x: [B, image_latent_dim] f32 -> (mu, logvar) each [B, d_audio] f32."""
    (w1, b1), (w2, b2), (w3, b3), (w4, b4) = params
    B, d_in = x.shape
    d_audio = w4.shape[1] // 2

    # Balanced batch tiling: tile rows are a multiple of 8 (sublane), batch is
    # zero-padded to num_tiles * bt and the pad is sliced off afterwards.
    # Large batches produce grid >= 2 so both v7x TensorCores are used.
    num_tiles = max(1, (B + batch_tile - 1) // batch_tile)
    bt = _round_up((B + num_tiles - 1) // num_tiles, 8)
    B_pad = num_tiles * bt
    if B_pad != B:
        x = jnp.pad(x, ((0, B_pad - B), (0, 0)))
    grid = (num_tiles,)

    # bf16 weights / activations, f32 accumulation & biases.
    cdt = jnp.bfloat16
    x = x.astype(cdt)
    w1, w2, w3 = (w.astype(cdt) for w in (w1, w2, w3))
    w4_mu = w4[:, :d_audio].astype(cdt)
    w4_lv = w4[:, d_audio:].astype(cdt)
    b4_mu = b4[:, :d_audio]
    b4_lv = b4[:, d_audio:]

    # Weights / biases: constant index_map -> fetched once; single-buffer them
    # so they don't pay 2x VMEM residency.
    def full(arr):
        return pl.BlockSpec(arr.shape, lambda i: (0,) * arr.ndim,
                            pipeline_mode=pl.Buffered(1))

    in_specs = [
        pl.BlockSpec((bt, d_in), lambda i: (i, 0)),
        full(w1), full(b1),
        full(w2), full(b2),
        full(w3), full(b3),
        full(w4_mu), full(b4_mu),
        full(w4_lv), full(b4_lv),
    ]
    out_specs = [
        pl.BlockSpec((bt, d_audio), lambda i: (i, 0)),
        pl.BlockSpec((bt, d_audio), lambda i: (i, 0)),
    ]

    mu, logvar = pl.pallas_call(
        _mlp_kernel,
        grid=grid,
        in_specs=in_specs,
        out_specs=out_specs,
        out_shape=(
            jax.ShapeDtypeStruct((B_pad, d_audio), jnp.float32),
            jax.ShapeDtypeStruct((B_pad, d_audio), jnp.float32),
        ),
        compiler_params=pltpu.CompilerParams(
            dimension_semantics=("parallel",),
            vmem_limit_bytes=32 * 1024 * 1024,
        ),
    )(x, w1, b1, w2, b2, w3, b3, w4_mu, b4_mu, w4_lv, b4_lv)

    if B_pad != B:
        mu = mu[:B]
        logvar = logvar[:B]
    return mu, logvar
    # TODO(synk): if this MLP is called per decoding step, the one-time bf16
    # weight DMA could additionally be hidden behind preceding work with a
    # cross-pallas_call prefetch (P10); out of scope for a single call.


def init_params(key, image_latent_dim=512, audio_latent_dim=512):
    """Deterministic init mimicking nn.Linear default (U[-1/sqrt(fan_in), +])."""
    dims = [(image_latent_dim, 512), (512, 512), (512, 512),
            (512, audio_latent_dim * 2)]
    params = []
    for fan_in, fan_out in dims:
        key, kw, kb = jax.random.split(key, 3)
        bound = 1.0 / jnp.sqrt(fan_in)
        w = jax.random.uniform(kw, (fan_in, fan_out), jnp.float32, -bound, bound)
        b = jax.random.uniform(kb, (1, fan_out), jnp.float32, -bound, bound)
        params.append((w, b))
    return params


def reference(x, params, compute_dtype=jnp.bfloat16):
    """Plain-JAX reference with the same mixed precision as the kernel."""
    (w1, b1), (w2, b2), (w3, b3), (w4, b4) = params
    h = x.astype(compute_dtype)
    for w, b in ((w1, b1), (w2, b2), (w3, b3)):
        h = jnp.dot(h, w.astype(compute_dtype),
                    preferred_element_type=jnp.float32) + b
        h = jnp.maximum(h, 0.0).astype(compute_dtype)
    out = jnp.dot(h, w4.astype(compute_dtype),
                  preferred_element_type=jnp.float32) + b4
    d = out.shape[-1] // 2
    return out[:, :d], out[:, d:]


if __name__ == "__main__":
    key = jax.random.PRNGKey(0)
    kp, kx = jax.random.split(key)

    image_latent_dim = 512
    audio_latent_dim = 512
    batch = 100  # deliberately not a multiple of 8 / the batch tile

    params = init_params(kp, image_latent_dim, audio_latent_dim)
    x = jax.random.normal(kx, (batch, image_latent_dim), jnp.float32)

    mu, logvar = inverse_mapping_network(x, params)
    jax.block_until_ready((mu, logvar))

    mu_ref, logvar_ref = reference(x, params)
    assert mu.shape == (batch, audio_latent_dim)
    assert logvar.shape == (batch, audio_latent_dim)
    assert jnp.allclose(mu, mu_ref, atol=3e-3, rtol=3e-3)
    assert jnp.allclose(logvar, logvar_ref, atol=3e-3, rtol=3e-3)

    print("KERNEL_OK")
</pallas_src>

<mosaic_0001>
module attributes {stable_mosaic.version = 11 : i64} {
  func.func @_mlp_kernel(%arg0: i32, %arg1: memref<104x512xbf16, #tpu.memory_space<vmem>>, %arg2: memref<512x512xbf16, #tpu.memory_space<vmem>>, %arg3: memref<1x512xf32, #tpu.memory_space<vmem>>, %arg4: memref<512x512xbf16, #tpu.memory_space<vmem>>, %arg5: memref<1x512xf32, #tpu.memory_space<vmem>>, %arg6: memref<512x512xbf16, #tpu.memory_space<vmem>>, %arg7: memref<1x512xf32, #tpu.memory_space<vmem>>, %arg8: memref<512x512xbf16, #tpu.memory_space<vmem>>, %arg9: memref<1x512xf32, #tpu.memory_space<vmem>>, %arg10: memref<512x512xbf16, #tpu.memory_space<vmem>>, %arg11: memref<1x512xf32, #tpu.memory_space<vmem>>, %arg12: memref<104x512xf32, #tpu.memory_space<vmem>>, %arg13: memref<104x512xf32, #tpu.memory_space<vmem>>) attributes {dimension_semantics = [#tpu.dimension_semantics<parallel>], iteration_bounds = array<i64: 1>, scalar_prefetch = 0 : i64, scratch_operands = 0 : i64, tpu.core_type = #tpu.core_type<tc>, window_params = [{transform_indices = @transform_0, window_bounds = array<i64: 104, 512>}, {pipeline_mode = #tpu.pipeline_mode<synchronous>, transform_indices = @transform_1, window_bounds = array<i64: 512, 512>}, {pipeline_mode = #tpu.pipeline_mode<synchronous>, transform_indices = @transform_2, window_bounds = array<i64: 1, 512>}, {pipeline_mode = #tpu.pipeline_mode<synchronous>, transform_indices = @transform_3, window_bounds = array<i64: 512, 512>}, {pipeline_mode = #tpu.pipeline_mode<synchronous>, transform_indices = @transform_4, window_bounds = array<i64: 1, 512>}, {pipeline_mode = #tpu.pipeline_mode<synchronous>, transform_indices = @transform_5, window_bounds = array<i64: 512, 512>}, {pipeline_mode = #tpu.pipeline_mode<synchronous>, transform_indices = @transform_6, window_bounds = array<i64: 1, 512>}, {pipeline_mode = #tpu.pipeline_mode<synchronous>, transform_indices = @transform_7, window_bounds = array<i64: 512, 512>}, {pipeline_mode = #tpu.pipeline_mode<synchronous>, transform_indices = @transform_8, window_bounds = array<i64: 1, 512>}, {pipeline_mode = #tpu.pipeline_mode<synchronous>, transform_indices = @transform_9, window_bounds = array<i64: 512, 512>}, {pipeline_mode = #tpu.pipeline_mode<synchronous>, transform_indices = @transform_10, window_bounds = array<i64: 1, 512>}, {transform_indices = @transform_11, window_bounds = array<i64: 104, 512>}, {transform_indices = @transform_12, window_bounds = array<i64: 104, 512>}]} {
    %c0 = arith.constant 0 : index
    %c0_0 = arith.constant 0 : index
    %0 = vector.load %arg1[%c0, %c0_0] : memref<104x512xbf16, #tpu.memory_space<vmem>>, vector<104x512xbf16>
    %c0_1 = arith.constant 0 : index
    %c0_2 = arith.constant 0 : index
    %1 = vector.load %arg2[%c0_1, %c0_2] : memref<512x512xbf16, #tpu.memory_space<vmem>>, vector<512x512xbf16>
    %cst = arith.constant dense<0.000000e+00> : vector<104x512xf32>
    %2 = tpu.matmul %0, %1, %cst {dimension_numbers = #tpu.dot_dimension_numbers<[1], [0], [0], [1], [0, 0, 1, 1], [], []>} : vector<104x512xbf16>, vector<512x512xbf16>, vector<104x512xf32> -> vector<104x512xf32>
    %c0_3 = arith.constant 0 : index
    %c0_4 = arith.constant 0 : index
    %3 = vector.load %arg3[%c0_3, %c0_4] : memref<1x512xf32, #tpu.memory_space<vmem>>, vector<1x512xf32>
    %4 = vector.broadcast %3 : vector<1x512xf32> to vector<104x512xf32>
    %5 = arith.addf %2, %4 : vector<104x512xf32>
    %cst_5 = arith.constant 0.000000e+00 : f32
    %6 = vector.broadcast %cst_5 : f32 to vector<104x512xf32>
    %7 = arith.maximumf %5, %6 : vector<104x512xf32>
    %8 = arith.truncf %7 : vector<104x512xf32> to vector<104x512xbf16>
    %c0_6 = arith.constant 0 : index
    %c0_7 = arith.constant 0 : index
    %9 = vector.load %arg4[%c0_6, %c0_7] : memref<512x512xbf16, #tpu.memory_space<vmem>>, vector<512x512xbf16>
    %cst_8 = arith.constant dense<0.000000e+00> : vector<104x512xf32>
    %10 = tpu.matmul %8, %9, %cst_8 {dimension_numbers = #tpu.dot_dimension_numbers<[1], [0], [0], [1], [0, 0, 1, 1], [], []>} : vector<104x512xbf16>, vector<512x512xbf16>, vector<104x512xf32> -> vector<104x512xf32>
    %c0_9 = arith.constant 0 : index
    %c0_10 = arith.constant 0 : index
    %11 = vector.load %arg5[%c0_9, %c0_10] : memref<1x512xf32, #tpu.memory_space<vmem>>, vector<1x512xf32>
    %12 = vector.broadcast %11 : vector<1x512xf32> to vector<104x512xf32>
    %13 = arith.addf %10, %12 : vector<104x512xf32>
    %cst_11 = arith.constant 0.000000e+00 : f32
    %14 = vector.broadcast %cst_11 : f32 to vector<104x512xf32>
    %15 = arith.maximumf %13, %14 : vector<104x512xf32>
    %16 = arith.truncf %15 : vector<104x512xf32> to vector<104x512xbf16>
    %c0_12 = arith.constant 0 : index
    %c0_13 = arith.constant 0 : index
    %17 = vector.load %arg6[%c0_12, %c0_13] : memref<512x512xbf16, #tpu.memory_space<vmem>>, vector<512x512xbf16>
    %cst_14 = arith.constant dense<0.000000e+00> : vector<104x512xf32>
    %18 = tpu.matmul %16, %17, %cst_14 {dimension_numbers = #tpu.dot_dimension_numbers<[1], [0], [0], [1], [0, 0, 1, 1], [], []>} : vector<104x512xbf16>, vector<512x512xbf16>, vector<104x512xf32> -> vector<104x512xf32>
    %c0_15 = arith.constant 0 : index
    %c0_16 = arith.constant 0 : index
    %19 = vector.load %arg7[%c0_15, %c0_16] : memref<1x512xf32, #tpu.memory_space<vmem>>, vector<1x512xf32>
    %20 = vector.broadcast %19 : vector<1x512xf32> to vector<104x512xf32>
    %21 = arith.addf %18, %20 : vector<104x512xf32>
    %cst_17 = arith.constant 0.000000e+00 : f32
    %22 = vector.broadcast %cst_17 : f32 to vector<104x512xf32>
    %23 = arith.maximumf %21, %22 : vector<104x512xf32>
    %24 = arith.truncf %23 : vector<104x512xf32> to vector<104x512xbf16>
    %c0_18 = arith.constant 0 : index
    %c0_19 = arith.constant 0 : index
    %25 = vector.load %arg8[%c0_18, %c0_19] : memref<512x512xbf16, #tpu.memory_space<vmem>>, vector<512x512xbf16>
    %cst_20 = arith.constant dense<0.000000e+00> : vector<104x512xf32>
    %26 = tpu.matmul %24, %25, %cst_20 {dimension_numbers = #tpu.dot_dimension_numbers<[1], [0], [0], [1], [0, 0, 1, 1], [], []>} : vector<104x512xbf16>, vector<512x512xbf16>, vector<104x512xf32> -> vector<104x512xf32>
    %c0_21 = arith.constant 0 : index
    %c0_22 = arith.constant 0 : index
    %27 = vector.load %arg9[%c0_21, %c0_22] : memref<1x512xf32, #tpu.memory_space<vmem>>, vector<1x512xf32>
    %28 = vector.broadcast %27 : vector<1x512xf32> to vector<104x512xf32>
    %29 = arith.addf %26, %28 : vector<104x512xf32>
    %c0_23 = arith.constant 0 : index
    %c0_24 = arith.constant 0 : index
    %30 = vector.load %arg10[%c0_23, %c0_24] : memref<512x512xbf16, #tpu.memory_space<vmem>>, vector<512x512xbf16>
    %cst_25 = arith.constant dense<0.000000e+00> : vector<104x512xf32>
    %31 = tpu.matmul %24, %30, %cst_25 {dimension_numbers = #tpu.dot_dimension_numbers<[1], [0], [0], [1], [0, 0, 1, 1], [], []>} : vector<104x512xbf16>, vector<512x512xbf16>, vector<104x512xf32> -> vector<104x512xf32>
    %c0_26 = arith.constant 0 : index
    %c0_27 = arith.constant 0 : index
    %32 = vector.load %arg11[%c0_26, %c0_27] : memref<1x512xf32, #tpu.memory_space<vmem>>, vector<1x512xf32>
    %33 = vector.broadcast %32 : vector<1x512xf32> to vector<104x512xf32>
    %34 = arith.addf %31, %33 : vector<104x512xf32>
    %c0_28 = arith.constant 0 : index
    %c0_29 = arith.constant 0 : index
    %35 = vector.load %arg12[%c0_28, %c0_29] : memref<104x512xf32, #tpu.memory_space<vmem>>, vector<104x512xf32>
    tpu.vector_store %arg12[%c0_28, %c0_29], %29 {strides = array<i32>} : memref<104x512xf32, #tpu.memory_space<vmem>>, vector<104x512xf32>,
    %c0_30 = arith.constant 0 : index
    %c0_31 = arith.constant 0 : index
    %36 = vector.load %arg13[%c0_30, %c0_31] : memref<104x512xf32, #tpu.memory_space<vmem>>, vector<104x512xf32>
    tpu.vector_store %arg13[%c0_30, %c0_31], %34 {strides = array<i32>} : memref<104x512xf32, #tpu.memory_space<vmem>>, vector<104x512xf32>,
    return
  }
  func.func @transform_0(%arg0: i32) -> (i32, i32) {
    %c0_i32 = arith.constant 0 : i32
    %c0_i32_0 = arith.constant 0 : i32
    return %arg0, %c0_i32 : i32, i32
  }
  func.func @transform_1(%arg0: i32) -> (i32, i32) {
    %c0_i32 = arith.constant 0 : i32
    %c0_i32_0 = arith.constant 0 : i32
    %c0_i32_1 = arith.constant 0 : i32
    return %c0_i32, %c0_i32_0 : i32, i32
  }
  func.func @transform_2(%arg0: i32) -> (i32, i32) {
    %c0_i32 = arith.constant 0 : i32
    %c0_i32_0 = arith.constant 0 : i32
    %c0_i32_1 = arith.constant 0 : i32
    return %c0_i32, %c0_i32_0 : i32, i32
  }
  func.func @transform_3(%arg0: i32) -> (i32, i32) {
    %c0_i32 = arith.constant 0 : i32
    %c0_i32_0 = arith.constant 0 : i32
    %c0_i32_1 = arith.constant 0 : i32
    return %c0_i32, %c0_i32_0 : i32, i32
  }
  func.func @transform_4(%arg0: i32) -> (i32, i32) {
    %c0_i32 = arith.constant 0 : i32
    %c0_i32_0 = arith.constant 0 : i32
    %c0_i32_1 = arith.constant 0 : i32
    return %c0_i32, %c0_i32_0 : i32, i32
  }
  func.func @transform_5(%arg0: i32) -> (i32, i32) {
    %c0_i32 = arith.constant 0 : i32
    %c0_i32_0 = arith.constant 0 : i32
    %c0_i32_1 = arith.constant 0 : i32
    return %c0_i32, %c0_i32_0 : i32, i32
  }
  func.func @transform_6(%arg0: i32) -> (i32, i32) {
    %c0_i32 = arith.constant 0 : i32
    %c0_i32_0 = arith.constant 0 : i32
    %c0_i32_1 = arith.constant 0 : i32
    return %c0_i32, %c0_i32_0 : i32, i32
  }
  func.func @transform_7(%arg0: i32) -> (i32, i32) {
    %c0_i32 = arith.constant 0 : i32
    %c0_i32_0 = arith.constant 0 : i32
    %c0_i32_1 = arith.constant 0 : i32
    return %c0_i32, %c0_i32_0 : i32, i32
  }
  func.func @transform_8(%arg0: i32) -> (i32, i32) {
    %c0_i32 = arith.constant 0 : i32
    %c0_i32_0 = arith.constant 0 : i32
    %c0_i32_1 = arith.constant 0 : i32
    return %c0_i32, %c0_i32_0 : i32, i32
  }
  func.func @transform_9(%arg0: i32) -> (i32, i32) {
    %c0_i32 = arith.constant 0 : i32
    %c0_i32_0 = arith.constant 0 : i32
    %c0_i32_1 = arith.constant 0 : i32
    return %c0_i32, %c0_i32_0 : i32, i32
  }
  func.func @transform_10(%arg0: i32) -> (i32, i32) {
    %c0_i32 = arith.constant 0 : i32
    %c0_i32_0 = arith.constant 0 : i32
    %c0_i32_1 = arith.constant 0 : i32
    return %c0_i32, %c0_i32_0 : i32, i32
  }
  func.func @transform_11(%arg0: i32) -> (i32, i32) {
    %c0_i32 = arith.constant 0 : i32
    %c0_i32_0 = arith.constant 0 : i32
    return %arg0, %c0_i32 : i32, i32
  }
  func.func @transform_12(%arg0: i32) -> (i32, i32) {
    %c0_i32 = arith.constant 0 : i32
    %c0_i32_0 = arith.constant 0 : i32
    return %arg0, %c0_i32 : i32, i32
  }
}

</mosaic_0001>

<llo_original>
// kernel: inverse_mapping_network.1
$region0: #{inverse_mapping_network.1}
  #allocation0 [shape = 'u32[]', space=smem, size = 0x4, offset = 0x4, fixed_abs, tag = 'smem constant byte address 0x4 - core index']
  #allocation1 [shape = 'u32[144,128]{1,0:T(1,128)}', space=vmem, size = 0x12000, scoped, tag = 'internal scratch']
  %s0 = inlined_call_operand.vmem [shape: bf16[104,512], index: 0, kind: input, shape index: {}]
  %s1 = inlined_call_operand.vmem [shape: bf16[512,512], index: 1, kind: input, shape index: {}]
  %s2 = inlined_call_operand.vmem [shape: f32[1,512], index: 2, kind: input, shape index: {}]
  %s3 = inlined_call_operand.vmem [shape: bf16[512,512], index: 3, kind: input, shape index: {}]
  %s4 = inlined_call_operand.vmem [shape: f32[1,512], index: 4, kind: input, shape index: {}]
  %s5 = inlined_call_operand.vmem [shape: bf16[512,512], index: 5, kind: input, shape index: {}]
  %s6 = inlined_call_operand.vmem [shape: f32[1,512], index: 6, kind: input, shape index: {}]
  %s7 = inlined_call_operand.vmem [shape: bf16[512,512], index: 7, kind: input, shape index: {}]
  %s8 = inlined_call_operand.vmem [shape: f32[1,512], index: 8, kind: input, shape index: {}]
  %s9 = inlined_call_operand.vmem [shape: bf16[512,512], index: 9, kind: input, shape index: {}]
  %s10 = inlined_call_operand.vmem [shape: f32[1,512], index: 10, kind: input, shape index: {}]
  %s11 = inlined_call_operand.hbm [shape: f32[104,512], index: 11, kind: output, shape index: {0}]
  %s12 = inlined_call_operand.hbm [shape: f32[104,512], index: 12, kind: output, shape index: {1}]
  %13 = xla_tuple %s11, %s12
  %s14 = sld [smem:[#allocation0]]
  $region62: #{inverse_mapping_network.1} parent=0
    _
  %s16 = ssub.s32 1, %s14
  %s17 = scalar_select 0, %s16, %s14
  $region1: #{inverse_mapping_network.1} parent=0
    #allocation2 [shape = 'u8[212992]{0}', space=vmem, size = 0x34000, scoped, tag = 'output window, operand 0, single buffered']
    #allocation3 [shape = 's32[1]{0}', space=sflag, size = 0x4, scoped, tag = 'scoped memory for inverse_mapping_network.1']
    #allocation4 [shape = 'u8[212992]{0}', space=vmem, size = 0x34000, scoped, tag = 'output window, operand 1, single buffered']
    #allocation5 [shape = 's32[1]{0}', space=sflag, size = 0x4, scoped, tag = 'scoped memory for inverse_mapping_network.1']
    %18 = vsyncpa [#allocation3], 0
    %19 = vsyncpa [#allocation5], 0
    // Predicated region
    $region2: #{inverse_mapping_network.1} parent=1 // pred_check
      _
    $region3: #{inverse_mapping_network.1} parent=1 // pred_check_branch
      %21 = sbr.rel (0) target = $region5
    $region4: #{inverse_mapping_network.1} parent=1 // pred_region
      _
    $region5: #{inverse_mapping_network.1} parent=1 // pred_fallthru
      _
    // Predicated region
    $region6: #{inverse_mapping_network.1} parent=1 // pred_check
      _
    $region7: #{inverse_mapping_network.1} parent=1 // pred_check_branch
      %23 = sbr.rel (0) target = $region9
    $region8: #{inverse_mapping_network.1} parent=1 // pred_region
      _
    $region9: #{inverse_mapping_network.1} parent=1 // pred_fallthru
      _
    // Predicated region
    $region10: #{inverse_mapping_network.1} parent=1 // pred_check
      _
    $region11: #{inverse_mapping_network.1} parent=1 // pred_check_branch
      %25 = sbr.rel (0) target = $region13
    $region12: #{inverse_mapping_network.1} parent=1 // pred_region
      _
    $region13: #{inverse_mapping_network.1} parent=1 // pred_fallthru
      _
    // Predicated region
    $region14: #{inverse_mapping_network.1} parent=1 // pred_check
      _
    $region15: #{inverse_mapping_network.1} parent=1 // pred_check_branch
      %27 = sbr.rel (0) target = $region17
    $region16: #{inverse_mapping_network.1} parent=1 // pred_region
      _
    $region17: #{inverse_mapping_network.1} parent=1 // pred_fallthru
      _
    // Predicated region
    $region18: #{inverse_mapping_network.1} parent=1 // pred_check
      _
    $region19: #{inverse_mapping_network.1} parent=1 // pred_check_branch
      %29 = sbr.rel (0) target = $region21
    $region20: #{inverse_mapping_network.1} parent=1 // pred_region
      _
    $region21: #{inverse_mapping_network.1} parent=1 // pred_fallthru
      _
    // Predicated region
    $region22: #{inverse_mapping_network.1} parent=1 // pred_check
      _
    $region23: #{inverse_mapping_network.1} parent=1 // pred_check_branch
      %31 = sbr.rel (0) target = $region25
    $region24: #{inverse_mapping_network.1} parent=1 // pred_region
      _
    $region25: #{inverse_mapping_network.1} parent=1 // pred_fallthru
      _
    // Predicated region
    $region26: #{inverse_mapping_network.1} parent=1 // pred_check
      _
    $region27: #{inverse_mapping_network.1} parent=1 // pred_check_branch
      %33 = sbr.rel (0) target = $region29
    $region28: #{inverse_mapping_network.1} parent=1 // pred_region
      _
    $region29: #{inverse_mapping_network.1} parent=1 // pred_fallthru
      _
    // Predicated region
    $region30: #{inverse_mapping_network.1} parent=1 // pred_check
      _
    $region31: #{inverse_mapping_network.1} parent=1 // pred_check_branch
      %35 = sbr.rel (0) target = $region33
    $region32: #{inverse_mapping_network.1} parent=1 // pred_region
      _
    $region33: #{inverse_mapping_network.1} parent=1 // pred_fallthru
      _
    // Predicated region
    $region34: #{inverse_mapping_network.1} parent=1 // pred_check
      _
    $region35: #{inverse_mapping_network.1} parent=1 // pred_check_branch
      %37 = sbr.rel (0) target = $region37
    $region36: #{inverse_mapping_network.1} parent=1 // pred_region
      _
    $region37: #{inverse_mapping_network.1} parent=1 // pred_fallthru
      _
    // Predicated region
    $region38: #{inverse_mapping_network.1} parent=1 // pred_check
      _
    $region39: #{inverse_mapping_network.1} parent=1 // pred_check_branch
      %39 = sbr.rel (0) target = $region41
    $region40: #{inverse_mapping_network.1} parent=1 // pred_region
      _
    $region41: #{inverse_mapping_network.1} parent=1 // pred_fallthru
      _
    // Predicated region
    $region42: #{inverse_mapping_network.1} parent=1 // pred_check
      _
    $region43: #{inverse_mapping_network.1} parent=1 // pred_check_branch
      %41 = sbr.rel (0) target = $region45
    $region44: #{inverse_mapping_network.1} parent=1 // pred_region
      _
    $region45: #{inverse_mapping_network.1} parent=1 // pred_fallthru
      _
    %v42 = vld [vmem:[%s0] sm:$0xff]
    %v43 = vld [vmem:[%s0 + $0x8] sm:$0xff]
    %v44 = vld [vmem:[%s0 + $0x10] sm:$0xff]
    %v45 = vld [vmem:[%s0 + $0x18] sm:$0xff]
    %v46 = vld [vmem:[%s0 + $0x20] sm:$0xff]
    %v47 = vld [vmem:[%s0 + $0x28] sm:$0xff]
    %v48 = vld [vmem:[%s0 + $0x30] sm:$0xff]
    %v49 = vld [vmem:[%s0 + $0x38] sm:$0xff]
    %v50 = vld [vmem:[%s0 + $0x40] sm:$0xff]
    %v51 = vld [vmem:[%s0 + $0x48] sm:$0xff]
    %v52 = vld [vmem:[%s0 + $0x50] sm:$0xff]
    %v53 = vld [vmem:[%s0 + $0x58] sm:$0xff]
    %v54 = vld [vmem:[%s0 + $0x60] sm:$0xff]
    %v55 = vld [vmem:[%s0 + $0x68] sm:$0xff]
    %v56 = vld [vmem:[%s0 + $0x70] sm:$0xff]
    %v57 = vld [vmem:[%s0 + $0x78] sm:$0xff]
    %v58 = vld [vmem:[%s0 + $0x80] sm:$0xff]
    %v59 = vld [vmem:[%s0 + $0x88] sm:$0xff]
    %v60 = vld [vmem:[%s0 + $0x90] sm:$0xff]
    %v61 = vld [vmem:[%s0 + $0x98] sm:$0xff]
    %v62 = vld [vmem:[%s0 + $0xa0] sm:$0xff]
    %v63 = vld [vmem:[%s0 + $0xa8] sm:$0xff]
    %v64 = vld [vmem:[%s0 + $0xb0] sm:$0xff]
    %v65 = vld [vmem:[%s0 + $0xb8] sm:$0xff]
    %v66 = vld [vmem:[%s0 + $0xc0] sm:$0xff]
    %v67 = vld [vmem:[%s0 + $0xc8] sm:$0xff]
    %v68 = vld [vmem:[%s1] sm:$0xff]
    %v69 = vld [vmem:[%s1 + $0x8] sm:$0xff]
    %v70 = vld [vmem:[%s1 + $0x10] sm:$0xff]
    %v71 = vld [vmem:[%s1 + $0x18] sm:$0xff]
    %v72 = vld [vmem:[%s1 + $0x20] sm:$0xff]
    %v73 = vld [vmem:[%s1 + $0x28] sm:$0xff]
    %v74 = vld [vmem:[%s1 + $0x30] sm:$0xff]
    %v75 = vld [vmem:[%s1 + $0x38] sm:$0xff]
    %v76 = vld [vmem:[%s1 + $0x40] sm:$0xff]
    %v77 = vld [vmem:[%s1 + $0x48] sm:$0xff]
    %v78 = vld [vmem:[%s1 + $0x50] sm:$0xff]
    %v79 = vld [vmem:[%s1 + $0x58] sm:$0xff]
    %v80 = vld [vmem:[%s1 + $0x60] sm:$0xff]
    %v81 = vld [vmem:[%s1 + $0x68] sm:$0xff]
    %v82 = vld [vmem:[%s1 + $0x70] sm:$0xff]
    %v83 = vld [vmem:[%s1 + $0x78] sm:$0xff]
    %v84 = vld [vmem:[%s1 + $0x80] sm:$0xff]
    %v85 = vld [vmem:[%s1 + $0x88] sm:$0xff]
    %v86 = vld [vmem:[%s1 + $0x90] sm:$0xff]
    %v87 = vld [vmem:[%s1 + $0x98] sm:$0xff]
    %v88 = vld [vmem:[%s1 + $0xa0] sm:$0xff]
    %v89 = vld [vmem:[%s1 + $0xa8] sm:$0xff]
    %v90 = vld [vmem:[%s1 + $0xb0] sm:$0xff]
    %v91 = vld [vmem:[%s1 + $0xb8] sm:$0xff]
    %v92 = vld [vmem:[%s1 + $0xc0] sm:$0xff]
    %v93 = vld [vmem:[%s1 + $0xc8] sm:$0xff]
    %v94 = vld [vmem:[%s1 + $0xd0] sm:$0xff]
    %v95 = vld [vmem:[%s1 + $0xd8] sm:$0xff]
    %v96 = vld [vmem:[%s1 + $0xe0] sm:$0xff]
    %v97 = vld [vmem:[%s1 + $0xe8] sm:$0xff]
    %v98 = vld [vmem:[%s1 + $0xf0] sm:$0xff]
    %v99 = vld [vmem:[%s1 + $0xf8] sm:$0xff]
    %v100 = vld [vmem:[%s1 + $0x100] sm:$0xff]
    %v101 = vld [vmem:[%s1 + $0x108] sm:$0xff]
    %v102 = vld [vmem:[%s1 + $0x110] sm:$0xff]
    %v103 = vld [vmem:[%s1 + $0x118] sm:$0xff]
    %v104 = vld [vmem:[%s1 + $0x120] sm:$0xff]
    %v105 = vld [vmem:[%s1 + $0x128] sm:$0xff]
    %v106 = vld [vmem:[%s1 + $0x130] sm:$0xff]
    %v107 = vld [vmem:[%s1 + $0x138] sm:$0xff]
    %v108 = vld [vmem:[%s1 + $0x140] sm:$0xff]
    %v109 = vld [vmem:[%s1 + $0x148] sm:$0xff]
    %v110 = vld [vmem:[%s1 + $0x150] sm:$0xff]
    %v111 = vld [vmem:[%s1 + $0x158] sm:$0xff]
    %v112 = vld [vmem:[%s1 + $0x160] sm:$0xff]
    %v113 = vld [vmem:[%s1 + $0x168] sm:$0xff]
    %v114 = vld [vmem:[%s1 + $0x170] sm:$0xff]
    %v115 = vld [vmem:[%s1 + $0x178] sm:$0xff]
    %v116 = vld [vmem:[%s1 + $0x180] sm:$0xff]
    %v117 = vld [vmem:[%s1 + $0x188] sm:$0xff]
    %v118 = vld [vmem:[%s1 + $0x190] sm:$0xff]
    %v119 = vld [vmem:[%s1 + $0x198] sm:$0xff]
    %v120 = vld [vmem:[%s1 + $0x1a0] sm:$0xff]
    %v121 = vld [vmem:[%s1 + $0x1a8] sm:$0xff]
    %v122 = vld [vmem:[%s1 + $0x1b0] sm:$0xff]
    %v123 = vld [vmem:[%s1 + $0x1b8] sm:$0xff]
    %v124 = vld [vmem:[%s1 + $0x1c0] sm:$0xff]
    %v125 = vld [vmem:[%s1 + $0x1c8] sm:$0xff]
    %v126 = vld [vmem:[%s1 + $0x1d0] sm:$0xff]
    %v127 = vld [vmem:[%s1 + $0x1d8] sm:$0xff]
    %v128 = vld [vmem:[%s1 + $0x1e0] sm:$0xff]
    %v129 = vld [vmem:[%s1 + $0x1e8] sm:$0xff]
    %v130 = vld [vmem:[%s1 + $0x1f0] sm:$0xff]
    %v131 = vld [vmem:[%s1 + $0x1f8] sm:$0xff]
    %v132 = vld [vmem:[%s1 + $0x200] sm:$0xff]
    %v133 = vld [vmem:[%s1 + $0x208] sm:$0xff]
    %v134 = vld [vmem:[%s1 + $0x210] sm:$0xff]
    %v135 = vld [vmem:[%s1 + $0x218] sm:$0xff]
    %v136 = vld [vmem:[%s1 + $0x220] sm:$0xff]
    %v137 = vld [vmem:[%s1 + $0x228] sm:$0xff]
    %v138 = vld [vmem:[%s1 + $0x230] sm:$0xff]
    %v139 = vld [vmem:[%s1 + $0x238] sm:$0xff]
    %v140 = vld [vmem:[%s1 + $0x240] sm:$0xff]
    %v141 = vld [vmem:[%s1 + $0x248] sm:$0xff]
    %v142 = vld [vmem:[%s1 + $0x250] sm:$0xff]
    %v143 = vld [vmem:[%s1 + $0x258] sm:$0xff]
    %v144 = vld [vmem:[%s1 + $0x260] sm:$0xff]
    %v145 = vld [vmem:[%s1 + $0x268] sm:$0xff]
    %v146 = vld [vmem:[%s1 + $0x270] sm:$0xff]
    %v147 = vld [vmem:[%s1 + $0x278] sm:$0xff]
    %v148 = vld [vmem:[%s1 + $0x280] sm:$0xff]
    %v149 = vld [vmem:[%s1 + $0x288] sm:$0xff]
    %v150 = vld [vmem:[%s1 + $0x290] sm:$0xff]
    %v151 = vld [vmem:[%s1 + $0x298] sm:$0xff]
    %v152 = vld [vmem:[%s1 + $0x2a0] sm:$0xff]
    %v153 = vld [vmem:[%s1 + $0x2a8] sm:$0xff]
    %v154 = vld [vmem:[%s1 + $0x2b0] sm:$0xff]
    %v155 = vld [vmem:[%s1 + $0x2b8] sm:$0xff]
    %v156 = vld [vmem:[%s1 + $0x2c0] sm:$0xff]
    %v157 = vld [vmem:[%s1 + $0x2c8] sm:$0xff]
    %v158 = vld [vmem:[%s1 + $0x2d0] sm:$0xff]
    %v159 = vld [vmem:[%s1 + $0x2d8] sm:$0xff]
    %v160 = vld [vmem:[%s1 + $0x2e0] sm:$0xff]
    %v161 = vld [vmem:[%s1 + $0x2e8] sm:$0xff]
    %v162 = vld [vmem:[%s1 + $0x2f0] sm:$0xff]
    %v163 = vld [vmem:[%s1 + $0x2f8] sm:$0xff]
    %v164 = vld [vmem:[%s1 + $0x300] sm:$0xff]
    %v165 = vld [vmem:[%s1 + $0x308] sm:$0xff]
    %v166 = vld [vmem:[%s1 + $0x310] sm:$0xff]
    %v167 = vld [vmem:[%s1 + $0x318] sm:$0xff]
    %v168 = vld [vmem:[%s1 + $0x320] sm:$0xff]
    %v169 = vld [vmem:[%s1 + $0x328] sm:$0xff]
    %v170 = vld [vmem:[%s1 + $0x330] sm:$0xff]
    %v171 = vld [vmem:[%s1 + $0x338] sm:$0xff]
    %v172 = vld [vmem:[%s1 + $0x340] sm:$0xff]
    %v173 = vld [vmem:[%s1 + $0x348] sm:$0xff]
    %v174 = vld [vmem:[%s1 + $0x350] sm:$0xff]
    %v175 = vld [vmem:[%s1 + $0x358] sm:$0xff]
    %v176 = vld [vmem:[%s1 + $0x360] sm:$0xff]
    %v177 = vld [vmem:[%s1 + $0x368] sm:$0xff]
    %v178 = vld [vmem:[%s1 + $0x370] sm:$0xff]
    %v179 = vld [vmem:[%s1 + $0x378] sm:$0xff]
    %v180 = vld [vmem:[%s1 + $0x380] sm:$0xff]
    %v181 = vld [vmem:[%s1 + $0x388] sm:$0xff]
    %v182 = vld [vmem:[%s1 + $0x390] sm:$0xff]
    %v183 = vld [vmem:[%s1 + $0x398] sm:$0xff]
    %v184 = vld [vmem:[%s1 + $0x3a0] sm:$0xff]
    %v185 = vld [vmem:[%s1 + $0x3a8] sm:$0xff]
    %v186 = vld [vmem:[%s1 + $0x3b0] sm:$0xff]
    %v187 = vld [vmem:[%s1 + $0x3b8] sm:$0xff]
    %v188 = vld [vmem:[%s1 + $0x3c0] sm:$0xff]
    %v189 = vld [vmem:[%s1 + $0x3c8] sm:$0xff]
    %v190 = vld [vmem:[%s1 + $0x3d0] sm:$0xff]
    %v191 = vld [vmem:[%s1 + $0x3d8] sm:$0xff]
    %v192 = vld [vmem:[%s1 + $0x3e0] sm:$0xff]
    %v193 = vld [vmem:[%s1 + $0x3e8] sm:$0xff]
    %v194 = vld [vmem:[%s1 + $0x3f0] sm:$0xff]
    %v195 = vld [vmem:[%s1 + $0x3f8] sm:$0xff]
    %v196 = vld [vmem:[%s2] sm:$0xf]
    %v198 = vlaneseq
    %v199 = vshrl.u32 %v198, 7
    %v200 = vsub.s32 0, %v199
    %v201 = vrot.slane %v196, %v200
    %v202 = vlaneseq
    %v203 = vshrl.u32 %v202, 7
    %v204 = vsub.s32 1, %v203
    %v205 = vrot.slane %v196, %v204
    %v206 = vlaneseq
    %v207 = vshrl.u32 %v206, 7
    %v208 = vsub.s32 2, %v207
    %v209 = vrot.slane %v196, %v208
    %v210 = vlaneseq
    %v211 = vshrl.u32 %v210, 7
    %v212 = vsub.s32 3, %v211
    %v213 = vrot.slane %v196, %v212
    %v244 = vunpack.c.l.b16 %v42
    %v245 = vunpack.c.h.b16 %v42
    %v246 = vunpack.c.l.b16 %v43
    %v247 = vunpack.c.h.b16 %v43
    %v248 = vunpack.c.l.b16 %v44
    %v249 = vunpack.c.h.b16 %v44
    %v250 = vunpack.c.l.b16 %v45
    %v251 = vunpack.c.h.b16 %v45
    %v252 = vunpack.c.l.b16 %v46
    %v253 = vunpack.c.h.b16 %v46
    %v254 = vunpack.c.l.b16 %v47
    %v255 = vunpack.c.h.b16 %v47
    %v256 = vunpack.c.l.b16 %v48
    %v257 = vunpack.c.h.b16 %v48
    %v258 = vunpack.c.l.b16 %v49
    %v259 = vunpack.c.h.b16 %v49
    %v260 = vunpack.c.l.b16 %v50
    %v261 = vunpack.c.h.b16 %v50
    %v262 = vunpack.c.l.b16 %v51
    %v263 = vunpack.c.h.b16 %v51
    %v264 = vunpack.c.l.b16 %v52
    %v265 = vunpack.c.h.b16 %v52
    %v266 = vunpack.c.l.b16 %v53
    %v267 = vunpack.c.h.b16 %v53
    %v268 = vunpack.c.l.b16 %v54
    %v269 = vunpack.c.h.b16 %v54
    %v270 = vunpack.c.l.b16 %v55
    %v271 = vunpack.c.h.b16 %v55
    %v272 = vunpack.c.l.b16 %v56
    %v273 = vunpack.c.h.b16 %v56
    %v274 = vunpack.c.l.b16 %v57
    %v275 = vunpack.c.h.b16 %v57
    %v276 = vunpack.c.l.b16 %v58
    %v277 = vunpack.c.h.b16 %v58
    %v278 = vunpack.c.l.b16 %v59
    %v279 = vunpack.c.h.b16 %v59
    %v280 = vunpack.c.l.b16 %v60
    %v281 = vunpack.c.h.b16 %v60
    %v282 = vunpack.c.l.b16 %v61
    %v283 = vunpack.c.h.b16 %v61
    %v284 = vunpack.c.l.b16 %v62
    %v285 = vunpack.c.h.b16 %v62
    %v286 = vunpack.c.l.b16 %v63
    %v287 = vunpack.c.h.b16 %v63
    %v288 = vunpack.c.l.b16 %v64
    %v289 = vunpack.c.h.b16 %v64
    %v290 = vunpack.c.l.b16 %v65
    %v291 = vunpack.c.h.b16 %v65
    %v292 = vunpack.c.l.b16 %v66
    %v293 = vunpack.c.h.b16 %v66
    %v294 = vunpack.c.l.b16 %v67
    %v295 = vunpack.c.h.b16 %v67
    %v296 = vpack.c.b16 %v248, %v244
    %v297 = vpack.c.b16 %v249, %v245
    %v298 = vpack.c.b16 %v250, %v246
    %v299 = vpack.c.b16 %v251, %v247
    %v300 = vpack.c.b16 %v256, %v252
    %v301 = vpack.c.b16 %v257, %v253
    %v302 = vpack.c.b16 %v258, %v254
    %v303 = vpack.c.b16 %v259, %v255
    %v304 = vpack.c.b16 %v264, %v260
    %v305 = vpack.c.b16 %v265, %v261
    %v306 = vpack.c.b16 %v266, %v262
    %v307 = vpack.c.b16 %v267, %v263
    %v308 = vpack.c.b16 %v272, %v268
    %v309 = vpack.c.b16 %v273, %v269
    %v310 = vpack.c.b16 %v274, %v270
    %v311 = vpack.c.b16 %v275, %v271
    %v312 = vpack.c.b16 %v280, %v276
    %v313 = vpack.c.b16 %v281, %v277
    %v314 = vpack.c.b16 %v282, %v278
    %v315 = vpack.c.b16 %v283, %v279
    %v316 = vpack.c.b16 %v288, %v284
    %v317 = vpack.c.b16 %v289, %v285
    %v318 = vpack.c.b16 %v290, %v286
    %v319 = vpack.c.b16 %v291, %v287
    %v320 = vpack.c.b16 %v292, %v292
    %v321 = vpack.c.b16 %v293, %v293
    %v322 = vpack.c.b16 %v294, %v294
    %v323 = vpack.c.b16 %v295, %v295
    %v480 = vunpack.c.l.b16 %v68
    %v481 = vunpack.c.h.b16 %v68
    %v482 = vunpack.c.l.b16 %v69
    %v483 = vunpack.c.h.b16 %v69
    %v484 = vunpack.c.l.b16 %v70
    %v485 = vunpack.c.h.b16 %v70
    %v486 = vunpack.c.l.b16 %v71
    %v487 = vunpack.c.h.b16 %v71
    %v488 = vunpack.c.l.b16 %v72
    %v489 = vunpack.c.h.b16 %v72
    %v490 = vunpack.c.l.b16 %v73
    %v491 = vunpack.c.h.b16 %v73
    %v492 = vunpack.c.l.b16 %v74
    %v493 = vunpack.c.h.b16 %v74
    %v494 = vunpack.c.l.b16 %v75
    %v495 = vunpack.c.h.b16 %v75
    %v496 = vunpack.c.l.b16 %v76
    %v497 = vunpack.c.h.b16 %v76
    %v498 = vunpack.c.l.b16 %v77
    %v499 = vunpack.c.h.b16 %v77
    %v500 = vunpack.c.l.b16 %v78
    %v501 = vunpack.c.h.b16 %v78
    %v502 = vunpack.c.l.b16 %v79
    %v503 = vunpack.c.h.b16 %v79
    %v504 = vunpack.c.l.b16 %v80
    %v505 = vunpack.c.h.b16 %v80
    %v506 = vunpack.c.l.b16 %v81
    %v507 = vunpack.c.h.b16 %v81
    %v508 = vunpack.c.l.b16 %v82
    %v509 = vunpack.c.h.b16 %v82
    %v510 = vunpack.c.l.b16 %v83
    %v511 = vunpack.c.h.b16 %v83
    %v512 = vunpack.c.l.b16 %v84
    %v513 = vunpack.c.h.b16 %v84
    %v514 = vunpack.c.l.b16 %v85
    %v515 = vunpack.c.h.b16 %v85
    %v516 = vunpack.c.l.b16 %v86
    %v517 = vunpack.c.h.b16 %v86
    %v518 = vunpack.c.l.b16 %v87
    %v519 = vunpack.c.h.b16 %v87
    %v520 = vunpack.c.l.b16 %v88
    %v521 = vunpack.c.h.b16 %v88
    %v522 = vunpack.c.l.b16 %v89
    %v523 = vunpack.c.h.b16 %v89
    %v524 = vunpack.c.l.b16 %v90
    %v525 = vunpack.c.h.b16 %v90
    %v526 = vunpack.c.l.b16 %v91
    %v527 = vunpack.c.h.b16 %v91
    %v528 = vunpack.c.l.b16 %v92
    %v529 = vunpack.c.h.b16 %v92
    %v530 = vunpack.c.l.b16 %v93
    %v531 = vunpack.c.h.b16 %v93
    %v532 = vunpack.c.l.b16 %v94
    %v533 = vunpack.c.h.b16 %v94
    %v534 = vunpack.c.l.b16 %v95
    %v535 = vunpack.c.h.b16 %v95
    %v536 = vunpack.c.l.b16 %v96
    %v537 = vunpack.c.h.b16 %v96
    %v538 = vunpack.c.l.b16 %v97
    %v539 = vunpack.c.h.b16 %v97
    %v540 = vunpack.c.l.b16 %v98
    %v541 = vunpack.c.h.b16 %v98
    %v542 = vunpack.c.l.b16 %v99
    %v543 = vunpack.c.h.b16 %v99
    %v544 = vunpack.c.l.b16 %v100
    %v545 = vunpack.c.h.b16 %v100
    %v546 = vunpack.c.l.b16 %v101
    %v547 = vunpack.c.h.b16 %v101
    %v548 = vunpack.c.l.b16 %v102
    %v549 = vunpack.c.h.b16 %v102
    %v550 = vunpack.c.l.b16 %v103
    %v551 = vunpack.c.h.b16 %v103
    %v552 = vunpack.c.l.b16 %v104
    %v553 = vunpack.c.h.b16 %v104
    %v554 = vunpack.c.l.b16 %v105
    %v555 = vunpack.c.h.b16 %v105
    %v556 = vunpack.c.l.b16 %v106
    %v557 = vunpack.c.h.b16 %v106
    %v558 = vunpack.c.l.b16 %v107
    %v559 = vunpack.c.h.b16 %v107
    %v560 = vunpack.c.l.b16 %v108
    %v561 = vunpack.c.h.b16 %v108
    %v562 = vunpack.c.l.b16 %v109
    %v563 = vunpack.c.h.b16 %v109
    %v564 = vunpack.c.l.b16 %v110
    %v565 = vunpack.c.h.b16 %v110
    %v566 = vunpack.c.l.b16 %v111
    %v567 = vunpack.c.h.b16 %v111
    %v568 = vunpack.c.l.b16 %v112
    %v569 = vunpack.c.h.b16 %v112
    %v570 = vunpack.c.l.b16 %v113
    %v571 = vunpack.c.h.b16 %v113
    %v572 = vunpack.c.l.b16 %v114
    %v573 = vunpack.c.h.b16 %v114
    %v574 = vunpack.c.l.b16 %v115
    %v575 = vunpack.c.h.b16 %v115
    %v576 = vunpack.c.l.b16 %v116
    %v577 = vunpack.c.h.b16 %v116
    %v578 = vunpack.c.l.b16 %v117
    %v579 = vunpack.c.h.b16 %v117
    %v580 = vunpack.c.l.b16 %v118
    %v581 = vunpack.c.h.b16 %v118
    %v582 = vunpack.c.l.b16 %v119
    %v583 = vunpack.c.h.b16 %v119
    %v584 = vunpack.c.l.b16 %v120
    %v585 = vunpack.c.h.b16 %v120
    %v586 = vunpack.c.l.b16 %v121
    %v587 = vunpack.c.h.b16 %v121
    %v588 = vunpack.c.l.b16 %v122
    %v589 = vunpack.c.h.b16 %v122
    %v590 = vunpack.c.l.b16 %v123
    %v591 = vunpack.c.h.b16 %v123
    %v592 = vunpack.c.l.b16 %v124
    %v593 = vunpack.c.h.b16 %v124
    %v594 = vunpack.c.l.b16 %v125
    %v595 = vunpack.c.h.b16 %v125
    %v596 = vunpack.c.l.b16 %v126
    %v597 = vunpack.c.h.b16 %v126
    %v598 = vunpack.c.l.b16 %v127
    %v599 = vunpack.c.h.b16 %v127
    %v600 = vunpack.c.l.b16 %v128
    %v601 = vunpack.c.h.b16 %v128
    %v602 = vunpack.c.l.b16 %v129
    %v603 = vunpack.c.h.b16 %v129
    %v604 = vunpack.c.l.b16 %v130
    %v605 = vunpack.c.h.b16 %v130
    %v606 = vunpack.c.l.b16 %v131
    %v607 = vunpack.c.h.b16 %v131
    %v608 = vunpack.c.l.b16 %v132
    %v609 = vunpack.c.h.b16 %v132
    %v610 = vunpack.c.l.b16 %v133
    %v611 = vunpack.c.h.b16 %v133
    %v612 = vunpack.c.l.b16 %v134
    %v613 = vunpack.c.h.b16 %v134
    %v614 = vunpack.c.l.b16 %v135
    %v615 = vunpack.c.h.b16 %v135
    %v616 = vunpack.c.l.b16 %v136
    %v617 = vunpack.c.h.b16 %v136
    %v618 = vunpack.c.l.b16 %v137
    %v619 = vunpack.c.h.b16 %v137
    %v620 = vunpack.c.l.b16 %v138
    %v621 = vunpack.c.h.b16 %v138
    %v622 = vunpack.c.l.b16 %v139
    %v623 = vunpack.c.h.b16 %v139
    %v624 = vunpack.c.l.b16 %v140
    %v625 = vunpack.c.h.b16 %v140
    %v626 = vunpack.c.l.b16 %v141
    %v627 = vunpack.c.h.b16 %v141
    %v628 = vunpack.c.l.b16 %v142
    %v629 = vunpack.c.h.b16 %v142
    %v630 = vunpack.c.l.b16 %v143
    %v631 = vunpack.c.h.b16 %v143
    %v632 = vunpack.c.l.b16 %v144
    %v633 = vunpack.c.h.b16 %v144
    %v634 = vunpack.c.l.b16 %v145
    %v635 = vunpack.c.h.b16 %v145
    %v636 = vunpack.c.l.b16 %v146
    %v637 = vunpack.c.h.b16 %v146
    %v638 = vunpack.c.l.b16 %v147
    %v639 = vunpack.c.h.b16 %v147
    %v640 = vunpack.c.l.b16 %v148
    %v641 = vunpack.c.h.b16 %v148
    %v642 = vunpack.c.l.b16 %v149
    %v643 = vunpack.c.h.b16 %v149
    %v644 = vunpack.c.l.b16 %v150
    %v645 = vunpack.c.h.b16 %v150
    %v646 = vunpack.c.l.b16 %v151
    %v647 = vunpack.c.h.b16 %v151
    %v648 = vunpack.c.l.b16 %v152
    %v649 = vunpack.c.h.b16 %v152
    %v650 = vunpack.c.l.b16 %v153
    %v651 = vunpack.c.h.b16 %v153
    %v652 = vunpack.c.l.b16 %v154
    %v653 = vunpack.c.h.b16 %v154
    %v654 = vunpack.c.l.b16 %v155
    %v655 = vunpack.c.h.b16 %v155
    %v656 = vunpack.c.l.b16 %v156
    %v657 = vunpack.c.h.b16 %v156
    %v658 = vunpack.c.l.b16 %v157
    %v659 = vunpack.c.h.b16 %v157
    %v660 = vunpack.c.l.b16 %v158
    %v661 = vunpack.c.h.b16 %v158
    %v662 = vunpack.c.l.b16 %v159
    %v663 = vunpack.c.h.b16 %v159
    %v664 = vunpack.c.l.b16 %v160
    %v665 = vunpack.c.h.b16 %v160
    %v666 = vunpack.c.l.b16 %v161
    %v667 = vunpack.c.h.b16 %v161
    %v668 = vunpack.c.l.b16 %v162
    %v669 = vunpack.c.h.b16 %v162
    %v670 = vunpack.c.l.b16 %v163
    %v671 = vunpack.c.h.b16 %v163
    %v672 = vunpack.c.l.b16 %v164
    %v673 = vunpack.c.h.b16 %v164
    %v674 = vunpack.c.l.b16 %v165
    %v675 = vunpack.c.h.b16 %v165
    %v676 = vunpack.c.l.b16 %v166
    %v677 = vunpack.c.h.b16 %v166
    %v678 = vunpack.c.l.b16 %v167
    %v679 = vunpack.c.h.b16 %v167
    %v680 = vunpack.c.l.b16 %v168
    %v681 = vunpack.c.h.b16 %v168
    %v682 = vunpack.c.l.b16 %v169
    %v683 = vunpack.c.h.b16 %v169
    %v684 = vunpack.c.l.b16 %v170
    %v685 = vunpack.c.h.b16 %v170
    %v686 = vunpack.c.l.b16 %v171
    %v687 = vunpack.c.h.b16 %v171
    %v688 = vunpack.c.l.b16 %v172
    %v689 = vunpack.c.h.b16 %v172
    %v690 = vunpack.c.l.b16 %v173
    %v691 = vunpack.c.h.b16 %v173
    %v692 = vunpack.c.l.b16 %v174
    %v693 = vunpack.c.h.b16 %v174
    %v694 = vunpack.c.l.b16 %v175
    %v695 = vunpack.c.h.b16 %v175
    %v696 = vunpack.c.l.b16 %v176
    %v697 = vunpack.c.h.b16 %v176
    %v698 = vunpack.c.l.b16 %v177
    %v699 = vunpack.c.h.b16 %v177
    %v700 = vunpack.c.l.b16 %v178
    %v701 = vunpack.c.h.b16 %v178
    %v702 = vunpack.c.l.b16 %v179
    %v703 = vunpack.c.h.b16 %v179
    %v704 = vunpack.c.l.b16 %v180
    %v705 = vunpack.c.h.b16 %v180
    %v706 = vunpack.c.l.b16 %v181
    %v707 = vunpack.c.h.b16 %v181
    %v708 = vunpack.c.l.b16 %v182
    %v709 = vunpack.c.h.b16 %v182
    %v710 = vunpack.c.l.b16 %v183
    %v711 = vunpack.c.h.b16 %v183
    %v712 = vunpack.c.l.b16 %v184
    %v713 = vunpack.c.h.b16 %v184
    %v714 = vunpack.c.l.b16 %v185
    %v715 = vunpack.c.h.b16 %v185
    %v716 = vunpack.c.l.b16 %v186
    %v717 = vunpack.c.h.b16 %v186
    %v718 = vunpack.c.l.b16 %v187
    %v719 = vunpack.c.h.b16 %v187
    %v720 = vunpack.c.l.b16 %v188
    %v721 = vunpack.c.h.b16 %v188
    %v722 = vunpack.c.l.b16 %v189
    %v723 = vunpack.c.h.b16 %v189
    %v724 = vunpack.c.l.b16 %v190
    %v725 = vunpack.c.h.b16 %v190
    %v726 = vunpack.c.l.b16 %v191
    %v727 = vunpack.c.h.b16 %v191
    %v728 = vunpack.c.l.b16 %v192
    %v729 = vunpack.c.h.b16 %v192
    %v730 = vunpack.c.l.b16 %v193
    %v731 = vunpack.c.h.b16 %v193
    %v732 = vunpack.c.l.b16 %v194
    %v733 = vunpack.c.h.b16 %v194
    %v734 = vunpack.c.l.b16 %v195
    %v735 = vunpack.c.h.b16 %v195
    %v736 = vpack.c.b16 %v484, %v480
    %v737 = vpack.c.b16 %v485, %v481
    %v738 = vpack.c.b16 %v486, %v482
    %v739 = vpack.c.b16 %v487, %v483
    %v740 = vpack.c.b16 %v492, %v488
    %v741 = vpack.c.b16 %v493, %v489
    %v742 = vpack.c.b16 %v494, %v490
    %v743 = vpack.c.b16 %v495, %v491
    %v744 = vpack.c.b16 %v500, %v496
    %v745 = vpack.c.b16 %v501, %v497
    %v746 = vpack.c.b16 %v502, %v498
    %v747 = vpack.c.b16 %v503, %v499
    %v748 = vpack.c.b16 %v508, %v504
    %v749 = vpack.c.b16 %v509, %v505
    %v750 = vpack.c.b16 %v510, %v506
    %v751 = vpack.c.b16 %v511, %v507
    %v752 = vpack.c.b16 %v516, %v512
    %v753 = vpack.c.b16 %v517, %v513
    %v754 = vpack.c.b16 %v518, %v514
    %v755 = vpack.c.b16 %v519, %v515
    %v756 = vpack.c.b16 %v524, %v520
    %v757 = vpack.c.b16 %v525, %v521
    %v758 = vpack.c.b16 %v526, %v522
    %v759 = vpack.c.b16 %v527, %v523
    %v760 = vpack.c.b16 %v532, %v528
    %v761 = vpack.c.b16 %v533, %v529
    %v762 = vpack.c.b16 %v534, %v530
    %v763 = vpack.c.b16 %v535, %v531
    %v764 = vpack.c.b16 %v540, %v536
    %v765 = vpack.c.b16 %v541, %v537
    %v766 = vpack.c.b16 %v542, %v538
    %v767 = vpack.c.b16 %v543, %v539
    %v768 = vpack.c.b16 %v548, %v544
    %v769 = vpack.c.b16 %v549, %v545
    %v770 = vpack.c.b16 %v550, %v546
    %v771 = vpack.c.b16 %v551, %v547
    %v772 = vpack.c.b16 %v556, %v552
    %v773 = vpack.c.b16 %v557, %v553
    %v774 = vpack.c.b16 %v558, %v554
    %v775 = vpack.c.b16 %v559, %v555
    %v776 = vpack.c.b16 %v564, %v560
    %v777 = vpack.c.b16 %v565, %v561
    %v778 = vpack.c.b16 %v566, %v562
    %v779 = vpack.c.b16 %v567, %v563
    %v780 = vpack.c.b16 %v572, %v568
    %v781 = vpack.c.b16 %v573, %v569
    %v782 = vpack.c.b16 %v574, %v570
    %v783 = vpack.c.b16 %v575, %v571
    %v784 = vpack.c.b16 %v580, %v576
    %v785 = vpack.c.b16 %v581, %v577
    %v786 = vpack.c.b16 %v582, %v578
    %v787 = vpack.c.b16 %v583, %v579
    %v788 = vpack.c.b16 %v588, %v584
    %v789 = vpack.c.b16 %v589, %v585
    %v790 = vpack.c.b16 %v590, %v586
    %v791 = vpack.c.b16 %v591, %v587
    %v792 = vpack.c.b16 %v596, %v592
    %v793 = vpack.c.b16 %v597, %v593
    %v794 = vpack.c.b16 %v598, %v594
    %v795 = vpack.c.b16 %v599, %v595
    %v796 = vpack.c.b16 %v604, %v600
    %v797 = vpack.c.b16 %v605, %v601
    %v798 = vpack.c.b16 %v606, %v602
    %v799 = vpack.c.b16 %v607, %v603
    %v800 = vpack.c.b16 %v612, %v608
    %v801 = vpack.c.b16 %v613, %v609
    %v802 = vpack.c.b16 %v614, %v610
    %v803 = vpack.c.b16 %v615, %v611
    %v804 = vpack.c.b16 %v620, %v616
    %v805 = vpack.c.b16 %v621, %v617
    %v806 = vpack.c.b16 %v622, %v618
    %v807 = vpack.c.b16 %v623, %v619
    %v808 = vpack.c.b16 %v628, %v624
    %v809 = vpack.c.b16 %v629, %v625
    %v810 = vpack.c.b16 %v630, %v626
    %v811 = vpack.c.b16 %v631, %v627
    %v812 = vpack.c.b16 %v636, %v632
    %v813 = vpack.c.b16 %v637, %v633
    %v814 = vpack.c.b16 %v638, %v634
    %v815 = vpack.c.b16 %v639, %v635
    %v816 = vpack.c.b16 %v644, %v640
    %v817 = vpack.c.b16 %v645, %v641
    %v818 = vpack.c.b16 %v646, %v642
    %v819 = vpack.c.b16 %v647, %v643
    %v820 = vpack.c.b16 %v652, %v648
    %v821 = vpack.c.b16 %v653, %v649
    %v822 = vpack.c.b16 %v654, %v650
    %v823 = vpack.c.b16 %v655, %v651
    %v824 = vpack.c.b16 %v660, %v656
    %v825 = vpack.c.b16 %v661, %v657
    %v826 = vpack.c.b16 %v662, %v658
    %v827 = vpack.c.b16 %v663, %v659
    %v828 = vpack.c.b16 %v668, %v664
    %v829 = vpack.c.b16 %v669, %v665
    %v830 = vpack.c.b16 %v670, %v666
    %v831 = vpack.c.b16 %v671, %v667
    %v832 = vpack.c.b16 %v676, %v672
    %v833 = vpack.c.b16 %v677, %v673
    %v834 = vpack.c.b16 %v678, %v674
    %v835 = vpack.c.b16 %v679, %v675
    %v836 = vpack.c.b16 %v684, %v680
    %v837 = vpack.c.b16 %v685, %v681
    %v838 = vpack.c.b16 %v686, %v682
    %v839 = vpack.c.b16 %v687, %v683
    %v840 = vpack.c.b16 %v692, %v688
    %v841 = vpack.c.b16 %v693, %v689
    %v842 = vpack.c.b16 %v694, %v690
    %v843 = vpack.c.b16 %v695, %v691
    %v844 = vpack.c.b16 %v700, %v696
    %v845 = vpack.c.b16 %v701, %v697
    %v846 = vpack.c.b16 %v702, %v698
    %v847 = vpack.c.b16 %v703, %v699
    %v848 = vpack.c.b16 %v708, %v704
    %v849 = vpack.c.b16 %v709, %v705
    %v850 = vpack.c.b16 %v710, %v706
    %v851 = vpack.c.b16 %v711, %v707
    %v852 = vpack.c.b16 %v716, %v712
    %v853 = vpack.c.b16 %v717, %v713
    %v854 = vpack.c.b16 %v718, %v714
    %v855 = vpack.c.b16 %v719, %v715
    %v856 = vpack.c.b16 %v724, %v720
    %v857 = vpack.c.b16 %v725, %v721
    %v858 = vpack.c.b16 %v726, %v722
    %v859 = vpack.c.b16 %v727, %v723
    %v860 = vpack.c.b16 %v732, %v728
    %v861 = vpack.c.b16 %v733, %v729
    %v862 = vpack.c.b16 %v734, %v730
    %v863 = vpack.c.b16 %v735, %v731
    %992 = vmatprep.subr.bf16.mxu0 %v765
    %993 = vmatpush1.bf16.msra.mxu0 %v764
    %994 = vmatprep.subr.bf16.mxu0 %v761
    %995 = vmatpush1.bf16.msra.mxu0 %v760
    %996 = vmatprep.subr.bf16.mxu0 %v757
    %997 = vmatpush1.bf16.msra.mxu0 %v756
    %998 = vmatprep.subr.bf16.mxu0 %v753
    %999 = vmatpush1.bf16.msra.mxu0 %v752
    %1000 = vmatprep.subr.bf16.mxu0 %v749
    %1001 = vmatpush1.bf16.msra.mxu0 %v748
    %1002 = vmatprep.subr.bf16.mxu0 %v745
    %1003 = vmatpush1.bf16.msra.mxu0 %v744
    %1004 = vmatprep.subr.bf16.mxu0 %v741
    %1005 = vmatpush1.bf16.msra.mxu0 %v740
    %1006 = vmatprep.subr.bf16.mxu0 %v737
    %1007 = vmatpush1.bf16.msra.mxu0 %v736
    %1008 = vmatprep.subr.bf16.mxu0 %v797
    %1009 = vmatpush2.bf16.msra.mxu0 %v796
    %1010 = vmatprep.subr.bf16.mxu0 %v793
    %1011 = vmatpush2.bf16.msra.mxu0 %v792
    %1012 = vmatprep.subr.bf16.mxu0 %v789
    %1013 = vmatpush2.bf16.msra.mxu0 %v788
    %1014 = vmatprep.subr.bf16.mxu0 %v785
    %1015 = vmatpush2.bf16.msra.mxu0 %v784
    %1016 = vmatprep.subr.bf16.mxu0 %v781
    %1017 = vmatpush2.bf16.msra.mxu0 %v780
    %1018 = vmatprep.subr.bf16.mxu0 %v777
    %1019 = vmatpush2.bf16.msra.mxu0 %v776
    %1020 = vmatprep.subr.bf16.mxu0 %v773
    %1021 = vmatpush2.bf16.msra.mxu0 %v772
    %1022 = vmatprep.subr.bf16.mxu0 %v769
    %1023 = vmatpush2.bf16.msra.mxu0 %v768
    %1024 = vmatprep.mubr.bf16.mxu0 %v297
    %1025 = vmatmul.mubr.bf16.gmra.mxu0 %v296
    %v1026 = vpop.f32.mrf.mxu0
    %v1027 = vadd.f32 %v201, %v1026
    %v1028 = vpop.f32.mrf.mxu0
    %v1029 = vadd.f32 %v205, %v1028
    %v1030 = vpop.f32.mrf.mxu0
    %v1031 = vadd.f32 %v201, %v1030
    %v1032 = vpop.f32.mrf.mxu0
    %v1033 = vadd.f32 %v205, %v1032
    %1034 = vmatprep.mubr.bf16.mxu0 %v301
    %1035 = vmatmul.mubr.bf16.gmra.mxu0 %v300
    %v1036 = vpop.f32.mrf.mxu0
    %v1037 = vadd.f32 %v201, %v1036
    %v1038 = vpop.f32.mrf.mxu0
    %v1039 = vadd.f32 %v205, %v1038
    %v1040 = vpop.f32.mrf.mxu0
    %v1041 = vadd.f32 %v201, %v1040
    %v1042 = vpop.f32.mrf.mxu0
    %v1043 = vadd.f32 %v205, %v1042
    %1044 = vmatprep.mubr.bf16.mxu0 %v305
    %1045 = vmatmul.mubr.bf16.gmra.mxu0 %v304
    %v1046 = vpop.f32.mrf.mxu0
    %v1047 = vadd.f32 %v201, %v1046
    %v1048 = vpop.f32.mrf.mxu0
    %v1049 = vadd.f32 %v205, %v1048
    %v1050 = vpop.f32.mrf.mxu0
    %v1051 = vadd.f32 %v201, %v1050
    %v1052 = vpop.f32.mrf.mxu0
    %v1053 = vadd.f32 %v205, %v1052
    %1054 = vmatprep.mubr.bf16.mxu0 %v309
    %1055 = vmatmul.mubr.bf16.gmra.mxu0 %v308
    %v1056 = vpop.f32.mrf.mxu0
    %v1057 = vadd.f32 %v201, %v1056
    %v1058 = vpop.f32.mrf.mxu0
    %v1059 = vadd.f32 %v205, %v1058
    %v1060 = vpop.f32.mrf.mxu0
    %v1061 = vadd.f32 %v201, %v1060
    %v1062 = vpop.f32.mrf.mxu0
    %v1063 = vadd.f32 %v205, %v1062
    %1064 = vmatprep.mubr.bf16.mxu0 %v313
    %1065 = vmatmul.mubr.bf16.gmra.mxu0 %v312
    %v1066 = vpop.f32.mrf.mxu0
    %v1067 = vadd.f32 %v201, %v1066
    %v1068 = vpop.f32.mrf.mxu0
    %v1069 = vadd.f32 %v205, %v1068
    %v1070 = vpop.f32.mrf.mxu0
    %v1071 = vadd.f32 %v201, %v1070
    %v1072 = vpop.f32.mrf.mxu0
    %v1073 = vadd.f32 %v205, %v1072
    %1074 = vmatprep.mubr.bf16.mxu0 %v317
    %1075 = vmatmul.mubr.bf16.gmra.mxu0 %v316
    %v1076 = vpop.f32.mrf.mxu0
    %v1077 = vadd.f32 %v201, %v1076
    %v1078 = vpop.f32.mrf.mxu0
    %v1079 = vadd.f32 %v205, %v1078
    %v1080 = vpop.f32.mrf.mxu0
    %v1081 = vadd.f32 %v201, %v1080
    %v1082 = vpop.f32.mrf.mxu0
    %v1083 = vadd.f32 %v205, %v1082
    %1084 = vmatprep.mubr.bf16.mxu0 %v321
    %1085 = vmatmul.mubr.bf16.gmra.mxu0 %v320
    %v1086 = vpop.f32.mrf.mxu0
    %v1087 = vadd.f32 %v201, %v1086
    %v1088 = vpop.f32.mrf.mxu0
    %v1089 = vadd.f32 %v205, %v1088
    %v1090 = vpop.f32.mrf.mxu0
    %v1091 = vpop.f32.mrf.mxu0
    %1092 = vdwg.mxu0
    %1093 = vmatprep.subr.bf16.mxu0 %v829
    %1094 = vmatpush1.bf16.msra.mxu0 %v828
    %1095 = vmatprep.subr.bf16.mxu0 %v825
    %1096 = vmatpush1.bf16.msra.mxu0 %v824
    %1097 = vmatprep.subr.bf16.mxu0 %v821
    %1098 = vmatpush1.bf16.msra.mxu0 %v820
    %1099 = vmatprep.subr.bf16.mxu0 %v817
    %1100 = vmatpush1.bf16.msra.mxu0 %v816
    %1101 = vmatprep.subr.bf16.mxu0 %v813
    %1102 = vmatpush1.bf16.msra.mxu0 %v812
    %1103 = vmatprep.subr.bf16.mxu0 %v809
    %1104 = vmatpush1.bf16.msra.mxu0 %v808
    %1105 = vmatprep.subr.bf16.mxu0 %v805
    %1106 = vmatpush1.bf16.msra.mxu0 %v804
    %1107 = vmatprep.subr.bf16.mxu0 %v801
    %1108 = vmatpush1.bf16.msra.mxu0 %v800
    %1109 = vmatprep.subr.bf16.mxu0 %v861
    %1110 = vmatpush2.bf16.msra.mxu0 %v860
    %1111 = vmatprep.subr.bf16.mxu0 %v857
    %1112 = vmatpush2.bf16.msra.mxu0 %v856
    %1113 = vmatprep.subr.bf16.mxu0 %v853
    %1114 = vmatpush2.bf16.msra.mxu0 %v852
    %1115 = vmatprep.subr.bf16.mxu0 %v849
    %1116 = vmatpush2.bf16.msra.mxu0 %v848
    %1117 = vmatprep.subr.bf16.mxu0 %v845
    %1118 = vmatpush2.bf16.msra.mxu0 %v844
    %1119 = vmatprep.subr.bf16.mxu0 %v841
    %1120 = vmatpush2.bf16.msra.mxu0 %v840
    %1121 = vmatprep.subr.bf16.mxu0 %v837
    %1122 = vmatpush2.bf16.msra.mxu0 %v836
    %1123 = vmatprep.subr.bf16.mxu0 %v833
    %1124 = vmatpush2.bf16.msra.mxu0 %v832
    %1125 = vmatprep.mubr.bf16.mxu0 %v299
    %1126 = vmatmul.mubr.bf16.gmra.mxu0 %v298
    %v1127 = vpop.f32.mrf.mxu0
    %v1128 = vadd.f32 %v1027, %v1127
    %v1129 = vpop.f32.mrf.mxu0
    %v1130 = vadd.f32 %v1029, %v1129
    %v1131 = vpop.f32.mrf.mxu0
    %v1132 = vadd.f32 %v1031, %v1131
    %v1133 = vpop.f32.mrf.mxu0
    %v1134 = vadd.f32 %v1033, %v1133
    %1135 = vmatprep.mubr.bf16.mxu0 %v303
    %1136 = vmatmul.mubr.bf16.gmra.mxu0 %v302
    %v1137 = vpop.f32.mrf.mxu0
    %v1138 = vadd.f32 %v1037, %v1137
    %v1139 = vpop.f32.mrf.mxu0
    %v1140 = vadd.f32 %v1039, %v1139
    %v1141 = vpop.f32.mrf.mxu0
    %v1142 = vadd.f32 %v1041, %v1141
    %v1143 = vpop.f32.mrf.mxu0
    %v1144 = vadd.f32 %v1043, %v1143
    %1145 = vmatprep.mubr.bf16.mxu0 %v307
    %1146 = vmatmul.mubr.bf16.gmra.mxu0 %v306
    %v1147 = vpop.f32.mrf.mxu0
    %v1148 = vadd.f32 %v1047, %v1147
    %v1149 = vpop.f32.mrf.mxu0
    %v1150 = vadd.f32 %v1049, %v1149
    %v1151 = vpop.f32.mrf.mxu0
    %v1152 = vadd.f32 %v1051, %v1151
    %v1153 = vpop.f32.mrf.mxu0
    %v1154 = vadd.f32 %v1053, %v1153
    %1155 = vmatprep.mubr.bf16.mxu0 %v311
    %1156 = vmatmul.mubr.bf16.gmra.mxu0 %v310
    %v1157 = vpop.f32.mrf.mxu0
    %v1158 = vadd.f32 %v1057, %v1157
    %v1159 = vpop.f32.mrf.mxu0
    %v1160 = vadd.f32 %v1059, %v1159
    %v1161 = vpop.f32.mrf.mxu0
    %v1162 = vadd.f32 %v1061, %v1161
    %v1163 = vpop.f32.mrf.mxu0
    %v1164 = vadd.f32 %v1063, %v1163
    %1165 = vmatprep.mubr.bf16.mxu0 %v315
    %1166 = vmatmul.mubr.bf16.gmra.mxu0 %v314
    %v1167 = vpop.f32.mrf.mxu0
    %v1168 = vadd.f32 %v1067, %v1167
    %v1169 = vpop.f32.mrf.mxu0
    %v1170 = vadd.f32 %v1069, %v1169
    %v1171 = vpop.f32.mrf.mxu0
    %v1172 = vadd.f32 %v1071, %v1171
    %v1173 = vpop.f32.mrf.mxu0
    %v1174 = vadd.f32 %v1073, %v1173
    %1175 = vmatprep.mubr.bf16.mxu0 %v319
    %1176 = vmatmul.mubr.bf16.gmra.mxu0 %v318
    %v1177 = vpop.f32.mrf.mxu0
    %v1178 = vadd.f32 %v1077, %v1177
    %v1179 = vpop.f32.mrf.mxu0
    %v1180 = vadd.f32 %v1079, %v1179
    %v1181 = vpop.f32.mrf.mxu0
    %v1182 = vadd.f32 %v1081, %v1181
    %v1183 = vpop.f32.mrf.mxu0
    %v1184 = vadd.f32 %v1083, %v1183
    %1185 = vmatprep.mubr.bf16.mxu0 %v323
    %1186 = vmatmul.mubr.bf16.gmra.mxu0 %v322
    %v1187 = vpop.f32.mrf.mxu0
    %v1188 = vadd.f32 %v1087, %v1187
    %v1189 = vpop.f32.mrf.mxu0
    %v1190 = vadd.f32 %v1089, %v1189
    %v1191 = vpop.f32.mrf.mxu0
    %v1192 = vpop.f32.mrf.mxu0
    %1193 = vdwg.mxu0
    %1194 = vmatprep.subr.bf16.mxu0 %v767
    %1195 = vmatpush1.bf16.msra.mxu0 %v766
    %1196 = vmatprep.subr.bf16.mxu0 %v763
    %1197 = vmatpush1.bf16.msra.mxu0 %v762
    %1198 = vmatprep.subr.bf16.mxu0 %v759
    %1199 = vmatpush1.bf16.msra.mxu0 %v758
    %1200 = vmatprep.subr.bf16.mxu0 %v755
    %1201 = vmatpush1.bf16.msra.mxu0 %v754
    %1202 = vmatprep.subr.bf16.mxu0 %v751
    %1203 = vmatpush1.bf16.msra.mxu0 %v750
    %1204 = vmatprep.subr.bf16.mxu0 %v747
    %1205 = vmatpush1.bf16.msra.mxu0 %v746
    %1206 = vmatprep.subr.bf16.mxu0 %v743
    %1207 = vmatpush1.bf16.msra.mxu0 %v742
    %1208 = vmatprep.subr.bf16.mxu0 %v739
    %1209 = vmatpush1.bf16.msra.mxu0 %v738
    %1210 = vmatprep.subr.bf16.mxu0 %v799
    %1211 = vmatpush2.bf16.msra.mxu0 %v798
    %1212 = vmatprep.subr.bf16.mxu0 %v795
    %1213 = vmatpush2.bf16.msra.mxu0 %v794
    %1214 = vmatprep.subr.bf16.mxu0 %v791
    %1215 = vmatpush2.bf16.msra.mxu0 %v790
    %1216 = vmatprep.subr.bf16.mxu0 %v787
    %1217 = vmatpush2.bf16.msra.mxu0 %v786
    %1218 = vmatprep.subr.bf16.mxu0 %v783
    %1219 = vmatpush2.bf16.msra.mxu0 %v782
    %1220 = vmatprep.subr.bf16.mxu0 %v779
    %1221 = vmatpush2.bf16.msra.mxu0 %v778
    %1222 = vmatprep.subr.bf16.mxu0 %v775
    %1223 = vmatpush2.bf16.msra.mxu0 %v774
    %1224 = vmatprep.subr.bf16.mxu0 %v771
    %1225 = vmatpush2.bf16.msra.mxu0 %v770
    %1226 = vmatprep.mubr.bf16.mxu0 %v297
    %1227 = vmatmul.mubr.bf16.gmra.mxu0 %v296
    %v1228 = vpop.f32.mrf.mxu0
    %v1229 = vadd.f32 %v209, %v1228
    %v1230 = vpop.f32.mrf.mxu0
    %v1231 = vadd.f32 %v213, %v1230
    %v1232 = vpop.f32.mrf.mxu0
    %v1233 = vadd.f32 %v209, %v1232
    %v1234 = vpop.f32.mrf.mxu0
    %v1235 = vadd.f32 %v213, %v1234
    %1236 = vmatprep.mubr.bf16.mxu0 %v301
    %1237 = vmatmul.mubr.bf16.gmra.mxu0 %v300
    %v1238 = vpop.f32.mrf.mxu0
    %v1239 = vadd.f32 %v209, %v1238
    %v1240 = vpop.f32.mrf.mxu0
    %v1241 = vadd.f32 %v213, %v1240
    %v1242 = vpop.f32.mrf.mxu0
    %v1243 = vadd.f32 %v209, %v1242
    %v1244 = vpop.f32.mrf.mxu0
    %v1245 = vadd.f32 %v213, %v1244
    %1246 = vmatprep.mubr.bf16.mxu0 %v305
    %1247 = vmatmul.mubr.bf16.gmra.mxu0 %v304
    %v1248 = vpop.f32.mrf.mxu0
    %v1249 = vadd.f32 %v209, %v1248
    %v1250 = vpop.f32.mrf.mxu0
    %v1251 = vadd.f32 %v213, %v1250
    %v1252 = vpop.f32.mrf.mxu0
    %v1253 = vadd.f32 %v209, %v1252
    %v1254 = vpop.f32.mrf.mxu0
    %v1255 = vadd.f32 %v213, %v1254
    %1256 = vmatprep.mubr.bf16.mxu0 %v309
    %1257 = vmatmul.mubr.bf16.gmra.mxu0 %v308
    %v1258 = vpop.f32.mrf.mxu0
    %v1259 = vadd.f32 %v209, %v1258
    %v1260 = vpop.f32.mrf.mxu0
    %v1261 = vadd.f32 %v213, %v1260
    %v1262 = vpop.f32.mrf.mxu0
    %v1263 = vadd.f32 %v209, %v1262
    %v1264 = vpop.f32.mrf.mxu0
    %v1265 = vadd.f32 %v213, %v1264
    %1266 = vmatprep.mubr.bf16.mxu0 %v313
    %1267 = vmatmul.mubr.bf16.gmra.mxu0 %v312
    %v1268 = vpop.f32.mrf.mxu0
    %v1269 = vadd.f32 %v209, %v1268
    %v1270 = vpop.f32.mrf.mxu0
    %v1271 = vadd.f32 %v213, %v1270
    %v1272 = vpop.f32.mrf.mxu0
    %v1273 = vadd.f32 %v209, %v1272
    %v1274 = vpop.f32.mrf.mxu0
    %v1275 = vadd.f32 %v213, %v1274
    %1276 = vmatprep.mubr.bf16.mxu0 %v317
    %1277 = vmatmul.mubr.bf16.gmra.mxu0 %v316
    %v1278 = vpop.f32.mrf.mxu0
    %v1279 = vadd.f32 %v209, %v1278
    %v1280 = vpop.f32.mrf.mxu0
    %v1281 = vadd.f32 %v213, %v1280
    %v1282 = vpop.f32.mrf.mxu0
    %v1283 = vadd.f32 %v209, %v1282
    %v1284 = vpop.f32.mrf.mxu0
    %v1285 = vadd.f32 %v213, %v1284
    %1286 = vmatprep.mubr.bf16.mxu0 %v321
    %1287 = vmatmul.mubr.bf16.gmra.mxu0 %v320
    %v1288 = vpop.f32.mrf.mxu0
    %v1289 = vadd.f32 %v209, %v1288
    %v1290 = vpop.f32.mrf.mxu0
    %v1291 = vadd.f32 %v213, %v1290
    %v1292 = vpop.f32.mrf.mxu0
    %v1293 = vpop.f32.mrf.mxu0
    %1294 = vdwg.mxu0
    %1295 = vmatprep.subr.bf16.mxu0 %v831
    %1296 = vmatpush1.bf16.msra.mxu0 %v830
    %1297 = vmatprep.subr.bf16.mxu0 %v827
    %1298 = vmatpush1.bf16.msra.mxu0 %v826
    %1299 = vmatprep.subr.bf16.mxu0 %v823
    %1300 = vmatpush1.bf16.msra.mxu0 %v822
    %1301 = vmatprep.subr.bf16.mxu0 %v819
    %1302 = vmatpush1.bf16.msra.mxu0 %v818
    %1303 = vmatprep.subr.bf16.mxu0 %v815
    %1304 = vmatpush1.bf16.msra.mxu0 %v814
    %1305 = vmatprep.subr.bf16.mxu0 %v811
    %1306 = vmatpush1.bf16.msra.mxu0 %v810
    %1307 = vmatprep.subr.bf16.mxu0 %v807
    %1308 = vmatpush1.bf16.msra.mxu0 %v806
    %1309 = vmatprep.subr.bf16.mxu0 %v803
    %1310 = vmatpush1.bf16.msra.mxu0 %v802
    %1311 = vmatprep.subr.bf16.mxu0 %v863
    %1312 = vmatpush2.bf16.msra.mxu0 %v862
    %1313 = vmatprep.subr.bf16.mxu0 %v859
    %1314 = vmatpush2.bf16.msra.mxu0 %v858
    %1315 = vmatprep.subr.bf16.mxu0 %v855
    %1316 = vmatpush2.bf16.msra.mxu0 %v854
    %1317 = vmatprep.subr.bf16.mxu0 %v851
    %1318 = vmatpush2.bf16.msra.mxu0 %v850
    %1319 = vmatprep.subr.bf16.mxu0 %v847
    %1320 = vmatpush2.bf16.msra.mxu0 %v846
    %1321 = vmatprep.subr.bf16.mxu0 %v843
    %1322 = vmatpush2.bf16.msra.mxu0 %v842
    %1323 = vmatprep.subr.bf16.mxu0 %v839
    %1324 = vmatpush2.bf16.msra.mxu0 %v838
    %1325 = vmatprep.subr.bf16.mxu0 %v835
    %1326 = vmatpush2.bf16.msra.mxu0 %v834
    %1327 = vmatprep.mubr.bf16.mxu0 %v299
    %1328 = vmatmul.mubr.bf16.gmra.mxu0 %v298
    %v1329 = vpop.f32.mrf.mxu0
    %v1330 = vadd.f32 %v1229, %v1329
    %v1331 = vpop.f32.mrf.mxu0
    %v1332 = vadd.f32 %v1231, %v1331
    %v1333 = vpop.f32.mrf.mxu0
    %v1334 = vadd.f32 %v1233, %v1333
    %v1335 = vpop.f32.mrf.mxu0
    %v1336 = vadd.f32 %v1235, %v1335
    %1337 = vmatprep.mubr.bf16.mxu0 %v303
    %1338 = vmatmul.mubr.bf16.gmra.mxu0 %v302
    %v1339 = vpop.f32.mrf.mxu0
    %v1340 = vadd.f32 %v1239, %v1339
    %v1341 = vpop.f32.mrf.mxu0
    %v1342 = vadd.f32 %v1241, %v1341
    %v1343 = vpop.f32.mrf.mxu0
    %v1344 = vadd.f32 %v1243, %v1343
    %v1345 = vpop.f32.mrf.mxu0
    %v1346 = vadd.f32 %v1245, %v1345
    %1347 = vmatprep.mubr.bf16.mxu0 %v307
    %1348 = vmatmul.mubr.bf16.gmra.mxu0 %v306
    %v1349 = vpop.f32.mrf.mxu0
    %v1350 = vadd.f32 %v1249, %v1349
    %v1351 = vpop.f32.mrf.mxu0
    %v1352 = vadd.f32 %v1251, %v1351
    %v1353 = vpop.f32.mrf.mxu0
    %v1354 = vadd.f32 %v1253, %v1353
    %v1355 = vpop.f32.mrf.mxu0
    %v1356 = vadd.f32 %v1255, %v1355
    %1357 = vmatprep.mubr.bf16.mxu0 %v311
    %1358 = vmatmul.mubr.bf16.gmra.mxu0 %v310
    %v1359 = vpop.f32.mrf.mxu0
    %v1360 = vadd.f32 %v1259, %v1359
    %v1361 = vpop.f32.mrf.mxu0
    %v1362 = vadd.f32 %v1261, %v1361
    %v1363 = vpop.f32.mrf.mxu0
    %v1364 = vadd.f32 %v1263, %v1363
    %v1365 = vpop.f32.mrf.mxu0
    %v1366 = vadd.f32 %v1265, %v1365
    %1367 = vmatprep.mubr.bf16.mxu0 %v315
    %1368 = vmatmul.mubr.bf16.gmra.mxu0 %v314
    %v1369 = vpop.f32.mrf.mxu0
    %v1370 = vadd.f32 %v1269, %v1369
    %v1371 = vpop.f32.mrf.mxu0
    %v1372 = vadd.f32 %v1271, %v1371
    %v1373 = vpop.f32.mrf.mxu0
    %v1374 = vadd.f32 %v1273, %v1373
    %v1375 = vpop.f32.mrf.mxu0
    %v1376 = vadd.f32 %v1275, %v1375
    %1377 = vmatprep.mubr.bf16.mxu0 %v319
    %1378 = vmatmul.mubr.bf16.gmra.mxu0 %v318
    %v1379 = vpop.f32.mrf.mxu0
    %v1380 = vadd.f32 %v1279, %v1379
    %v1381 = vpop.f32.mrf.mxu0
    %v1382 = vadd.f32 %v1281, %v1381
    %v1383 = vpop.f32.mrf.mxu0
    %v1384 = vadd.f32 %v1283, %v1383
    %v1385 = vpop.f32.mrf.mxu0
    %v1386 = vadd.f32 %v1285, %v1385
    %1387 = vmatprep.mubr.bf16.mxu0 %v323
    %1388 = vmatmul.mubr.bf16.gmra.mxu0 %v322
    %v1389 = vpop.f32.mrf.mxu0
    %v1390 = vadd.f32 %v1289, %v1389
    %v1391 = vpop.f32.mrf.mxu0
    %v1392 = vadd.f32 %v1291, %v1391
    %v1393 = vpop.f32.mrf.mxu0
    %v1394 = vpop.f32.mrf.mxu0
    %1395 = vdwg.mxu0
    %v1396 = vmax.f32 %v1128, 0.0
    %v1397 = vmax.f32 %v1130, 0.0
    %v1398 = vmax.f32 %v1330, 0.0
    %v1399 = vmax.f32 %v1332, 0.0
    %v1400 = vmax.f32 %v1132, 0.0
    %v1401 = vmax.f32 %v1134, 0.0
    %v1402 = vmax.f32 %v1334, 0.0
    %v1403 = vmax.f32 %v1336, 0.0
    %v1404 = vmax.f32 %v1138, 0.0
    %v1405 = vmax.f32 %v1140, 0.0
    %v1406 = vmax.f32 %v1340, 0.0
    %v1407 = vmax.f32 %v1342, 0.0
    %v1408 = vmax.f32 %v1142, 0.0
    %v1409 = vmax.f32 %v1144, 0.0
    %v1410 = vmax.f32 %v1344, 0.0
    %v1411 = vmax.f32 %v1346, 0.0
    %v1412 = vmax.f32 %v1148, 0.0
    %v1413 = vmax.f32 %v1150, 0.0
    %v1414 = vmax.f32 %v1350, 0.0
    %v1415 = vmax.f32 %v1352, 0.0
    %v1416 = vmax.f32 %v1152, 0.0
    %v1417 = vmax.f32 %v1154, 0.0
    %v1418 = vmax.f32 %v1354, 0.0
    %v1419 = vmax.f32 %v1356, 0.0
    %v1420 = vmax.f32 %v1158, 0.0
    %v1421 = vmax.f32 %v1160, 0.0
    %v1422 = vmax.f32 %v1360, 0.0
    %v1423 = vmax.f32 %v1362, 0.0
    %v1424 = vmax.f32 %v1162, 0.0
    %v1425 = vmax.f32 %v1164, 0.0
    %v1426 = vmax.f32 %v1364, 0.0
    %v1427 = vmax.f32 %v1366, 0.0
    %v1428 = vmax.f32 %v1168, 0.0
    %v1429 = vmax.f32 %v1170, 0.0
    %v1430 = vmax.f32 %v1370, 0.0
    %v1431 = vmax.f32 %v1372, 0.0
    %v1432 = vmax.f32 %v1172, 0.0
    %v1433 = vmax.f32 %v1174, 0.0
    %v1434 = vmax.f32 %v1374, 0.0
    %v1435 = vmax.f32 %v1376, 0.0
    %v1436 = vmax.f32 %v1178, 0.0
    %v1437 = vmax.f32 %v1180, 0.0
    %v1438 = vmax.f32 %v1380, 0.0
    %v1439 = vmax.f32 %v1382, 0.0
    %v1440 = vmax.f32 %v1182, 0.0
    %v1441 = vmax.f32 %v1184, 0.0
    %v1442 = vmax.f32 %v1384, 0.0
    %v1443 = vmax.f32 %v1386, 0.0
    %v1444 = vmax.f32 %v1188, 0.0
    %v1445 = vmax.f32 %v1190, 0.0
    %v1446 = vmax.f32 %v1390, 0.0
    %v1447 = vmax.f32 %v1392, 0.0
    %v1448 = vpack.c.bf16 %v1400, %v1396
    %v1449 = vpack.c.bf16 %v1401, %v1397
    %v1450 = vpack.c.bf16 %v1402, %v1398
    %v1451 = vpack.c.bf16 %v1403, %v1399
    %v1452 = vpack.c.bf16 %v1408, %v1404
    %v1453 = vpack.c.bf16 %v1409, %v1405
    %v1454 = vpack.c.bf16 %v1410, %v1406
    %v1455 = vpack.c.bf16 %v1411, %v1407
    %v1456 = vpack.c.bf16 %v1416, %v1412
    %v1457 = vpack.c.bf16 %v1417, %v1413
    %v1458 = vpack.c.bf16 %v1418, %v1414
    %v1459 = vpack.c.bf16 %v1419, %v1415
    %v1460 = vpack.c.bf16 %v1424, %v1420
    %v1461 = vpack.c.bf16 %v1425, %v1421
    %v1462 = vpack.c.bf16 %v1426, %v1422
    %v1463 = vpack.c.bf16 %v1427, %v1423
    %v1464 = vpack.c.bf16 %v1432, %v1428
    %v1465 = vpack.c.bf16 %v1433, %v1429
    %v1466 = vpack.c.bf16 %v1434, %v1430
    %v1467 = vpack.c.bf16 %v1435, %v1431
    %v1468 = vpack.c.bf16 %v1440, %v1436
    %v1469 = vpack.c.bf16 %v1441, %v1437
    %v1470 = vpack.c.bf16 %v1442, %v1438
    %v1471 = vpack.c.bf16 %v1443, %v1439
    %v1472 = vpack.c.bf16 %v1444, %v1444
    %v1473 = vpack.c.bf16 %v1445, %v1445
    %v1474 = vpack.c.bf16 %v1446, %v1446
    %v1475 = vpack.c.bf16 %v1447, %v1447
    %v1476 = vld [vmem:[%s3] sm:$0xff]
    %v1477 = vld [vmem:[%s3 + $0x8] sm:$0xff]
    %v1478 = vld [vmem:[%s3 + $0x10] sm:$0xff]
    %v1479 = vld [vmem:[%s3 + $0x18] sm:$0xff]
    %v1480 = vld [vmem:[%s3 + $0x20] sm:$0xff]
    %v1481 = vld [vmem:[%s3 + $0x28] sm:$0xff]
    %v1482 = vld [vmem:[%s3 + $0x30] sm:$0xff]
    %v1483 = vld [vmem:[%s3 + $0x38] sm:$0xff]
    %v1484 = vld [vmem:[%s3 + $0x40] sm:$0xff]
    %v1485 = vld [vmem:[%s3 + $0x48] sm:$0xff]
    %v1486 = vld [vmem:[%s3 + $0x50] sm:$0xff]
    %v1487 = vld [vmem:[%s3 + $0x58] sm:$0xff]
    %v1488 = vld [vmem:[%s3 + $0x60] sm:$0xff]
    %v1489 = vld [vmem:[%s3 + $0x68] sm:$0xff]
    %v1490 = vld [vmem:[%s3 + $0x70] sm:$0xff]
    %v1491 = vld [vmem:[%s3 + $0x78] sm:$0xff]
    %v1492 = vld [vmem:[%s3 + $0x80] sm:$0xff]
    %v1493 = vld [vmem:[%s3 + $0x88] sm:$0xff]
    %v1494 = vld [vmem:[%s3 + $0x90] sm:$0xff]
    %v1495 = vld [vmem:[%s3 + $0x98] sm:$0xff]
    %v1496 = vld [vmem:[%s3 + $0xa0] sm:$0xff]
    %v1497 = vld [vmem:[%s3 + $0xa8] sm:$0xff]
    %v1498 = vld [vmem:[%s3 + $0xb0] sm:$0xff]
    %v1499 = vld [vmem:[%s3 + $0xb8] sm:$0xff]
    %v1500 = vld [vmem:[%s3 + $0xc0] sm:$0xff]
    %v1501 = vld [vmem:[%s3 + $0xc8] sm:$0xff]
    %v1502 = vld [vmem:[%s3 + $0xd0] sm:$0xff]
    %v1503 = vld [vmem:[%s3 + $0xd8] sm:$0xff]
    %v1504 = vld [vmem:[%s3 + $0xe0] sm:$0xff]
    %v1505 = vld [vmem:[%s3 + $0xe8] sm:$0xff]
    %v1506 = vld [vmem:[%s3 + $0xf0] sm:$0xff]
    %v1507 = vld [vmem:[%s3 + $0xf8] sm:$0xff]
    %v1508 = vld [vmem:[%s3 + $0x100] sm:$0xff]
    %v1509 = vld [vmem:[%s3 + $0x108] sm:$0xff]
    %v1510 = vld [vmem:[%s3 + $0x110] sm:$0xff]
    %v1511 = vld [vmem:[%s3 + $0x118] sm:$0xff]
    %v1512 = vld [vmem:[%s3 + $0x120] sm:$0xff]
    %v1513 = vld [vmem:[%s3 + $0x128] sm:$0xff]
    %v1514 = vld [vmem:[%s3 + $0x130] sm:$0xff]
    %v1515 = vld [vmem:[%s3 + $0x138] sm:$0xff]
    %v1516 = vld [vmem:[%s3 + $0x140] sm:$0xff]
    %v1517 = vld [vmem:[%s3 + $0x148] sm:$0xff]
    %v1518 = vld [vmem:[%s3 + $0x150] sm:$0xff]
    %v1519 = vld [vmem:[%s3 + $0x158] sm:$0xff]
    %v1520 = vld [vmem:[%s3 + $0x160] sm:$0xff]
    %v1521 = vld [vmem:[%s3 + $0x168] sm:$0xff]
    %v1522 = vld [vmem:[%s3 + $0x170] sm:$0xff]
    %v1523 = vld [vmem:[%s3 + $0x178] sm:$0xff]
    %v1524 = vld [vmem:[%s3 + $0x180] sm:$0xff]
    %v1525 = vld [vmem:[%s3 + $0x188] sm:$0xff]
    %v1526 = vld [vmem:[%s3 + $0x190] sm:$0xff]
    %v1527 = vld [vmem:[%s3 + $0x198] sm:$0xff]
    %v1528 = vld [vmem:[%s3 + $0x1a0] sm:$0xff]
    %v1529 = vld [vmem:[%s3 + $0x1a8] sm:$0xff]
    %v1530 = vld [vmem:[%s3 + $0x1b0] sm:$0xff]
    %v1531 = vld [vmem:[%s3 + $0x1b8] sm:$0xff]
    %v1532 = vld [vmem:[%s3 + $0x1c0] sm:$0xff]
    %v1533 = vld [vmem:[%s3 + $0x1c8] sm:$0xff]
    %v1534 = vld [vmem:[%s3 + $0x1d0] sm:$0xff]
    %v1535 = vld [vmem:[%s3 + $0x1d8] sm:$0xff]
    %v1536 = vld [vmem:[%s3 + $0x1e0] sm:$0xff]
    %v1537 = vld [vmem:[%s3 + $0x1e8] sm:$0xff]
    %v1538 = vld [vmem:[%s3 + $0x1f0] sm:$0xff]
    %v1539 = vld [vmem:[%s3 + $0x1f8] sm:$0xff]
    %v1540 = vld [vmem:[%s3 + $0x200] sm:$0xff]
    %v1541 = vld [vmem:[%s3 + $0x208] sm:$0xff]
    %v1542 = vld [vmem:[%s3 + $0x210] sm:$0xff]
    %v1543 = vld [vmem:[%s3 + $0x218] sm:$0xff]
    %v1544 = vld [vmem:[%s3 + $0x220] sm:$0xff]
    %v1545 = vld [vmem:[%s3 + $0x228] sm:$0xff]
    %v1546 = vld [vmem:[%s3 + $0x230] sm:$0xff]
    %v1547 = vld [vmem:[%s3 + $0x238] sm:$0xff]
    %v1548 = vld [vmem:[%s3 + $0x240] sm:$0xff]
    %v1549 = vld [vmem:[%s3 + $0x248] sm:$0xff]
    %v1550 = vld [vmem:[%s3 + $0x250] sm:$0xff]
    %v1551 = vld [vmem:[%s3 + $0x258] sm:$0xff]
    %v1552 = vld [vmem:[%s3 + $0x260] sm:$0xff]
    %v1553 = vld [vmem:[%s3 + $0x268] sm:$0xff]
    %v1554 = vld [vmem:[%s3 + $0x270] sm:$0xff]
    %v1555 = vld [vmem:[%s3 + $0x278] sm:$0xff]
    %v1556 = vld [vmem:[%s3 + $0x280] sm:$0xff]
    %v1557 = vld [vmem:[%s3 + $0x288] sm:$0xff]
    %v1558 = vld [vmem:[%s3 + $0x290] sm:$0xff]
    %v1559 = vld [vmem:[%s3 + $0x298] sm:$0xff]
    %v1560 = vld [vmem:[%s3 + $0x2a0] sm:$0xff]
    %v1561 = vld [vmem:[%s3 + $0x2a8] sm:$0xff]
    %v1562 = vld [vmem:[%s3 + $0x2b0] sm:$0xff]
    %v1563 = vld [vmem:[%s3 + $0x2b8] sm:$0xff]
    %v1564 = vld [vmem:[%s3 + $0x2c0] sm:$0xff]
    %v1565 = vld [vmem:[%s3 + $0x2c8] sm:$0xff]
    %v1566 = vld [vmem:[%s3 + $0x2d0] sm:$0xff]
    %v1567 = vld [vmem:[%s3 + $0x2d8] sm:$0xff]
    %v1568 = vld [vmem:[%s3 + $0x2e0] sm:$0xff]
    %v1569 = vld [vmem:[%s3 + $0x2e8] sm:$0xff]
    %v1570 = vld [vmem:[%s3 + $0x2f0] sm:$0xff]
    %v1571 = vld [vmem:[%s3 + $0x2f8] sm:$0xff]
    %v1572 = vld [vmem:[%s3 + $0x300] sm:$0xff]
    %v1573 = vld [vmem:[%s3 + $0x308] sm:$0xff]
    %v1574 = vld [vmem:[%s3 + $0x310] sm:$0xff]
    %v1575 = vld [vmem:[%s3 + $0x318] sm:$0xff]
    %v1576 = vld [vmem:[%s3 + $0x320] sm:$0xff]
    %v1577 = vld [vmem:[%s3 + $0x328] sm:$0xff]
    %v1578 = vld [vmem:[%s3 + $0x330] sm:$0xff]
    %v1579 = vld [vmem:[%s3 + $0x338] sm:$0xff]
    %v1580 = vld [vmem:[%s3 + $0x340] sm:$0xff]
    %v1581 = vld [vmem:[%s3 + $0x348] sm:$0xff]
    %v1582 = vld [vmem:[%s3 + $0x350] sm:$0xff]
    %v1583 = vld [vmem:[%s3 + $0x358] sm:$0xff]
    %v1584 = vld [vmem:[%s3 + $0x360] sm:$0xff]
    %v1585 = vld [vmem:[%s3 + $0x368] sm:$0xff]
    %v1586 = vld [vmem:[%s3 + $0x370] sm:$0xff]
    %v1587 = vld [vmem:[%s3 + $0x378] sm:$0xff]
    %v1588 = vld [vmem:[%s3 + $0x380] sm:$0xff]
    %v1589 = vld [vmem:[%s3 + $0x388] sm:$0xff]
    %v1590 = vld [vmem:[%s3 + $0x390] sm:$0xff]
    %v1591 = vld [vmem:[%s3 + $0x398] sm:$0xff]
    %v1592 = vld [vmem:[%s3 + $0x3a0] sm:$0xff]
    %v1593 = vld [vmem:[%s3 + $0x3a8] sm:$0xff]
    %v1594 = vld [vmem:[%s3 + $0x3b0] sm:$0xff]
    %v1595 = vld [vmem:[%s3 + $0x3b8] sm:$0xff]
    %v1596 = vld [vmem:[%s3 + $0x3c0] sm:$0xff]
    %v1597 = vld [vmem:[%s3 + $0x3c8] sm:$0xff]
    %v1598 = vld [vmem:[%s3 + $0x3d0] sm:$0xff]
    %v1599 = vld [vmem:[%s3 + $0x3d8] sm:$0xff]
    %v1600 = vld [vmem:[%s3 + $0x3e0] sm:$0xff]
    %v1601 = vld [vmem:[%s3 + $0x3e8] sm:$0xff]
    %v1602 = vld [vmem:[%s3 + $0x3f0] sm:$0xff]
    %v1603 = vld [vmem:[%s3 + $0x3f8] sm:$0xff]
    %v1604 = vld [vmem:[%s4] sm:$0xf]
    %v1606 = vlaneseq
    %v1607 = vshrl.u32 %v1606, 7
    %v1608 = vsub.s32 0, %v1607
    %v1609 = vrot.slane %v1604, %v1608
    %v1610 = vlaneseq
    %v1611 = vshrl.u32 %v1610, 7
    %v1612 = vsub.s32 1, %v1611
    %v1613 = vrot.slane %v1604, %v1612
    %v1614 = vlaneseq
    %v1615 = vshrl.u32 %v1614, 7
    %v1616 = vsub.s32 2, %v1615
    %v1617 = vrot.slane %v1604, %v1616
    %v1618 = vlaneseq
    %v1619 = vshrl.u32 %v1618, 7
    %v1620 = vsub.s32 3, %v1619
    %v1621 = vrot.slane %v1604, %v1620
    %v1754 = vunpack.c.l.b16 %v1476
    %v1755 = vunpack.c.h.b16 %v1476
    %v1756 = vunpack.c.l.b16 %v1477
    %v1757 = vunpack.c.h.b16 %v1477
    %v1758 = vunpack.c.l.b16 %v1478
    %v1759 = vunpack.c.h.b16 %v1478
    %v1760 = vunpack.c.l.b16 %v1479
    %v1761 = vunpack.c.h.b16 %v1479
    %v1762 = vunpack.c.l.b16 %v1480
    %v1763 = vunpack.c.h.b16 %v1480
    %v1764 = vunpack.c.l.b16 %v1481
    %v1765 = vunpack.c.h.b16 %v1481
    %v1766 = vunpack.c.l.b16 %v1482
    %v1767 = vunpack.c.h.b16 %v1482
    %v1768 = vunpack.c.l.b16 %v1483
    %v1769 = vunpack.c.h.b16 %v1483
    %v1770 = vunpack.c.l.b16 %v1484
    %v1771 = vunpack.c.h.b16 %v1484
    %v1772 = vunpack.c.l.b16 %v1485
    %v1773 = vunpack.c.h.b16 %v1485
    %v1774 = vunpack.c.l.b16 %v1486
    %v1775 = vunpack.c.h.b16 %v1486
    %v1776 = vunpack.c.l.b16 %v1487
    %v1777 = vunpack.c.h.b16 %v1487
    %v1778 = vunpack.c.l.b16 %v1488
    %v1779 = vunpack.c.h.b16 %v1488
    %v1780 = vunpack.c.l.b16 %v1489
    %v1781 = vunpack.c.h.b16 %v1489
    %v1782 = vunpack.c.l.b16 %v1490
    %v1783 = vunpack.c.h.b16 %v1490
    %v1784 = vunpack.c.l.b16 %v1491
    %v1785 = vunpack.c.h.b16 %v1491
    %v1786 = vunpack.c.l.b16 %v1492
    %v1787 = vunpack.c.h.b16 %v1492
    %v1788 = vunpack.c.l.b16 %v1493
    %v1789 = vunpack.c.h.b16 %v1493
    %v1790 = vunpack.c.l.b16 %v1494
    %v1791 = vunpack.c.h.b16 %v1494
    %v1792 = vunpack.c.l.b16 %v1495
    %v1793 = vunpack.c.h.b16 %v1495
    %v1794 = vunpack.c.l.b16 %v1496
    %v1795 = vunpack.c.h.b16 %v1496
    %v1796 = vunpack.c.l.b16 %v1497
    %v1797 = vunpack.c.h.b16 %v1497
    %v1798 = vunpack.c.l.b16 %v1498
    %v1799 = vunpack.c.h.b16 %v1498
    %v1800 = vunpack.c.l.b16 %v1499
    %v1801 = vunpack.c.h.b16 %v1499
    %v1802 = vunpack.c.l.b16 %v1500
    %v1803 = vunpack.c.h.b16 %v1500
    %v1804 = vunpack.c.l.b16 %v1501
    %v1805 = vunpack.c.h.b16 %v1501
    %v1806 = vunpack.c.l.b16 %v1502
    %v1807 = vunpack.c.h.b16 %v1502
    %v1808 = vunpack.c.l.b16 %v1503
    %v1809 = vunpack.c.h.b16 %v1503
    %v1810 = vunpack.c.l.b16 %v1504
    %v1811 = vunpack.c.h.b16 %v1504
    %v1812 = vunpack.c.l.b16 %v1505
    %v1813 = vunpack.c.h.b16 %v1505
    %v1814 = vunpack.c.l.b16 %v1506
    %v1815 = vunpack.c.h.b16 %v1506
    %v1816 = vunpack.c.l.b16 %v1507
    %v1817 = vunpack.c.h.b16 %v1507
    %v1818 = vunpack.c.l.b16 %v1508
    %v1819 = vunpack.c.h.b16 %v1508
    %v1820 = vunpack.c.l.b16 %v1509
    %v1821 = vunpack.c.h.b16 %v1509
    %v1822 = vunpack.c.l.b16 %v1510
    %v1823 = vunpack.c.h.b16 %v1510
    %v1824 = vunpack.c.l.b16 %v1511
    %v1825 = vunpack.c.h.b16 %v1511
    %v1826 = vunpack.c.l.b16 %v1512
    %v1827 = vunpack.c.h.b16 %v1512
    %v1828 = vunpack.c.l.b16 %v1513
    %v1829 = vunpack.c.h.b16 %v1513
    %v1830 = vunpack.c.l.b16 %v1514
    %v1831 = vunpack.c.h.b16 %v1514
    %v1832 = vunpack.c.l.b16 %v1515
    %v1833 = vunpack.c.h.b16 %v1515
    %v1834 = vunpack.c.l.b16 %v1516
    %v1835 = vunpack.c.h.b16 %v1516
    %v1836 = vunpack.c.l.b16 %v1517
    %v1837 = vunpack.c.h.b16 %v1517
    %v1838 = vunpack.c.l.b16 %v1518
    %v1839 = vunpack.c.h.b16 %v1518
    %v1840 = vunpack.c.l.b16 %v1519
    %v1841 = vunpack.c.h.b16 %v1519
    %v1842 = vunpack.c.l.b16 %v1520
    %v1843 = vunpack.c.h.b16 %v1520
    %v1844 = vunpack.c.l.b16 %v1521
    %v1845 = vunpack.c.h.b16 %v1521
    %v1846 = vunpack.c.l.b16 %v1522
    %v1847 = vunpack.c.h.b16 %v1522
    %v1848 = vunpack.c.l.b16 %v1523
    %v1849 = vunpack.c.h.b16 %v1523
    %v1850 = vunpack.c.l.b16 %v1524
    %v1851 = vunpack.c.h.b16 %v1524
    %v1852 = vunpack.c.l.b16 %v1525
    %v1853 = vunpack.c.h.b16 %v1525
    %v1854 = vunpack.c.l.b16 %v1526
    %v1855 = vunpack.c.h.b16 %v1526
    %v1856 = vunpack.c.l.b16 %v1527
    %v1857 = vunpack.c.h.b16 %v1527
    %v1858 = vunpack.c.l.b16 %v1528
    %v1859 = vunpack.c.h.b16 %v1528
    %v1860 = vunpack.c.l.b16 %v1529
    %v1861 = vunpack.c.h.b16 %v1529
    %v1862 = vunpack.c.l.b16 %v1530
    %v1863 = vunpack.c.h.b16 %v1530
    %v1864 = vunpack.c.l.b16 %v1531
    %v1865 = vunpack.c.h.b16 %v1531
    %v1866 = vunpack.c.l.b16 %v1532
    %v1867 = vunpack.c.h.b16 %v1532
    %v1868 = vunpack.c.l.b16 %v1533
    %v1869 = vunpack.c.h.b16 %v1533
    %v1870 = vunpack.c.l.b16 %v1534
    %v1871 = vunpack.c.h.b16 %v1534
    %v1872 = vunpack.c.l.b16 %v1535
    %v1873 = vunpack.c.h.b16 %v1535
    %v1874 = vunpack.c.l.b16 %v1536
    %v1875 = vunpack.c.h.b16 %v1536
    %v1876 = vunpack.c.l.b16 %v1537
    %v1877 = vunpack.c.h.b16 %v1537
    %v1878 = vunpack.c.l.b16 %v1538
    %v1879 = vunpack.c.h.b16 %v1538
    %v1880 = vunpack.c.l.b16 %v1539
    %v1881 = vunpack.c.h.b16 %v1539
    %v1882 = vunpack.c.l.b16 %v1540
    %v1883 = vunpack.c.h.b16 %v1540
    %v1884 = vunpack.c.l.b16 %v1541
    %v1885 = vunpack.c.h.b16 %v1541
    %v1886 = vunpack.c.l.b16 %v1542
    %v1887 = vunpack.c.h.b16 %v1542
    %v1888 = vunpack.c.l.b16 %v1543
    %v1889 = vunpack.c.h.b16 %v1543
    %v1890 = vunpack.c.l.b16 %v1544
    %v1891 = vunpack.c.h.b16 %v1544
    %v1892 = vunpack.c.l.b16 %v1545
    %v1893 = vunpack.c.h.b16 %v1545
    %v1894 = vunpack.c.l.b16 %v1546
    %v1895 = vunpack.c.h.b16 %v1546
    %v1896 = vunpack.c.l.b16 %v1547
    %v1897 = vunpack.c.h.b16 %v1547
    %v1898 = vunpack.c.l.b16 %v1548
    %v1899 = vunpack.c.h.b16 %v1548
    %v1900 = vunpack.c.l.b16 %v1549
    %v1901 = vunpack.c.h.b16 %v1549
    %v1902 = vunpack.c.l.b16 %v1550
    %v1903 = vunpack.c.h.b16 %v1550
    %v1904 = vunpack.c.l.b16 %v1551
    %v1905 = vunpack.c.h.b16 %v1551
    %v1906 = vunpack.c.l.b16 %v1552
    %v1907 = vunpack.c.h.b16 %v1552
    %v1908 = vunpack.c.l.b16 %v1553
    %v1909 = vunpack.c.h.b16 %v1553
    %v1910 = vunpack.c.l.b16 %v1554
    %v1911 = vunpack.c.h.b16 %v1554
    %v1912 = vunpack.c.l.b16 %v1555
    %v1913 = vunpack.c.h.b16 %v1555
    %v1914 = vunpack.c.l.b16 %v1556
    %v1915 = vunpack.c.h.b16 %v1556
    %v1916 = vunpack.c.l.b16 %v1557
    %v1917 = vunpack.c.h.b16 %v1557
    %v1918 = vunpack.c.l.b16 %v1558
    %v1919 = vunpack.c.h.b16 %v1558
    %v1920 = vunpack.c.l.b16 %v1559
    %v1921 = vunpack.c.h.b16 %v1559
    %v1922 = vunpack.c.l.b16 %v1560
    %v1923 = vunpack.c.h.b16 %v1560
    %v1924 = vunpack.c.l.b16 %v1561
    %v1925 = vunpack.c.h.b16 %v1561
    %v1926 = vunpack.c.l.b16 %v1562
    %v1927 = vunpack.c.h.b16 %v1562
    %v1928 = vunpack.c.l.b16 %v1563
    %v1929 = vunpack.c.h.b16 %v1563
    %v1930 = vunpack.c.l.b16 %v1564
    %v1931 = vunpack.c.h.b16 %v1564
    %v1932 = vunpack.c.l.b16 %v1565
    %v1933 = vunpack.c.h.b16 %v1565
    %v1934 = vunpack.c.l.b16 %v1566
    %v1935 = vunpack.c.h.b16 %v1566
    %v1936 = vunpack.c.l.b16 %v1567
    %v1937 = vunpack.c.h.b16 %v1567
    %v1938 = vunpack.c.l.b16 %v1568
    %v1939 = vunpack.c.h.b16 %v1568
    %v1940 = vunpack.c.l.b16 %v1569
    %v1941 = vunpack.c.h.b16 %v1569
    %v1942 = vunpack.c.l.b16 %v1570
    %v1943 = vunpack.c.h.b16 %v1570
    %v1944 = vunpack.c.l.b16 %v1571
    %v1945 = vunpack.c.h.b16 %v1571
    %v1946 = vunpack.c.l.b16 %v1572
    %v1947 = vunpack.c.h.b16 %v1572
    %v1948 = vunpack.c.l.b16 %v1573
    %v1949 = vunpack.c.h.b16 %v1573
    %v1950 = vunpack.c.l.b16 %v1574
    %v1951 = vunpack.c.h.b16 %v1574
    %v1952 = vunpack.c.l.b16 %v1575
    %v1953 = vunpack.c.h.b16 %v1575
    %v1954 = vunpack.c.l.b16 %v1576
    %v1955 = vunpack.c.h.b16 %v1576
    %v1956 = vunpack.c.l.b16 %v1577
    %v1957 = vunpack.c.h.b16 %v1577
    %v1958 = vunpack.c.l.b16 %v1578
    %v1959 = vunpack.c.h.b16 %v1578
    %v1960 = vunpack.c.l.b16 %v1579
    %v1961 = vunpack.c.h.b16 %v1579
    %v1962 = vunpack.c.l.b16 %v1580
    %v1963 = vunpack.c.h.b16 %v1580
    %v1964 = vunpack.c.l.b16 %v1581
    %v1965 = vunpack.c.h.b16 %v1581
    %v1966 = vunpack.c.l.b16 %v1582
    %v1967 = vunpack.c.h.b16 %v1582
    %v1968 = vunpack.c.l.b16 %v1583
    %v1969 = vunpack.c.h.b16 %v1583
    %v1970 = vunpack.c.l.b16 %v1584
    %v1971 = vunpack.c.h.b16 %v1584
    %v1972 = vunpack.c.l.b16 %v1585
    %v1973 = vunpack.c.h.b16 %v1585
    %v1974 = vunpack.c.l.b16 %v1586
    %v1975 = vunpack.c.h.b16 %v1586
    %v1976 = vunpack.c.l.b16 %v1587
    %v1977 = vunpack.c.h.b16 %v1587
    %v1978 = vunpack.c.l.b16 %v1588
    %v1979 = vunpack.c.h.b16 %v1588
    %v1980 = vunpack.c.l.b16 %v1589
    %v1981 = vunpack.c.h.b16 %v1589
    %v1982 = vunpack.c.l.b16 %v1590
    %v1983 = vunpack.c.h.b16 %v1590
    %v1984 = vunpack.c.l.b16 %v1591
    %v1985 = vunpack.c.h.b16 %v1591
    %v1986 = vunpack.c.l.b16 %v1592
    %v1987 = vunpack.c.h.b16 %v1592
    %v1988 = vunpack.c.l.b16 %v1593
    %v1989 = vunpack.c.h.b16 %v1593
    %v1990 = vunpack.c.l.b16 %v1594
    %v1991 = vunpack.c.h.b16 %v1594
    %v1992 = vunpack.c.l.b16 %v1595
    %v1993 = vunpack.c.h.b16 %v1595
    %v1994 = vunpack.c.l.b16 %v1596
    %v1995 = vunpack.c.h.b16 %v1596
    %v1996 = vunpack.c.l.b16 %v1597
    %v1997 = vunpack.c.h.b16 %v1597
    %v1998 = vunpack.c.l.b16 %v1598
    %v1999 = vunpack.c.h.b16 %v1598
    %v2000 = vunpack.c.l.b16 %v1599
    %v2001 = vunpack.c.h.b16 %v1599
    %v2002 = vunpack.c.l.b16 %v1600
    %v2003 = vunpack.c.h.b16 %v1600
    %v2004 = vunpack.c.l.b16 %v1601
    %v2005 = vunpack.c.h.b16 %v1601
    %v2006 = vunpack.c.l.b16 %v1602
    %v2007 = vunpack.c.h.b16 %v1602
    %v2008 = vunpack.c.l.b16 %v1603
    %v2009 = vunpack.c.h.b16 %v1603
    %v2010 = vpack.c.b16 %v1758, %v1754
    %v2011 = vpack.c.b16 %v1759, %v1755
    %v2012 = vpack.c.b16 %v1760, %v1756
    %v2013 = vpack.c.b16 %v1761, %v1757
    %v2014 = vpack.c.b16 %v1766, %v1762
    %v2015 = vpack.c.b16 %v1767, %v1763
    %v2016 = vpack.c.b16 %v1768, %v1764
    %v2017 = vpack.c.b16 %v1769, %v1765
    %v2018 = vpack.c.b16 %v1774, %v1770
    %v2019 = vpack.c.b16 %v1775, %v1771
    %v2020 = vpack.c.b16 %v1776, %v1772
    %v2021 = vpack.c.b16 %v1777, %v1773
    %v2022 = vpack.c.b16 %v1782, %v1778
    %v2023 = vpack.c.b16 %v1783, %v1779
    %v2024 = vpack.c.b16 %v1784, %v1780
    %v2025 = vpack.c.b16 %v1785, %v1781
    %v2026 = vpack.c.b16 %v1790, %v1786
    %v2027 = vpack.c.b16 %v1791, %v1787
    %v2028 = vpack.c.b16 %v1792, %v1788
    %v2029 = vpack.c.b16 %v1793, %v1789
    %v2030 = vpack.c.b16 %v1798, %v1794
    %v2031 = vpack.c.b16 %v1799, %v1795
    %v2032 = vpack.c.b16 %v1800, %v1796
    %v2033 = vpack.c.b16 %v1801, %v1797
    %v2034 = vpack.c.b16 %v1806, %v1802
    %v2035 = vpack.c.b16 %v1807, %v1803
    %v2036 = vpack.c.b16 %v1808, %v1804
    %v2037 = vpack.c.b16 %v1809, %v1805
    %v2038 = vpack.c.b16 %v1814, %v1810
    %v2039 = vpack.c.b16 %v1815, %v1811
    %v2040 = vpack.c.b16 %v1816, %v1812
    %v2041 = vpack.c.b16 %v1817, %v1813
    %v2042 = vpack.c.b16 %v1822, %v1818
    %v2043 = vpack.c.b16 %v1823, %v1819
    %v2044 = vpack.c.b16 %v1824, %v1820
    %v2045 = vpack.c.b16 %v1825, %v1821
    %v2046 = vpack.c.b16 %v1830, %v1826
    %v2047 = vpack.c.b16 %v1831, %v1827
    %v2048 = vpack.c.b16 %v1832, %v1828
    %v2049 = vpack.c.b16 %v1833, %v1829
    %v2050 = vpack.c.b16 %v1838, %v1834
    %v2051 = vpack.c.b16 %v1839, %v1835
    %v2052 = vpack.c.b16 %v1840, %v1836
    %v2053 = vpack.c.b16 %v1841, %v1837
    %v2054 = vpack.c.b16 %v1846, %v1842
    %v2055 = vpack.c.b16 %v1847, %v1843
    %v2056 = vpack.c.b16 %v1848, %v1844
    %v2057 = vpack.c.b16 %v1849, %v1845
    %v2058 = vpack.c.b16 %v1854, %v1850
    %v2059 = vpack.c.b16 %v1855, %v1851
    %v2060 = vpack.c.b16 %v1856, %v1852
    %v2061 = vpack.c.b16 %v1857, %v1853
    %v2062 = vpack.c.b16 %v1862, %v1858
    %v2063 = vpack.c.b16 %v1863, %v1859
    %v2064 = vpack.c.b16 %v1864, %v1860
    %v2065 = vpack.c.b16 %v1865, %v1861
    %v2066 = vpack.c.b16 %v1870, %v1866
    %v2067 = vpack.c.b16 %v1871, %v1867
    %v2068 = vpack.c.b16 %v1872, %v1868
    %v2069 = vpack.c.b16 %v1873, %v1869
    %v2070 = vpack.c.b16 %v1878, %v1874
    %v2071 = vpack.c.b16 %v1879, %v1875
    %v2072 = vpack.c.b16 %v1880, %v1876
    %v2073 = vpack.c.b16 %v1881, %v1877
    %v2074 = vpack.c.b16 %v1886, %v1882
    %v2075 = vpack.c.b16 %v1887, %v1883
    %v2076 = vpack.c.b16 %v1888, %v1884
    %v2077 = vpack.c.b16 %v1889, %v1885
    %v2078 = vpack.c.b16 %v1894, %v1890
    %v2079 = vpack.c.b16 %v1895, %v1891
    %v2080 = vpack.c.b16 %v1896, %v1892
    %v2081 = vpack.c.b16 %v1897, %v1893
    %v2082 = vpack.c.b16 %v1902, %v1898
    %v2083 = vpack.c.b16 %v1903, %v1899
    %v2084 = vpack.c.b16 %v1904, %v1900
    %v2085 = vpack.c.b16 %v1905, %v1901
    %v2086 = vpack.c.b16 %v1910, %v1906
    %v2087 = vpack.c.b16 %v1911, %v1907
    %v2088 = vpack.c.b16 %v1912, %v1908
    %v2089 = vpack.c.b16 %v1913, %v1909
    %v2090 = vpack.c.b16 %v1918, %v1914
    %v2091 = vpack.c.b16 %v1919, %v1915
    %v2092 = vpack.c.b16 %v1920, %v1916
    %v2093 = vpack.c.b16 %v1921, %v1917
    %v2094 = vpack.c.b16 %v1926, %v1922
    %v2095 = vpack.c.b16 %v1927, %v1923
    %v2096 = vpack.c.b16 %v1928, %v1924
    %v2097 = vpack.c.b16 %v1929, %v1925
    %v2098 = vpack.c.b16 %v1934, %v1930
    %v2099 = vpack.c.b16 %v1935, %v1931
    %v2100 = vpack.c.b16 %v1936, %v1932
    %v2101 = vpack.c.b16 %v1937, %v1933
    %v2102 = vpack.c.b16 %v1942, %v1938
    %v2103 = vpack.c.b16 %v1943, %v1939
    %v2104 = vpack.c.b16 %v1944, %v1940
    %v2105 = vpack.c.b16 %v1945, %v1941
    %v2106 = vpack.c.b16 %v1950, %v1946
    %v2107 = vpack.c.b16 %v1951, %v1947
    %v2108 = vpack.c.b16 %v1952, %v1948
    %v2109 = vpack.c.b16 %v1953, %v1949
    %v2110 = vpack.c.b16 %v1958, %v1954
    %v2111 = vpack.c.b16 %v1959, %v1955
    %v2112 = vpack.c.b16 %v1960, %v1956
    %v2113 = vpack.c.b16 %v1961, %v1957
    %v2114 = vpack.c.b16 %v1966, %v1962
    %v2115 = vpack.c.b16 %v1967, %v1963
    %v2116 = vpack.c.b16 %v1968, %v1964
    %v2117 = vpack.c.b16 %v1969, %v1965
    %v2118 = vpack.c.b16 %v1974, %v1970
    %v2119 = vpack.c.b16 %v1975, %v1971
    %v2120 = vpack.c.b16 %v1976, %v1972
    %v2121 = vpack.c.b16 %v1977, %v1973
    %v2122 = vpack.c.b16 %v1982, %v1978
    %v2123 = vpack.c.b16 %v1983, %v1979
    %v2124 = vpack.c.b16 %v1984, %v1980
    %v2125 = vpack.c.b16 %v1985, %v1981
    %v2126 = vpack.c.b16 %v1990, %v1986
    %v2127 = vpack.c.b16 %v1991, %v1987
    %v2128 = vpack.c.b16 %v1992, %v1988
    %v2129 = vpack.c.b16 %v1993, %v1989
    %v2130 = vpack.c.b16 %v1998, %v1994
    %v2131 = vpack.c.b16 %v1999, %v1995
    %v2132 = vpack.c.b16 %v2000, %v1996
    %v2133 = vpack.c.b16 %v2001, %v1997
    %v2134 = vpack.c.b16 %v2006, %v2002
    %v2135 = vpack.c.b16 %v2007, %v2003
    %v2136 = vpack.c.b16 %v2008, %v2004
    %v2137 = vpack.c.b16 %v2009, %v2005
    %2266 = vmatprep.subr.bf16.mxu0 %v2039
    %2267 = vmatpush1.bf16.msra.mxu0 %v2038
    %2268 = vmatprep.subr.bf16.mxu0 %v2035
    %2269 = vmatpush1.bf16.msra.mxu0 %v2034
    %2270 = vmatprep.subr.bf16.mxu0 %v2031
    %2271 = vmatpush1.bf16.msra.mxu0 %v2030
    %2272 = vmatprep.subr.bf16.mxu0 %v2027
    %2273 = vmatpush1.bf16.msra.mxu0 %v2026
    %2274 = vmatprep.subr.bf16.mxu0 %v2023
    %2275 = vmatpush1.bf16.msra.mxu0 %v2022
    %2276 = vmatprep.subr.bf16.mxu0 %v2019
    %2277 = vmatpush1.bf16.msra.mxu0 %v2018
    %2278 = vmatprep.subr.bf16.mxu0 %v2015
    %2279 = vmatpush1.bf16.msra.mxu0 %v2014
    %2280 = vmatprep.subr.bf16.mxu0 %v2011
    %2281 = vmatpush1.bf16.msra.mxu0 %v2010
    %2282 = vmatprep.subr.bf16.mxu0 %v2071
    %2283 = vmatpush2.bf16.msra.mxu0 %v2070
    %2284 = vmatprep.subr.bf16.mxu0 %v2067
    %2285 = vmatpush2.bf16.msra.mxu0 %v2066
    %2286 = vmatprep.subr.bf16.mxu0 %v2063
    %2287 = vmatpush2.bf16.msra.mxu0 %v2062
    %2288 = vmatprep.subr.bf16.mxu0 %v2059
    %2289 = vmatpush2.bf16.msra.mxu0 %v2058
    %2290 = vmatprep.subr.bf16.mxu0 %v2055
    %2291 = vmatpush2.bf16.msra.mxu0 %v2054
    %2292 = vmatprep.subr.bf16.mxu0 %v2051
    %2293 = vmatpush2.bf16.msra.mxu0 %v2050
    %2294 = vmatprep.subr.bf16.mxu0 %v2047
    %2295 = vmatpush2.bf16.msra.mxu0 %v2046
    %2296 = vmatprep.subr.bf16.mxu0 %v2043
    %2297 = vmatpush2.bf16.msra.mxu0 %v2042
    %2298 = vmatprep.mubr.bf16.mxu0 %v1449
    %2299 = vmatmul.mubr.bf16.gmra.mxu0 %v1448
    %v2300 = vpop.f32.mrf.mxu0
    %v2301 = vadd.f32 %v1609, %v2300
    %v2302 = vpop.f32.mrf.mxu0
    %v2303 = vadd.f32 %v1613, %v2302
    %v2304 = vpop.f32.mrf.mxu0
    %v2305 = vadd.f32 %v1609, %v2304
    %v2306 = vpop.f32.mrf.mxu0
    %v2307 = vadd.f32 %v1613, %v2306
    %2308 = vmatprep.mubr.bf16.mxu0 %v1453
    %2309 = vmatmul.mubr.bf16.gmra.mxu0 %v1452
    %v2310 = vpop.f32.mrf.mxu0
    %v2311 = vadd.f32 %v1609, %v2310
    %v2312 = vpop.f32.mrf.mxu0
    %v2313 = vadd.f32 %v1613, %v2312
    %v2314 = vpop.f32.mrf.mxu0
    %v2315 = vadd.f32 %v1609, %v2314
    %v2316 = vpop.f32.mrf.mxu0
    %v2317 = vadd.f32 %v1613, %v2316
    %2318 = vmatprep.mubr.bf16.mxu0 %v1457
    %2319 = vmatmul.mubr.bf16.gmra.mxu0 %v1456
    %v2320 = vpop.f32.mrf.mxu0
    %v2321 = vadd.f32 %v1609, %v2320
    %v2322 = vpop.f32.mrf.mxu0
    %v2323 = vadd.f32 %v1613, %v2322
    %v2324 = vpop.f32.mrf.mxu0
    %v2325 = vadd.f32 %v1609, %v2324
    %v2326 = vpop.f32.mrf.mxu0
    %v2327 = vadd.f32 %v1613, %v2326
    %2328 = vmatprep.mubr.bf16.mxu0 %v1461
    %2329 = vmatmul.mubr.bf16.gmra.mxu0 %v1460
    %v2330 = vpop.f32.mrf.mxu0
    %v2331 = vadd.f32 %v1609, %v2330
    %v2332 = vpop.f32.mrf.mxu0
    %v2333 = vadd.f32 %v1613, %v2332
    %v2334 = vpop.f32.mrf.mxu0
    %v2335 = vadd.f32 %v1609, %v2334
    %v2336 = vpop.f32.mrf.mxu0
    %v2337 = vadd.f32 %v1613, %v2336
    %2338 = vmatprep.mubr.bf16.mxu0 %v1465
    %2339 = vmatmul.mubr.bf16.gmra.mxu0 %v1464
    %v2340 = vpop.f32.mrf.mxu0
    %v2341 = vadd.f32 %v1609, %v2340
    %v2342 = vpop.f32.mrf.mxu0
    %v2343 = vadd.f32 %v1613, %v2342
    %v2344 = vpop.f32.mrf.mxu0
    %v2345 = vadd.f32 %v1609, %v2344
    %v2346 = vpop.f32.mrf.mxu0
    %v2347 = vadd.f32 %v1613, %v2346
    %2348 = vmatprep.mubr.bf16.mxu0 %v1469
    %2349 = vmatmul.mubr.bf16.gmra.mxu0 %v1468
    %v2350 = vpop.f32.mrf.mxu0
    %v2351 = vadd.f32 %v1609, %v2350
    %v2352 = vpop.f32.mrf.mxu0
    %v2353 = vadd.f32 %v1613, %v2352
    %v2354 = vpop.f32.mrf.mxu0
    %v2355 = vadd.f32 %v1609, %v2354
    %v2356 = vpop.f32.mrf.mxu0
    %v2357 = vadd.f32 %v1613, %v2356
    %2358 = vmatprep.mubr.bf16.mxu0 %v1473
    %2359 = vmatmul.mubr.bf16.gmra.mxu0 %v1472
    %v2360 = vpop.f32.mrf.mxu0
    %v2361 = vadd.f32 %v1609, %v2360
    %v2362 = vpop.f32.mrf.mxu0
    %v2363 = vadd.f32 %v1613, %v2362
    %v2364 = vpop.f32.mrf.mxu0
    %v2365 = vpop.f32.mrf.mxu0
    %2366 = vdwg.mxu0
    %2367 = vmatprep.subr.bf16.mxu0 %v2103
    %2368 = vmatpush1.bf16.msra.mxu0 %v2102
    %2369 = vmatprep.subr.bf16.mxu0 %v2099
    %2370 = vmatpush1.bf16.msra.mxu0 %v2098
    %2371 = vmatprep.subr.bf16.mxu0 %v2095
    %2372 = vmatpush1.bf16.msra.mxu0 %v2094
    %2373 = vmatprep.subr.bf16.mxu0 %v2091
    %2374 = vmatpush1.bf16.msra.mxu0 %v2090
    %2375 = vmatprep.subr.bf16.mxu0 %v2087
    %2376 = vmatpush1.bf16.msra.mxu0 %v2086
    %2377 = vmatprep.subr.bf16.mxu0 %v2083
    %2378 = vmatpush1.bf16.msra.mxu0 %v2082
    %2379 = vmatprep.subr.bf16.mxu0 %v2079
    %2380 = vmatpush1.bf16.msra.mxu0 %v2078
    %2381 = vmatprep.subr.bf16.mxu0 %v2075
    %2382 = vmatpush1.bf16.msra.mxu0 %v2074
    %2383 = vmatprep.subr.bf16.mxu0 %v2135
    %2384 = vmatpush2.bf16.msra.mxu0 %v2134
    %2385 = vmatprep.subr.bf16.mxu0 %v2131
    %2386 = vmatpush2.bf16.msra.mxu0 %v2130
    %2387 = vmatprep.subr.bf16.mxu0 %v2127
    %2388 = vmatpush2.bf16.msra.mxu0 %v2126
    %2389 = vmatprep.subr.bf16.mxu0 %v2123
    %2390 = vmatpush2.bf16.msra.mxu0 %v2122
    %2391 = vmatprep.subr.bf16.mxu0 %v2119
    %2392 = vmatpush2.bf16.msra.mxu0 %v2118
    %2393 = vmatprep.subr.bf16.mxu0 %v2115
    %2394 = vmatpush2.bf16.msra.mxu0 %v2114
    %2395 = vmatprep.subr.bf16.mxu0 %v2111
    %2396 = vmatpush2.bf16.msra.mxu0 %v2110
    %2397 = vmatprep.subr.bf16.mxu0 %v2107
    %2398 = vmatpush2.bf16.msra.mxu0 %v2106
    %2399 = vmatprep.mubr.bf16.mxu0 %v1451
    %2400 = vmatmul.mubr.bf16.gmra.mxu0 %v1450
    %v2401 = vpop.f32.mrf.mxu0
    %v2402 = vadd.f32 %v2301, %v2401
    %v2403 = vpop.f32.mrf.mxu0
    %v2404 = vadd.f32 %v2303, %v2403
    %v2405 = vpop.f32.mrf.mxu0
    %v2406 = vadd.f32 %v2305, %v2405
    %v2407 = vpop.f32.mrf.mxu0
    %v2408 = vadd.f32 %v2307, %v2407
    %2409 = vmatprep.mubr.bf16.mxu0 %v1455
    %2410 = vmatmul.mubr.bf16.gmra.mxu0 %v1454
    %v2411 = vpop.f32.mrf.mxu0
    %v2412 = vadd.f32 %v2311, %v2411
    %v2413 = vpop.f32.mrf.mxu0
    %v2414 = vadd.f32 %v2313, %v2413
    %v2415 = vpop.f32.mrf.mxu0
    %v2416 = vadd.f32 %v2315, %v2415
    %v2417 = vpop.f32.mrf.mxu0
    %v2418 = vadd.f32 %v2317, %v2417
    %2419 = vmatprep.mubr.bf16.mxu0 %v1459
    %2420 = vmatmul.mubr.bf16.gmra.mxu0 %v1458
    %v2421 = vpop.f32.mrf.mxu0
    %v2422 = vadd.f32 %v2321, %v2421
    %v2423 = vpop.f32.mrf.mxu0
    %v2424 = vadd.f32 %v2323, %v2423
    %v2425 = vpop.f32.mrf.mxu0
    %v2426 = vadd.f32 %v2325, %v2425
    %v2427 = vpop.f32.mrf.mxu0
    %v2428 = vadd.f32 %v2327, %v2427
    %2429 = vmatprep.mubr.bf16.mxu0 %v1463
    %2430 = vmatmul.mubr.bf16.gmra.mxu0 %v1462
    %v2431 = vpop.f32.mrf.mxu0
    %v2432 = vadd.f32 %v2331, %v2431
    %v2433 = vpop.f32.mrf.mxu0
    %v2434 = vadd.f32 %v2333, %v2433
    %v2435 = vpop.f32.mrf.mxu0
    %v2436 = vadd.f32 %v2335, %v2435
    %v2437 = vpop.f32.mrf.mxu0
    %v2438 = vadd.f32 %v2337, %v2437
    %2439 = vmatprep.mubr.bf16.mxu0 %v1467
    %2440 = vmatmul.mubr.bf16.gmra.mxu0 %v1466
    %v2441 = vpop.f32.mrf.mxu0
    %v2442 = vadd.f32 %v2341, %v2441
    %v2443 = vpop.f32.mrf.mxu0
    %v2444 = vadd.f32 %v2343, %v2443
    %v2445 = vpop.f32.mrf.mxu0
    %v2446 = vadd.f32 %v2345, %v2445
    %v2447 = vpop.f32.mrf.mxu0
    %v2448 = vadd.f32 %v2347, %v2447
    %2449 = vmatprep.mubr.bf16.mxu0 %v1471
    %2450 = vmatmul.mubr.bf16.gmra.mxu0 %v1470
    %v2451 = vpop.f32.mrf.mxu0
    %v2452 = vadd.f32 %v2351, %v2451
    %v2453 = vpop.f32.mrf.mxu0
    %v2454 = vadd.f32 %v2353, %v2453
    %v2455 = vpop.f32.mrf.mxu0
    %v2456 = vadd.f32 %v2355, %v2455
    %v2457 = vpop.f32.mrf.mxu0
    %v2458 = vadd.f32 %v2357, %v2457
    %2459 = vmatprep.mubr.bf16.mxu0 %v1475
    %2460 = vmatmul.mubr.bf16.gmra.mxu0 %v1474
    %v2461 = vpop.f32.mrf.mxu0
    %v2462 = vadd.f32 %v2361, %v2461
    %v2463 = vpop.f32.mrf.mxu0
    %v2464 = vadd.f32 %v2363, %v2463
    %v2465 = vpop.f32.mrf.mxu0
    %v2466 = vpop.f32.mrf.mxu0
    %2467 = vdwg.mxu0
    %2468 = vmatprep.subr.bf16.mxu0 %v2041
    %2469 = vmatpush1.bf16.msra.mxu0 %v2040
    %2470 = vmatprep.subr.bf16.mxu0 %v2037
    %2471 = vmatpush1.bf16.msra.mxu0 %v2036
    %2472 = vmatprep.subr.bf16.mxu0 %v2033
    %2473 = vmatpush1.bf16.msra.mxu0 %v2032
    %2474 = vmatprep.subr.bf16.mxu0 %v2029
    %2475 = vmatpush1.bf16.msra.mxu0 %v2028
    %2476 = vmatprep.subr.bf16.mxu0 %v2025
    %2477 = vmatpush1.bf16.msra.mxu0 %v2024
    %2478 = vmatprep.subr.bf16.mxu0 %v2021
    %2479 = vmatpush1.bf16.msra.mxu0 %v2020
    %2480 = vmatprep.subr.bf16.mxu0 %v2017
    %2481 = vmatpush1.bf16.msra.mxu0 %v2016
    %2482 = vmatprep.subr.bf16.mxu0 %v2013
    %2483 = vmatpush1.bf16.msra.mxu0 %v2012
    %2484 = vmatprep.subr.bf16.mxu0 %v2073
    %2485 = vmatpush2.bf16.msra.mxu0 %v2072
    %2486 = vmatprep.subr.bf16.mxu0 %v2069
    %2487 = vmatpush2.bf16.msra.mxu0 %v2068
    %2488 = vmatprep.subr.bf16.mxu0 %v2065
    %2489 = vmatpush2.bf16.msra.mxu0 %v2064
    %2490 = vmatprep.subr.bf16.mxu0 %v2061
    %2491 = vmatpush2.bf16.msra.mxu0 %v2060
    %2492 = vmatprep.subr.bf16.mxu0 %v2057
    %2493 = vmatpush2.bf16.msra.mxu0 %v2056
    %2494 = vmatprep.subr.bf16.mxu0 %v2053
    %2495 = vmatpush2.bf16.msra.mxu0 %v2052
    %2496 = vmatprep.subr.bf16.mxu0 %v2049
    %2497 = vmatpush2.bf16.msra.mxu0 %v2048
    %2498 = vmatprep.subr.bf16.mxu0 %v2045
    %2499 = vmatpush2.bf16.msra.mxu0 %v2044
    %2500 = vmatprep.mubr.bf16.mxu0 %v1449
    %2501 = vmatmul.mubr.bf16.gmra.mxu0 %v1448
    %v2502 = vpop.f32.mrf.mxu0
    %v2503 = vadd.f32 %v1617, %v2502
    %v2504 = vpop.f32.mrf.mxu0
    %v2505 = vadd.f32 %v1621, %v2504
    %v2506 = vpop.f32.mrf.mxu0
    %v2507 = vadd.f32 %v1617, %v2506
    %v2508 = vpop.f32.mrf.mxu0
    %v2509 = vadd.f32 %v1621, %v2508
    %2510 = vmatprep.mubr.bf16.mxu0 %v1453
    %2511 = vmatmul.mubr.bf16.gmra.mxu0 %v1452
    %v2512 = vpop.f32.mrf.mxu0
    %v2513 = vadd.f32 %v1617, %v2512
    %v2514 = vpop.f32.mrf.mxu0
    %v2515 = vadd.f32 %v1621, %v2514
    %v2516 = vpop.f32.mrf.mxu0
    %v2517 = vadd.f32 %v1617, %v2516
    %v2518 = vpop.f32.mrf.mxu0
    %v2519 = vadd.f32 %v1621, %v2518
    %2520 = vmatprep.mubr.bf16.mxu0 %v1457
    %2521 = vmatmul.mubr.bf16.gmra.mxu0 %v1456
    %v2522 = vpop.f32.mrf.mxu0
    %v2523 = vadd.f32 %v1617, %v2522
    %v2524 = vpop.f32.mrf.mxu0
    %v2525 = vadd.f32 %v1621, %v2524
    %v2526 = vpop.f32.mrf.mxu0
    %v2527 = vadd.f32 %v1617, %v2526
    %v2528 = vpop.f32.mrf.mxu0
    %v2529 = vadd.f32 %v1621, %v2528
    %2530 = vmatprep.mubr.bf16.mxu0 %v1461
    %2531 = vmatmul.mubr.bf16.gmra.mxu0 %v1460
    %v2532 = vpop.f32.mrf.mxu0
    %v2533 = vadd.f32 %v1617, %v2532
    %v2534 = vpop.f32.mrf.mxu0
    %v2535 = vadd.f32 %v1621, %v2534
    %v2536 = vpop.f32.mrf.mxu0
    %v2537 = vadd.f32 %v1617, %v2536
    %v2538 = vpop.f32.mrf.mxu0
    %v2539 = vadd.f32 %v1621, %v2538
    %2540 = vmatprep.mubr.bf16.mxu0 %v1465
    %2541 = vmatmul.mubr.bf16.gmra.mxu0 %v1464
    %v2542 = vpop.f32.mrf.mxu0
    %v2543 = vadd.f32 %v1617, %v2542
    %v2544 = vpop.f32.mrf.mxu0
    %v2545 = vadd.f32 %v1621, %v2544
    %v2546 = vpop.f32.mrf.mxu0
    %v2547 = vadd.f32 %v1617, %v2546
    %v2548 = vpop.f32.mrf.mxu0
    %v2549 = vadd.f32 %v1621, %v2548
    %2550 = vmatprep.mubr.bf16.mxu0 %v1469
    %2551 = vmatmul.mubr.bf16.gmra.mxu0 %v1468
    %v2552 = vpop.f32.mrf.mxu0
    %v2553 = vadd.f32 %v1617, %v2552
    %v2554 = vpop.f32.mrf.mxu0
    %v2555 = vadd.f32 %v1621, %v2554
    %v2556 = vpop.f32.mrf.mxu0
    %v2557 = vadd.f32 %v1617, %v2556
    %v2558 = vpop.f32.mrf.mxu0
    %v2559 = vadd.f32 %v1621, %v2558
    %2560 = vmatprep.mubr.bf16.mxu0 %v1473
    %2561 = vmatmul.mubr.bf16.gmra.mxu0 %v1472
    %v2562 = vpop.f32.mrf.mxu0
    %v2563 = vadd.f32 %v1617, %v2562
    %v2564 = vpop.f32.mrf.mxu0
    %v2565 = vadd.f32 %v1621, %v2564
    %v2566 = vpop.f32.mrf.mxu0
    %v2567 = vpop.f32.mrf.mxu0
    %2568 = vdwg.mxu0
    %2569 = vmatprep.subr.bf16.mxu0 %v2105
    %2570 = vmatpush1.bf16.msra.mxu0 %v2104
    %2571 = vmatprep.subr.bf16.mxu0 %v2101
    %2572 = vmatpush1.bf16.msra.mxu0 %v2100
    %2573 = vmatprep.subr.bf16.mxu0 %v2097
    %2574 = vmatpush1.bf16.msra.mxu0 %v2096
    %2575 = vmatprep.subr.bf16.mxu0 %v2093
    %2576 = vmatpush1.bf16.msra.mxu0 %v2092
    %2577 = vmatprep.subr.bf16.mxu0 %v2089
    %2578 = vmatpush1.bf16.msra.mxu0 %v2088
    %2579 = vmatprep.subr.bf16.mxu0 %v2085
    %2580 = vmatpush1.bf16.msra.mxu0 %v2084
    %2581 = vmatprep.subr.bf16.mxu0 %v2081
    %2582 = vmatpush1.bf16.msra.mxu0 %v2080
    %2583 = vmatprep.subr.bf16.mxu0 %v2077
    %2584 = vmatpush1.bf16.msra.mxu0 %v2076
    %2585 = vmatprep.subr.bf16.mxu0 %v2137
    %2586 = vmatpush2.bf16.msra.mxu0 %v2136
    %2587 = vmatprep.subr.bf16.mxu0 %v2133
    %2588 = vmatpush2.bf16.msra.mxu0 %v2132
    %2589 = vmatprep.subr.bf16.mxu0 %v2129
    %2590 = vmatpush2.bf16.msra.mxu0 %v2128
    %2591 = vmatprep.subr.bf16.mxu0 %v2125
    %2592 = vmatpush2.bf16.msra.mxu0 %v2124
    %2593 = vmatprep.subr.bf16.mxu0 %v2121
    %2594 = vmatpush2.bf16.msra.mxu0 %v2120
    %2595 = vmatprep.subr.bf16.mxu0 %v2117
    %2596 = vmatpush2.bf16.msra.mxu0 %v2116
    %2597 = vmatprep.subr.bf16.mxu0 %v2113
    %2598 = vmatpush2.bf16.msra.mxu0 %v2112
    %2599 = vmatprep.subr.bf16.mxu0 %v2109
    %2600 = vmatpush2.bf16.msra.mxu0 %v2108
    %2601 = vmatprep.mubr.bf16.mxu0 %v1451
    %2602 = vmatmul.mubr.bf16.gmra.mxu0 %v1450
    %v2603 = vpop.f32.mrf.mxu0
    %v2604 = vadd.f32 %v2503, %v2603
    %v2605 = vpop.f32.mrf.mxu0
    %v2606 = vadd.f32 %v2505, %v2605
    %v2607 = vpop.f32.mrf.mxu0
    %v2608 = vadd.f32 %v2507, %v2607
    %v2609 = vpop.f32.mrf.mxu0
    %v2610 = vadd.f32 %v2509, %v2609
    %2611 = vmatprep.mubr.bf16.mxu0 %v1455
    %2612 = vmatmul.mubr.bf16.gmra.mxu0 %v1454
    %v2613 = vpop.f32.mrf.mxu0
    %v2614 = vadd.f32 %v2513, %v2613
    %v2615 = vpop.f32.mrf.mxu0
    %v2616 = vadd.f32 %v2515, %v2615
    %v2617 = vpop.f32.mrf.mxu0
    %v2618 = vadd.f32 %v2517, %v2617
    %v2619 = vpop.f32.mrf.mxu0
    %v2620 = vadd.f32 %v2519, %v2619
    %2621 = vmatprep.mubr.bf16.mxu0 %v1459
    %2622 = vmatmul.mubr.bf16.gmra.mxu0 %v1458
    %v2623 = vpop.f32.mrf.mxu0
    %v2624 = vadd.f32 %v2523, %v2623
    %v2625 = vpop.f32.mrf.mxu0
    %v2626 = vadd.f32 %v2525, %v2625
    %v2627 = vpop.f32.mrf.mxu0
    %v2628 = vadd.f32 %v2527, %v2627
    %v2629 = vpop.f32.mrf.mxu0
    %v2630 = vadd.f32 %v2529, %v2629
    %2631 = vmatprep.mubr.bf16.mxu0 %v1463
    %2632 = vmatmul.mubr.bf16.gmra.mxu0 %v1462
    %v2633 = vpop.f32.mrf.mxu0
    %v2634 = vadd.f32 %v2533, %v2633
    %v2635 = vpop.f32.mrf.mxu0
    %v2636 = vadd.f32 %v2535, %v2635
    %v2637 = vpop.f32.mrf.mxu0
    %v2638 = vadd.f32 %v2537, %v2637
    %v2639 = vpop.f32.mrf.mxu0
    %v2640 = vadd.f32 %v2539, %v2639
    %2641 = vmatprep.mubr.bf16.mxu0 %v1467
    %2642 = vmatmul.mubr.bf16.gmra.mxu0 %v1466
    %v2643 = vpop.f32.mrf.mxu0
    %v2644 = vadd.f32 %v2543, %v2643
    %v2645 = vpop.f32.mrf.mxu0
    %v2646 = vadd.f32 %v2545, %v2645
    %v2647 = vpop.f32.mrf.mxu0
    %v2648 = vadd.f32 %v2547, %v2647
    %v2649 = vpop.f32.mrf.mxu0
    %v2650 = vadd.f32 %v2549, %v2649
    %2651 = vmatprep.mubr.bf16.mxu0 %v1471
    %2652 = vmatmul.mubr.bf16.gmra.mxu0 %v1470
    %v2653 = vpop.f32.mrf.mxu0
    %v2654 = vadd.f32 %v2553, %v2653
    %v2655 = vpop.f32.mrf.mxu0
    %v2656 = vadd.f32 %v2555, %v2655
    %v2657 = vpop.f32.mrf.mxu0
    %v2658 = vadd.f32 %v2557, %v2657
    %v2659 = vpop.f32.mrf.mxu0
    %v2660 = vadd.f32 %v2559, %v2659
    %2661 = vmatprep.mubr.bf16.mxu0 %v1475
    %2662 = vmatmul.mubr.bf16.gmra.mxu0 %v1474
    %v2663 = vpop.f32.mrf.mxu0
    %v2664 = vadd.f32 %v2563, %v2663
    %v2665 = vpop.f32.mrf.mxu0
    %v2666 = vadd.f32 %v2565, %v2665
    %v2667 = vpop.f32.mrf.mxu0
    %v2668 = vpop.f32.mrf.mxu0
    %2669 = vdwg.mxu0
    %v2670 = vmax.f32 %v2402, 0.0
    %v2671 = vmax.f32 %v2404, 0.0
    %v2672 = vmax.f32 %v2604, 0.0
    %v2673 = vmax.f32 %v2606, 0.0
    %v2674 = vmax.f32 %v2406, 0.0
    %v2675 = vmax.f32 %v2408, 0.0
    %v2676 = vmax.f32 %v2608, 0.0
    %v2677 = vmax.f32 %v2610, 0.0
    %v2678 = vmax.f32 %v2412, 0.0
    %v2679 = vmax.f32 %v2414, 0.0
    %v2680 = vmax.f32 %v2614, 0.0
    %v2681 = vmax.f32 %v2616, 0.0
    %v2682 = vmax.f32 %v2416, 0.0
    %v2683 = vmax.f32 %v2418, 0.0
    %v2684 = vmax.f32 %v2618, 0.0
    %v2685 = vmax.f32 %v2620, 0.0
    %v2686 = vmax.f32 %v2422, 0.0
    %v2687 = vmax.f32 %v2424, 0.0
    %v2688 = vmax.f32 %v2624, 0.0
    %v2689 = vmax.f32 %v2626, 0.0
    %v2690 = vmax.f32 %v2426, 0.0
    %v2691 = vmax.f32 %v2428, 0.0
    %v2692 = vmax.f32 %v2628, 0.0
    %v2693 = vmax.f32 %v2630, 0.0
    %v2694 = vmax.f32 %v2432, 0.0
    %v2695 = vmax.f32 %v2434, 0.0
    %v2696 = vmax.f32 %v2634, 0.0
    %v2697 = vmax.f32 %v2636, 0.0
    %v2698 = vmax.f32 %v2436, 0.0
    %v2699 = vmax.f32 %v2438, 0.0
    %v2700 = vmax.f32 %v2638, 0.0
    %v2701 = vmax.f32 %v2640, 0.0
    %v2702 = vmax.f32 %v2442, 0.0
    %v2703 = vmax.f32 %v2444, 0.0
    %v2704 = vmax.f32 %v2644, 0.0
    %v2705 = vmax.f32 %v2646, 0.0
    %v2706 = vmax.f32 %v2446, 0.0
    %v2707 = vmax.f32 %v2448, 0.0
    %v2708 = vmax.f32 %v2648, 0.0
    %v2709 = vmax.f32 %v2650, 0.0
    %v2710 = vmax.f32 %v2452, 0.0
    %v2711 = vmax.f32 %v2454, 0.0
    %v2712 = vmax.f32 %v2654, 0.0
    %v2713 = vmax.f32 %v2656, 0.0
    %v2714 = vmax.f32 %v2456, 0.0
    %v2715 = vmax.f32 %v2458, 0.0
    %v2716 = vmax.f32 %v2658, 0.0
    %v2717 = vmax.f32 %v2660, 0.0
    %v2718 = vmax.f32 %v2462, 0.0
    %v2719 = vmax.f32 %v2464, 0.0
    %v2720 = vmax.f32 %v2664, 0.0
    %v2721 = vmax.f32 %v2666, 0.0
    %v2722 = vpack.c.bf16 %v2674, %v2670
    %v2723 = vpack.c.bf16 %v2675, %v2671
    %v2724 = vpack.c.bf16 %v2676, %v2672
    %v2725 = vpack.c.bf16 %v2677, %v2673
    %v2726 = vpack.c.bf16 %v2682, %v2678
    %v2727 = vpack.c.bf16 %v2683, %v2679
    %v2728 = vpack.c.bf16 %v2684, %v2680
    %v2729 = vpack.c.bf16 %v2685, %v2681
    %v2730 = vpack.c.bf16 %v2690, %v2686
    %v2731 = vpack.c.bf16 %v2691, %v2687
    %v2732 = vpack.c.bf16 %v2692, %v2688
    %v2733 = vpack.c.bf16 %v2693, %v2689
    %v2734 = vpack.c.bf16 %v2698, %v2694
    %v2735 = vpack.c.bf16 %v2699, %v2695
    %v2736 = vpack.c.bf16 %v2700, %v2696
    %v2737 = vpack.c.bf16 %v2701, %v2697
    %v2738 = vpack.c.bf16 %v2706, %v2702
    %v2739 = vpack.c.bf16 %v2707, %v2703
    %v2740 = vpack.c.bf16 %v2708, %v2704
    %v2741 = vpack.c.bf16 %v2709, %v2705
    %v2742 = vpack.c.bf16 %v2714, %v2710
    %v2743 = vpack.c.bf16 %v2715, %v2711
    %v2744 = vpack.c.bf16 %v2716, %v2712
    %v2745 = vpack.c.bf16 %v2717, %v2713
    %v2746 = vpack.c.bf16 %v2718, %v2718
    %v2747 = vpack.c.bf16 %v2719, %v2719
    %v2748 = vpack.c.bf16 %v2720, %v2720
    %v2749 = vpack.c.bf16 %v2721, %v2721
    %v2750 = vld [vmem:[%s5] sm:$0xff]
    %v2751 = vld [vmem:[%s5 + $0x8] sm:$0xff]
    %v2752 = vld [vmem:[%s5 + $0x10] sm:$0xff]
    %v2753 = vld [vmem:[%s5 + $0x18] sm:$0xff]
    %v2754 = vld [vmem:[%s5 + $0x20] sm:$0xff]
    %v2755 = vld [vmem:[%s5 + $0x28] sm:$0xff]
    %v2756 = vld [vmem:[%s5 + $0x30] sm:$0xff]
    %v2757 = vld [vmem:[%s5 + $0x38] sm:$0xff]
    %v2758 = vld [vmem:[%s5 + $0x40] sm:$0xff]
    %v2759 = vld [vmem:[%s5 + $0x48] sm:$0xff]
    %v2760 = vld [vmem:[%s5 + $0x50] sm:$0xff]
    %v2761 = vld [vmem:[%s5 + $0x58] sm:$0xff]
    %v2762 = vld [vmem:[%s5 + $0x60] sm:$0xff]
    %v2763 = vld [vmem:[%s5 + $0x68] sm:$0xff]
    %v2764 = vld [vmem:[%s5 + $0x70] sm:$0xff]
    %v2765 = vld [vmem:[%s5 + $0x78] sm:$0xff]
    %v2766 = vld [vmem:[%s5 + $0x80] sm:$0xff]
    %v2767 = vld [vmem:[%s5 + $0x88] sm:$0xff]
    %v2768 = vld [vmem:[%s5 + $0x90] sm:$0xff]
    %v2769 = vld [vmem:[%s5 + $0x98] sm:$0xff]
    %v2770 = vld [vmem:[%s5 + $0xa0] sm:$0xff]
    %v2771 = vld [vmem:[%s5 + $0xa8] sm:$0xff]
    %v2772 = vld [vmem:[%s5 + $0xb0] sm:$0xff]
    %v2773 = vld [vmem:[%s5 + $0xb8] sm:$0xff]
    %v2774 = vld [vmem:[%s5 + $0xc0] sm:$0xff]
    %v2775 = vld [vmem:[%s5 + $0xc8] sm:$0xff]
    %v2776 = vld [vmem:[%s5 + $0xd0] sm:$0xff]
    %v2777 = vld [vmem:[%s5 + $0xd8] sm:$0xff]
    %v2778 = vld [vmem:[%s5 + $0xe0] sm:$0xff]
    %v2779 = vld [vmem:[%s5 + $0xe8] sm:$0xff]
    %v2780 = vld [vmem:[%s5 + $0xf0] sm:$0xff]
    %v2781 = vld [vmem:[%s5 + $0xf8] sm:$0xff]
    %v2782 = vld [vmem:[%s5 + $0x100] sm:$0xff]
    %v2783 = vld [vmem:[%s5 + $0x108] sm:$0xff]
    %v2784 = vld [vmem:[%s5 + $0x110] sm:$0xff]
    %v2785 = vld [vmem:[%s5 + $0x118] sm:$0xff]
    %v2786 = vld [vmem:[%s5 + $0x120] sm:$0xff]
    %v2787 = vld [vmem:[%s5 + $0x128] sm:$0xff]
    %v2788 = vld [vmem:[%s5 + $0x130] sm:$0xff]
    %v2789 = vld [vmem:[%s5 + $0x138] sm:$0xff]
    %v2790 = vld [vmem:[%s5 + $0x140] sm:$0xff]
    %v2791 = vld [vmem:[%s5 + $0x148] sm:$0xff]
    %v2792 = vld [vmem:[%s5 + $0x150] sm:$0xff]
    %v2793 = vld [vmem:[%s5 + $0x158] sm:$0xff]
    %v2794 = vld [vmem:[%s5 + $0x160] sm:$0xff]
    %v2795 = vld [vmem:[%s5 + $0x168] sm:$0xff]
    %v2796 = vld [vmem:[%s5 + $0x170] sm:$0xff]
    %v2797 = vld [vmem:[%s5 + $0x178] sm:$0xff]
    %v2798 = vld [vmem:[%s5 + $0x180] sm:$0xff]
    %v2799 = vld [vmem:[%s5 + $0x188] sm:$0xff]
    %v2800 = vld [vmem:[%s5 + $0x190] sm:$0xff]
    %v2801 = vld [vmem:[%s5 + $0x198] sm:$0xff]
    %v2802 = vld [vmem:[%s5 + $0x1a0] sm:$0xff]
    %v2803 = vld [vmem:[%s5 + $0x1a8] sm:$0xff]
    %v2804 = vld [vmem:[%s5 + $0x1b0] sm:$0xff]
    %v2805 = vld [vmem:[%s5 + $0x1b8] sm:$0xff]
    %v2806 = vld [vmem:[%s5 + $0x1c0] sm:$0xff]
    %v2807 = vld [vmem:[%s5 + $0x1c8] sm:$0xff]
    %v2808 = vld [vmem:[%s5 + $0x1d0] sm:$0xff]
    %v2809 = vld [vmem:[%s5 + $0x1d8] sm:$0xff]
    %v2810 = vld [vmem:[%s5 + $0x1e0] sm:$0xff]
    %v2811 = vld [vmem:[%s5 + $0x1e8] sm:$0xff]
    %v2812 = vld [vmem:[%s5 + $0x1f0] sm:$0xff]
    %v2813 = vld [vmem:[%s5 + $0x1f8] sm:$0xff]
    %v2814 = vld [vmem:[%s5 + $0x200] sm:$0xff]
    %v2815 = vld [vmem:[%s5 + $0x208] sm:$0xff]
    %v2816 = vld [vmem:[%s5 + $0x210] sm:$0xff]
    %v2817 = vld [vmem:[%s5 + $0x218] sm:$0xff]
    %v2818 = vld [vmem:[%s5 + $0x220] sm:$0xff]
    %v2819 = vld [vmem:[%s5 + $0x228] sm:$0xff]
    %v2820 = vld [vmem:[%s5 + $0x230] sm:$0xff]
    %v2821 = vld [vmem:[%s5 + $0x238] sm:$0xff]
    %v2822 = vld [vmem:[%s5 + $0x240] sm:$0xff]
    %v2823 = vld [vmem:[%s5 + $0x248] sm:$0xff]
    %v2824 = vld [vmem:[%s5 + $0x250] sm:$0xff]
    %v2825 = vld [vmem:[%s5 + $0x258] sm:$0xff]
    %v2826 = vld [vmem:[%s5 + $0x260] sm:$0xff]
    %v2827 = vld [vmem:[%s5 + $0x268] sm:$0xff]
    %v2828 = vld [vmem:[%s5 + $0x270] sm:$0xff]
    %v2829 = vld [vmem:[%s5 + $0x278] sm:$0xff]
    %v2830 = vld [vmem:[%s5 + $0x280] sm:$0xff]
    %v2831 = vld [vmem:[%s5 + $0x288] sm:$0xff]
    %v2832 = vld [vmem:[%s5 + $0x290] sm:$0xff]
    %v2833 = vld [vmem:[%s5 + $0x298] sm:$0xff]
    %v2834 = vld [vmem:[%s5 + $0x2a0] sm:$0xff]
    %v2835 = vld [vmem:[%s5 + $0x2a8] sm:$0xff]
    %v2836 = vld [vmem:[%s5 + $0x2b0] sm:$0xff]
    %v2837 = vld [vmem:[%s5 + $0x2b8] sm:$0xff]
    %v2838 = vld [vmem:[%s5 + $0x2c0] sm:$0xff]
    %v2839 = vld [vmem:[%s5 + $0x2c8] sm:$0xff]
    %v2840 = vld [vmem:[%s5 + $0x2d0] sm:$0xff]
    %v2841 = vld [vmem:[%s5 + $0x2d8] sm:$0xff]
    %v2842 = vld [vmem:[%s5 + $0x2e0] sm:$0xff]
    %v2843 = vld [vmem:[%s5 + $0x2e8] sm:$0xff]
    %v2844 = vld [vmem:[%s5 + $0x2f0] sm:$0xff]
    %v2845 = vld [vmem:[%s5 + $0x2f8] sm:$0xff]
    %v2846 = vld [vmem:[%s5 + $0x300] sm:$0xff]
    %v2847 = vld [vmem:[%s5 + $0x308] sm:$0xff]
    %v2848 = vld [vmem:[%s5 + $0x310] sm:$0xff]
    %v2849 = vld [vmem:[%s5 + $0x318] sm:$0xff]
    %v2850 = vld [vmem:[%s5 + $0x320] sm:$0xff]
    %v2851 = vld [vmem:[%s5 + $0x328] sm:$0xff]
    %v2852 = vld [vmem:[%s5 + $0x330] sm:$0xff]
    %v2853 = vld [vmem:[%s5 + $0x338] sm:$0xff]
    %v2854 = vld [vmem:[%s5 + $0x340] sm:$0xff]
    %v2855 = vld [vmem:[%s5 + $0x348] sm:$0xff]
    %v2856 = vld [vmem:[%s5 + $0x350] sm:$0xff]
    %v2857 = vld [vmem:[%s5 + $0x358] sm:$0xff]
    %v2858 = vld [vmem:[%s5 + $0x360] sm:$0xff]
    %v2859 = vld [vmem:[%s5 + $0x368] sm:$0xff]
    %v2860 = vld [vmem:[%s5 + $0x370] sm:$0xff]
    %v2861 = vld [vmem:[%s5 + $0x378] sm:$0xff]
    %v2862 = vld [vmem:[%s5 + $0x380] sm:$0xff]
    %v2863 = vld [vmem:[%s5 + $0x388] sm:$0xff]
    %v2864 = vld [vmem:[%s5 + $0x390] sm:$0xff]
    %v2865 = vld [vmem:[%s5 + $0x398] sm:$0xff]
    %v2866 = vld [vmem:[%s5 + $0x3a0] sm:$0xff]
    %v2867 = vld [vmem:[%s5 + $0x3a8] sm:$0xff]
    %v2868 = vld [vmem:[%s5 + $0x3b0] sm:$0xff]
    %v2869 = vld [vmem:[%s5 + $0x3b8] sm:$0xff]
    %v2870 = vld [vmem:[%s5 + $0x3c0] sm:$0xff]
    %v2871 = vld [vmem:[%s5 + $0x3c8] sm:$0xff]
    %v2872 = vld [vmem:[%s5 + $0x3d0] sm:$0xff]
    %v2873 = vld [vmem:[%s5 + $0x3d8] sm:$0xff]
    %v2874 = vld [vmem:[%s5 + $0x3e0] sm:$0xff]
    %v2875 = vld [vmem:[%s5 + $0x3e8] sm:$0xff]
    %v2876 = vld [vmem:[%s5 + $0x3f0] sm:$0xff]
    %v2877 = vld [vmem:[%s5 + $0x3f8] sm:$0xff]
    %v2878 = vld [vmem:[%s6] sm:$0xf]
    %v2880 = vlaneseq
    %v2881 = vshrl.u32 %v2880, 7
    %v2882 = vsub.s32 0, %v2881
    %v2883 = vrot.slane %v2878, %v2882
    %v2884 = vlaneseq
    %v2885 = vshrl.u32 %v2884, 7
    %v2886 = vsub.s32 1, %v2885
    %v2887 = vrot.slane %v2878, %v2886
    %v2888 = vlaneseq
    %v2889 = vshrl.u32 %v2888, 7
    %v2890 = vsub.s32 2, %v2889
    %v2891 = vrot.slane %v2878, %v2890
    %v2892 = vlaneseq
    %v2893 = vshrl.u32 %v2892, 7
    %v2894 = vsub.s32 3, %v2893
    %v2895 = vrot.slane %v2878, %v2894
    %v3028 = vunpack.c.l.b16 %v2750
    %v3029 = vunpack.c.h.b16 %v2750
    %v3030 = vunpack.c.l.b16 %v2751
    %v3031 = vunpack.c.h.b16 %v2751
    %v3032 = vunpack.c.l.b16 %v2752
    %v3033 = vunpack.c.h.b16 %v2752
    %v3034 = vunpack.c.l.b16 %v2753
    %v3035 = vunpack.c.h.b16 %v2753
    %v3036 = vunpack.c.l.b16 %v2754
    %v3037 = vunpack.c.h.b16 %v2754
    %v3038 = vunpack.c.l.b16 %v2755
    %v3039 = vunpack.c.h.b16 %v2755
    %v3040 = vunpack.c.l.b16 %v2756
    %v3041 = vunpack.c.h.b16 %v2756
    %v3042 = vunpack.c.l.b16 %v2757
    %v3043 = vunpack.c.h.b16 %v2757
    %v3044 = vunpack.c.l.b16 %v2758
    %v3045 = vunpack.c.h.b16 %v2758
    %v3046 = vunpack.c.l.b16 %v2759
    %v3047 = vunpack.c.h.b16 %v2759
    %v3048 = vunpack.c.l.b16 %v2760
    %v3049 = vunpack.c.h.b16 %v2760
    %v3050 = vunpack.c.l.b16 %v2761
    %v3051 = vunpack.c.h.b16 %v2761
    %v3052 = vunpack.c.l.b16 %v2762
    %v3053 = vunpack.c.h.b16 %v2762
    %v3054 = vunpack.c.l.b16 %v2763
    %v3055 = vunpack.c.h.b16 %v2763
    %v3056 = vunpack.c.l.b16 %v2764
    %v3057 = vunpack.c.h.b16 %v2764
    %v3058 = vunpack.c.l.b16 %v2765
    %v3059 = vunpack.c.h.b16 %v2765
    %v3060 = vunpack.c.l.b16 %v2766
    %v3061 = vunpack.c.h.b16 %v2766
    %v3062 = vunpack.c.l.b16 %v2767
    %v3063 = vunpack.c.h.b16 %v2767
    %v3064 = vunpack.c.l.b16 %v2768
    %v3065 = vunpack.c.h.b16 %v2768
    %v3066 = vunpack.c.l.b16 %v2769
    %v3067 = vunpack.c.h.b16 %v2769
    %v3068 = vunpack.c.l.b16 %v2770
    %v3069 = vunpack.c.h.b16 %v2770
    %v3070 = vunpack.c.l.b16 %v2771
    %v3071 = vunpack.c.h.b16 %v2771
    %v3072 = vunpack.c.l.b16 %v2772
    %v3073 = vunpack.c.h.b16 %v2772
    %v3074 = vunpack.c.l.b16 %v2773
    %v3075 = vunpack.c.h.b16 %v2773
    %v3076 = vunpack.c.l.b16 %v2774
    %v3077 = vunpack.c.h.b16 %v2774
    %v3078 = vunpack.c.l.b16 %v2775
    %v3079 = vunpack.c.h.b16 %v2775
    %v3080 = vunpack.c.l.b16 %v2776
    %v3081 = vunpack.c.h.b16 %v2776
    %v3082 = vunpack.c.l.b16 %v2777
    %v3083 = vunpack.c.h.b16 %v2777
    %v3084 = vunpack.c.l.b16 %v2778
    %v3085 = vunpack.c.h.b16 %v2778
    %v3086 = vunpack.c.l.b16 %v2779
    %v3087 = vunpack.c.h.b16 %v2779
    %v3088 = vunpack.c.l.b16 %v2780
    %v3089 = vunpack.c.h.b16 %v2780
    %v3090 = vunpack.c.l.b16 %v2781
    %v3091 = vunpack.c.h.b16 %v2781
    %v3092 = vunpack.c.l.b16 %v2782
    %v3093 = vunpack.c.h.b16 %v2782
    %v3094 = vunpack.c.l.b16 %v2783
    %v3095 = vunpack.c.h.b16 %v2783
    %v3096 = vunpack.c.l.b16 %v2784
    %v3097 = vunpack.c.h.b16 %v2784
    %v3098 = vunpack.c.l.b16 %v2785
    %v3099 = vunpack.c.h.b16 %v2785
    %v3100 = vunpack.c.l.b16 %v2786
    %v3101 = vunpack.c.h.b16 %v2786
    %v3102 = vunpack.c.l.b16 %v2787
    %v3103 = vunpack.c.h.b16 %v2787
    %v3104 = vunpack.c.l.b16 %v2788
    %v3105 = vunpack.c.h.b16 %v2788
    %v3106 = vunpack.c.l.b16 %v2789
    %v3107 = vunpack.c.h.b16 %v2789
    %v3108 = vunpack.c.l.b16 %v2790
    %v3109 = vunpack.c.h.b16 %v2790
    %v3110 = vunpack.c.l.b16 %v2791
    %v3111 = vunpack.c.h.b16 %v2791
    %v3112 = vunpack.c.l.b16 %v2792
    %v3113 = vunpack.c.h.b16 %v2792
    %v3114 = vunpack.c.l.b16 %v2793
    %v3115 = vunpack.c.h.b16 %v2793
    %v3116 = vunpack.c.l.b16 %v2794
    %v3117 = vunpack.c.h.b16 %v2794
    %v3118 = vunpack.c.l.b16 %v2795
    %v3119 = vunpack.c.h.b16 %v2795
    %v3120 = vunpack.c.l.b16 %v2796
    %v3121 = vunpack.c.h.b16 %v2796
    %v3122 = vunpack.c.l.b16 %v2797
    %v3123 = vunpack.c.h.b16 %v2797
    %v3124 = vunpack.c.l.b16 %v2798
    %v3125 = vunpack.c.h.b16 %v2798
    %v3126 = vunpack.c.l.b16 %v2799
    %v3127 = vunpack.c.h.b16 %v2799
    %v3128 = vunpack.c.l.b16 %v2800
    %v3129 = vunpack.c.h.b16 %v2800
    %v3130 = vunpack.c.l.b16 %v2801
    %v3131 = vunpack.c.h.b16 %v2801
    %v3132 = vunpack.c.l.b16 %v2802
    %v3133 = vunpack.c.h.b16 %v2802
    %v3134 = vunpack.c.l.b16 %v2803
    %v3135 = vunpack.c.h.b16 %v2803
    %v3136 = vunpack.c.l.b16 %v2804
    %v3137 = vunpack.c.h.b16 %v2804
    %v3138 = vunpack.c.l.b16 %v2805
    %v3139 = vunpack.c.h.b16 %v2805
    %v3140 = vunpack.c.l.b16 %v2806
    %v3141 = vunpack.c.h.b16 %v2806
    %v3142 = vunpack.c.l.b16 %v2807
    %v3143 = vunpack.c.h.b16 %v2807
    %v3144 = vunpack.c.l.b16 %v2808
    %v3145 = vunpack.c.h.b16 %v2808
    %v3146 = vunpack.c.l.b16 %v2809
    %v3147 = vunpack.c.h.b16 %v2809
    %v3148 = vunpack.c.l.b16 %v2810
    %v3149 = vunpack.c.h.b16 %v2810
    %v3150 = vunpack.c.l.b16 %v2811
    %v3151 = vunpack.c.h.b16 %v2811
    %v3152 = vunpack.c.l.b16 %v2812
    %v3153 = vunpack.c.h.b16 %v2812
    %v3154 = vunpack.c.l.b16 %v2813
    %v3155 = vunpack.c.h.b16 %v2813
    %v3156 = vunpack.c.l.b16 %v2814
    %v3157 = vunpack.c.h.b16 %v2814
    %v3158 = vunpack.c.l.b16 %v2815
    %v3159 = vunpack.c.h.b16 %v2815
    %v3160 = vunpack.c.l.b16 %v2816
    %v3161 = vunpack.c.h.b16 %v2816
    %v3162 = vunpack.c.l.b16 %v2817
    %v3163 = vunpack.c.h.b16 %v2817
    %v3164 = vunpack.c.l.b16 %v2818
    %v3165 = vunpack.c.h.b16 %v2818
    %v3166 = vunpack.c.l.b16 %v2819
    %v3167 = vunpack.c.h.b16 %v2819
    %v3168 = vunpack.c.l.b16 %v2820
    %v3169 = vunpack.c.h.b16 %v2820
    %v3170 = vunpack.c.l.b16 %v2821
    %v3171 = vunpack.c.h.b16 %v2821
    %v3172 = vunpack.c.l.b16 %v2822
    %v3173 = vunpack.c.h.b16 %v2822
    %v3174 = vunpack.c.l.b16 %v2823
    %v3175 = vunpack.c.h.b16 %v2823
    %v3176 = vunpack.c.l.b16 %v2824
    %v3177 = vunpack.c.h.b16 %v2824
    %v3178 = vunpack.c.l.b16 %v2825
    %v3179 = vunpack.c.h.b16 %v2825
    %v3180 = vunpack.c.l.b16 %v2826
    %v3181 = vunpack.c.h.b16 %v2826
    %v3182 = vunpack.c.l.b16 %v2827
    %v3183 = vunpack.c.h.b16 %v2827
    %v3184 = vunpack.c.l.b16 %v2828
    %v3185 = vunpack.c.h.b16 %v2828
    %v3186 = vunpack.c.l.b16 %v2829
    %v3187 = vunpack.c.h.b16 %v2829
    %v3188 = vunpack.c.l.b16 %v2830
    %v3189 = vunpack.c.h.b16 %v2830
    %v3190 = vunpack.c.l.b16 %v2831
    %v3191 = vunpack.c.h.b16 %v2831
    %v3192 = vunpack.c.l.b16 %v2832
    %v3193 = vunpack.c.h.b16 %v2832
    %v3194 = vunpack.c.l.b16 %v2833
    %v3195 = vunpack.c.h.b16 %v2833
    %v3196 = vunpack.c.l.b16 %v2834
    %v3197 = vunpack.c.h.b16 %v2834
    %v3198 = vunpack.c.l.b16 %v2835
    %v3199 = vunpack.c.h.b16 %v2835
    %v3200 = vunpack.c.l.b16 %v2836
    %v3201 = vunpack.c.h.b16 %v2836
    %v3202 = vunpack.c.l.b16 %v2837
    %v3203 = vunpack.c.h.b16 %v2837
    %v3204 = vunpack.c.l.b16 %v2838
    %v3205 = vunpack.c.h.b16 %v2838
    %v3206 = vunpack.c.l.b16 %v2839
    %v3207 = vunpack.c.h.b16 %v2839
    %v3208 = vunpack.c.l.b16 %v2840
    %v3209 = vunpack.c.h.b16 %v2840
    %v3210 = vunpack.c.l.b16 %v2841
    %v3211 = vunpack.c.h.b16 %v2841
    %v3212 = vunpack.c.l.b16 %v2842
    %v3213 = vunpack.c.h.b16 %v2842
    %v3214 = vunpack.c.l.b16 %v2843
    %v3215 = vunpack.c.h.b16 %v2843
    %v3216 = vunpack.c.l.b16 %v2844
    %v3217 = vunpack.c.h.b16 %v2844
    %v3218 = vunpack.c.l.b16 %v2845
    %v3219 = vunpack.c.h.b16 %v2845
    %v3220 = vunpack.c.l.b16 %v2846
    %v3221 = vunpack.c.h.b16 %v2846
    %v3222 = vunpack.c.l.b16 %v2847
    %v3223 = vunpack.c.h.b16 %v2847
    %v3224 = vunpack.c.l.b16 %v2848
    %v3225 = vunpack.c.h.b16 %v2848
    %v3226 = vunpack.c.l.b16 %v2849
    %v3227 = vunpack.c.h.b16 %v2849
    %v3228 = vunpack.c.l.b16 %v2850
    %v3229 = vunpack.c.h.b16 %v2850
    %v3230 = vunpack.c.l.b16 %v2851
    %v3231 = vunpack.c.h.b16 %v2851
    %v3232 = vunpack.c.l.b16 %v2852
    %v3233 = vunpack.c.h.b16 %v2852
    %v3234 = vunpack.c.l.b16 %v2853
    %v3235 = vunpack.c.h.b16 %v2853
    %v3236 = vunpack.c.l.b16 %v2854
    %v3237 = vunpack.c.h.b16 %v2854
    %v3238 = vunpack.c.l.b16 %v2855
    %v3239 = vunpack.c.h.b16 %v2855
    %v3240 = vunpack.c.l.b16 %v2856
    %v3241 = vunpack.c.h.b16 %v2856
    %v3242 = vunpack.c.l.b16 %v2857
    %v3243 = vunpack.c.h.b16 %v2857
    %v3244 = vunpack.c.l.b16 %v2858
    %v3245 = vunpack.c.h.b16 %v2858
    %v3246 = vunpack.c.l.b16 %v2859
    %v3247 = vunpack.c.h.b16 %v2859
    %v3248 = vunpack.c.l.b16 %v2860
    %v3249 = vunpack.c.h.b16 %v2860
    %v3250 = vunpack.c.l.b16 %v2861
    %v3251 = vunpack.c.h.b16 %v2861
    %v3252 = vunpack.c.l.b16 %v2862
    %v3253 = vunpack.c.h.b16 %v2862
    %v3254 = vunpack.c.l.b16 %v2863
    %v3255 = vunpack.c.h.b16 %v2863
    %v3256 = vunpack.c.l.b16 %v2864
    %v3257 = vunpack.c.h.b16 %v2864
    %v3258 = vunpack.c.l.b16 %v2865
    %v3259 = vunpack.c.h.b16 %v2865
    %v3260 = vunpack.c.l.b16 %v2866
    %v3261 = vunpack.c.h.b16 %v2866
    %v3262 = vunpack.c.l.b16 %v2867
    %v3263 = vunpack.c.h.b16 %v2867
    %v3264 = vunpack.c.l.b16 %v2868
    %v3265 = vunpack.c.h.b16 %v2868
    %v3266 = vunpack.c.l.b16 %v2869
    %v3267 = vunpack.c.h.b16 %v2869
    %v3268 = vunpack.c.l.b16 %v2870
    %v3269 = vunpack.c.h.b16 %v2870
    %v3270 = vunpack.c.l.b16 %v2871
    %v3271 = vunpack.c.h.b16 %v2871
    %v3272 = vunpack.c.l.b16 %v2872
    %v3273 = vunpack.c.h.b16 %v2872
    %v3274 = vunpack.c.l.b16 %v2873
    %v3275 = vunpack.c.h.b16 %v2873
    %v3276 = vunpack.c.l.b16 %v2874
    %v3277 = vunpack.c.h.b16 %v2874
    %v3278 = vunpack.c.l.b16 %v2875
    %v3279 = vunpack.c.h.b16 %v2875
    %v3280 = vunpack.c.l.b16 %v2876
    %v3281 = vunpack.c.h.b16 %v2876
    %v3282 = vunpack.c.l.b16 %v2877
    %v3283 = vunpack.c.h.b16 %v2877
    %v3284 = vpack.c.b16 %v3032, %v3028
    %v3285 = vpack.c.b16 %v3033, %v3029
    %v3286 = vpack.c.b16 %v3034, %v3030
    %v3287 = vpack.c.b16 %v3035, %v3031
    %v3288 = vpack.c.b16 %v3040, %v3036
    %v3289 = vpack.c.b16 %v3041, %v3037
    %v3290 = vpack.c.b16 %v3042, %v3038
    %v3291 = vpack.c.b16 %v3043, %v3039
    %v3292 = vpack.c.b16 %v3048, %v3044
    %v3293 = vpack.c.b16 %v3049, %v3045
    %v3294 = vpack.c.b16 %v3050, %v3046
    %v3295 = vpack.c.b16 %v3051, %v3047
    %v3296 = vpack.c.b16 %v3056, %v3052
    %v3297 = vpack.c.b16 %v3057, %v3053
    %v3298 = vpack.c.b16 %v3058, %v3054
    %v3299 = vpack.c.b16 %v3059, %v3055
    %v3300 = vpack.c.b16 %v3064, %v3060
    %v3301 = vpack.c.b16 %v3065, %v3061
    %v3302 = vpack.c.b16 %v3066, %v3062
    %v3303 = vpack.c.b16 %v3067, %v3063
    %v3304 = vpack.c.b16 %v3072, %v3068
    %v3305 = vpack.c.b16 %v3073, %v3069
    %v3306 = vpack.c.b16 %v3074, %v3070
    %v3307 = vpack.c.b16 %v3075, %v3071
    %v3308 = vpack.c.b16 %v3080, %v3076
    %v3309 = vpack.c.b16 %v3081, %v3077
    %v3310 = vpack.c.b16 %v3082, %v3078
    %v3311 = vpack.c.b16 %v3083, %v3079
    %v3312 = vpack.c.b16 %v3088, %v3084
    %v3313 = vpack.c.b16 %v3089, %v3085
    %v3314 = vpack.c.b16 %v3090, %v3086
    %v3315 = vpack.c.b16 %v3091, %v3087
    %v3316 = vpack.c.b16 %v3096, %v3092
    %v3317 = vpack.c.b16 %v3097, %v3093
    %v3318 = vpack.c.b16 %v3098, %v3094
    %v3319 = vpack.c.b16 %v3099, %v3095
    %v3320 = vpack.c.b16 %v3104, %v3100
    %v3321 = vpack.c.b16 %v3105, %v3101
    %v3322 = vpack.c.b16 %v3106, %v3102
    %v3323 = vpack.c.b16 %v3107, %v3103
    %v3324 = vpack.c.b16 %v3112, %v3108
    %v3325 = vpack.c.b16 %v3113, %v3109
    %v3326 = vpack.c.b16 %v3114, %v3110
    %v3327 = vpack.c.b16 %v3115, %v3111
    %v3328 = vpack.c.b16 %v3120, %v3116
    %v3329 = vpack.c.b16 %v3121, %v3117
    %v3330 = vpack.c.b16 %v3122, %v3118
    %v3331 = vpack.c.b16 %v3123, %v3119
    %v3332 = vpack.c.b16 %v3128, %v3124
    %v3333 = vpack.c.b16 %v3129, %v3125
    %v3334 = vpack.c.b16 %v3130, %v3126
    %v3335 = vpack.c.b16 %v3131, %v3127
    %v3336 = vpack.c.b16 %v3136, %v3132
    %v3337 = vpack.c.b16 %v3137, %v3133
    %v3338 = vpack.c.b16 %v3138, %v3134
    %v3339 = vpack.c.b16 %v3139, %v3135
    %v3340 = vpack.c.b16 %v3144, %v3140
    %v3341 = vpack.c.b16 %v3145, %v3141
    %v3342 = vpack.c.b16 %v3146, %v3142
    %v3343 = vpack.c.b16 %v3147, %v3143
    %v3344 = vpack.c.b16 %v3152, %v3148
    %v3345 = vpack.c.b16 %v3153, %v3149
    %v3346 = vpack.c.b16 %v3154, %v3150
    %v3347 = vpack.c.b16 %v3155, %v3151
    %v3348 = vpack.c.b16 %v3160, %v3156
    %v3349 = vpack.c.b16 %v3161, %v3157
    %v3350 = vpack.c.b16 %v3162, %v3158
    %v3351 = vpack.c.b16 %v3163, %v3159
    %v3352 = vpack.c.b16 %v3168, %v3164
    %v3353 = vpack.c.b16 %v3169, %v3165
    %v3354 = vpack.c.b16 %v3170, %v3166
    %v3355 = vpack.c.b16 %v3171, %v3167
    %v3356 = vpack.c.b16 %v3176, %v3172
    %v3357 = vpack.c.b16 %v3177, %v3173
    %v3358 = vpack.c.b16 %v3178, %v3174
    %v3359 = vpack.c.b16 %v3179, %v3175
    %v3360 = vpack.c.b16 %v3184, %v3180
    %v3361 = vpack.c.b16 %v3185, %v3181
    %v3362 = vpack.c.b16 %v3186, %v3182
    %v3363 = vpack.c.b16 %v3187, %v3183
    %v3364 = vpack.c.b16 %v3192, %v3188
    %v3365 = vpack.c.b16 %v3193, %v3189
    %v3366 = vpack.c.b16 %v3194, %v3190
    %v3367 = vpack.c.b16 %v3195, %v3191
    %v3368 = vpack.c.b16 %v3200, %v3196
    %v3369 = vpack.c.b16 %v3201, %v3197
    %v3370 = vpack.c.b16 %v3202, %v3198
    %v3371 = vpack.c.b16 %v3203, %v3199
    %v3372 = vpack.c.b16 %v3208, %v3204
    %v3373 = vpack.c.b16 %v3209, %v3205
    %v3374 = vpack.c.b16 %v3210, %v3206
    %v3375 = vpack.c.b16 %v3211, %v3207
    %v3376 = vpack.c.b16 %v3216, %v3212
    %v3377 = vpack.c.b16 %v3217, %v3213
    %v3378 = vpack.c.b16 %v3218, %v3214
    %v3379 = vpack.c.b16 %v3219, %v3215
    %v3380 = vpack.c.b16 %v3224, %v3220
    %v3381 = vpack.c.b16 %v3225, %v3221
    %v3382 = vpack.c.b16 %v3226, %v3222
    %v3383 = vpack.c.b16 %v3227, %v3223
    %v3384 = vpack.c.b16 %v3232, %v3228
    %v3385 = vpack.c.b16 %v3233, %v3229
    %v3386 = vpack.c.b16 %v3234, %v3230
    %v3387 = vpack.c.b16 %v3235, %v3231
    %v3388 = vpack.c.b16 %v3240, %v3236
    %v3389 = vpack.c.b16 %v3241, %v3237
    %v3390 = vpack.c.b16 %v3242, %v3238
    %v3391 = vpack.c.b16 %v3243, %v3239
    %v3392 = vpack.c.b16 %v3248, %v3244
    %v3393 = vpack.c.b16 %v3249, %v3245
    %v3394 = vpack.c.b16 %v3250, %v3246
    %v3395 = vpack.c.b16 %v3251, %v3247
    %v3396 = vpack.c.b16 %v3256, %v3252
    %v3397 = vpack.c.b16 %v3257, %v3253
    %v3398 = vpack.c.b16 %v3258, %v3254
    %v3399 = vpack.c.b16 %v3259, %v3255
    %v3400 = vpack.c.b16 %v3264, %v3260
    %v3401 = vpack.c.b16 %v3265, %v3261
    %v3402 = vpack.c.b16 %v3266, %v3262
    %v3403 = vpack.c.b16 %v3267, %v3263
    %v3404 = vpack.c.b16 %v3272, %v3268
    %v3405 = vpack.c.b16 %v3273, %v3269
    %v3406 = vpack.c.b16 %v3274, %v3270
    %v3407 = vpack.c.b16 %v3275, %v3271
    %v3408 = vpack.c.b16 %v3280, %v3276
    %v3409 = vpack.c.b16 %v3281, %v3277
    %v3410 = vpack.c.b16 %v3282, %v3278
    %v3411 = vpack.c.b16 %v3283, %v3279
    %3540 = vmatprep.subr.bf16.mxu0 %v3313
    %3541 = vmatpush1.bf16.msra.mxu0 %v3312
    %3542 = vmatprep.subr.bf16.mxu0 %v3309
    %3543 = vmatpush1.bf16.msra.mxu0 %v3308
    %3544 = vmatprep.subr.bf16.mxu0 %v3305
    %3545 = vmatpush1.bf16.msra.mxu0 %v3304
    %3546 = vmatprep.subr.bf16.mxu0 %v3301
    %3547 = vmatpush1.bf16.msra.mxu0 %v3300
    %3548 = vmatprep.subr.bf16.mxu0 %v3297
    %3549 = vmatpush1.bf16.msra.mxu0 %v3296
    %3550 = vmatprep.subr.bf16.mxu0 %v3293
    %3551 = vmatpush1.bf16.msra.mxu0 %v3292
    %3552 = vmatprep.subr.bf16.mxu0 %v3289
    %3553 = vmatpush1.bf16.msra.mxu0 %v3288
    %3554 = vmatprep.subr.bf16.mxu0 %v3285
    %3555 = vmatpush1.bf16.msra.mxu0 %v3284
    %3556 = vmatprep.subr.bf16.mxu0 %v3345
    %3557 = vmatpush2.bf16.msra.mxu0 %v3344
    %3558 = vmatprep.subr.bf16.mxu0 %v3341
    %3559 = vmatpush2.bf16.msra.mxu0 %v3340
    %3560 = vmatprep.subr.bf16.mxu0 %v3337
    %3561 = vmatpush2.bf16.msra.mxu0 %v3336
    %3562 = vmatprep.subr.bf16.mxu0 %v3333
    %3563 = vmatpush2.bf16.msra.mxu0 %v3332
    %3564 = vmatprep.subr.bf16.mxu0 %v3329
    %3565 = vmatpush2.bf16.msra.mxu0 %v3328
    %3566 = vmatprep.subr.bf16.mxu0 %v3325
    %3567 = vmatpush2.bf16.msra.mxu0 %v3324
    %3568 = vmatprep.subr.bf16.mxu0 %v3321
    %3569 = vmatpush2.bf16.msra.mxu0 %v3320
    %3570 = vmatprep.subr.bf16.mxu0 %v3317
    %3571 = vmatpush2.bf16.msra.mxu0 %v3316
    %3572 = vmatprep.mubr.bf16.mxu0 %v2723
    %3573 = vmatmul.mubr.bf16.gmra.mxu0 %v2722
    %v3574 = vpop.f32.mrf.mxu0
    %v3575 = vadd.f32 %v2883, %v3574
    %v3576 = vpop.f32.mrf.mxu0
    %v3577 = vadd.f32 %v2887, %v3576
    %v3578 = vpop.f32.mrf.mxu0
    %v3579 = vadd.f32 %v2883, %v3578
    %v3580 = vpop.f32.mrf.mxu0
    %v3581 = vadd.f32 %v2887, %v3580
    %3582 = vmatprep.mubr.bf16.mxu0 %v2727
    %3583 = vmatmul.mubr.bf16.gmra.mxu0 %v2726
    %v3584 = vpop.f32.mrf.mxu0
    %v3585 = vadd.f32 %v2883, %v3584
    %v3586 = vpop.f32.mrf.mxu0
    %v3587 = vadd.f32 %v2887, %v3586
    %v3588 = vpop.f32.mrf.mxu0
    %v3589 = vadd.f32 %v2883, %v3588
    %v3590 = vpop.f32.mrf.mxu0
    %v3591 = vadd.f32 %v2887, %v3590
    %3592 = vmatprep.mubr.bf16.mxu0 %v2731
    %3593 = vmatmul.mubr.bf16.gmra.mxu0 %v2730
    %v3594 = vpop.f32.mrf.mxu0
    %v3595 = vadd.f32 %v2883, %v3594
    %v3596 = vpop.f32.mrf.mxu0
    %v3597 = vadd.f32 %v2887, %v3596
    %v3598 = vpop.f32.mrf.mxu0
    %v3599 = vadd.f32 %v2883, %v3598
    %v3600 = vpop.f32.mrf.mxu0
    %v3601 = vadd.f32 %v2887, %v3600
    %3602 = vmatprep.mubr.bf16.mxu0 %v2735
    %3603 = vmatmul.mubr.bf16.gmra.mxu0 %v2734
    %v3604 = vpop.f32.mrf.mxu0
    %v3605 = vadd.f32 %v2883, %v3604
    %v3606 = vpop.f32.mrf.mxu0
    %v3607 = vadd.f32 %v2887, %v3606
    %v3608 = vpop.f32.mrf.mxu0
    %v3609 = vadd.f32 %v2883, %v3608
    %v3610 = vpop.f32.mrf.mxu0
    %v3611 = vadd.f32 %v2887, %v3610
    %3612 = vmatprep.mubr.bf16.mxu0 %v2739
    %3613 = vmatmul.mubr.bf16.gmra.mxu0 %v2738
    %v3614 = vpop.f32.mrf.mxu0
    %v3615 = vadd.f32 %v2883, %v3614
    %v3616 = vpop.f32.mrf.mxu0
    %v3617 = vadd.f32 %v2887, %v3616
    %v3618 = vpop.f32.mrf.mxu0
    %v3619 = vadd.f32 %v2883, %v3618
    %v3620 = vpop.f32.mrf.mxu0
    %v3621 = vadd.f32 %v2887, %v3620
    %3622 = vmatprep.mubr.bf16.mxu0 %v2743
    %3623 = vmatmul.mubr.bf16.gmra.mxu0 %v2742
    %v3624 = vpop.f32.mrf.mxu0
    %v3625 = vadd.f32 %v2883, %v3624
    %v3626 = vpop.f32.mrf.mxu0
    %v3627 = vadd.f32 %v2887, %v3626
    %v3628 = vpop.f32.mrf.mxu0
    %v3629 = vadd.f32 %v2883, %v3628
    %v3630 = vpop.f32.mrf.mxu0
    %v3631 = vadd.f32 %v2887, %v3630
    %3632 = vmatprep.mubr.bf16.mxu0 %v2747
    %3633 = vmatmul.mubr.bf16.gmra.mxu0 %v2746
    %v3634 = vpop.f32.mrf.mxu0
    %v3635 = vadd.f32 %v2883, %v3634
    %v3636 = vpop.f32.mrf.mxu0
    %v3637 = vadd.f32 %v2887, %v3636
    %v3638 = vpop.f32.mrf.mxu0
    %v3639 = vpop.f32.mrf.mxu0
    %3640 = vdwg.mxu0
    %3641 = vmatprep.subr.bf16.mxu0 %v3377
    %3642 = vmatpush1.bf16.msra.mxu0 %v3376
    %3643 = vmatprep.subr.bf16.mxu0 %v3373
    %3644 = vmatpush1.bf16.msra.mxu0 %v3372
    %3645 = vmatprep.subr.bf16.mxu0 %v3369
    %3646 = vmatpush1.bf16.msra.mxu0 %v3368
    %3647 = vmatprep.subr.bf16.mxu0 %v3365
    %3648 = vmatpush1.bf16.msra.mxu0 %v3364
    %3649 = vmatprep.subr.bf16.mxu0 %v3361
    %3650 = vmatpush1.bf16.msra.mxu0 %v3360
    %3651 = vmatprep.subr.bf16.mxu0 %v3357
    %3652 = vmatpush1.bf16.msra.mxu0 %v3356
    %3653 = vmatprep.subr.bf16.mxu0 %v3353
    %3654 = vmatpush1.bf16.msra.mxu0 %v3352
    %3655 = vmatprep.subr.bf16.mxu0 %v3349
    %3656 = vmatpush1.bf16.msra.mxu0 %v3348
    %3657 = vmatprep.subr.bf16.mxu0 %v3409
    %3658 = vmatpush2.bf16.msra.mxu0 %v3408
    %3659 = vmatprep.subr.bf16.mxu0 %v3405
    %3660 = vmatpush2.bf16.msra.mxu0 %v3404
    %3661 = vmatprep.subr.bf16.mxu0 %v3401
    %3662 = vmatpush2.bf16.msra.mxu0 %v3400
    %3663 = vmatprep.subr.bf16.mxu0 %v3397
    %3664 = vmatpush2.bf16.msra.mxu0 %v3396
    %3665 = vmatprep.subr.bf16.mxu0 %v3393
    %3666 = vmatpush2.bf16.msra.mxu0 %v3392
    %3667 = vmatprep.subr.bf16.mxu0 %v3389
    %3668 = vmatpush2.bf16.msra.mxu0 %v3388
    %3669 = vmatprep.subr.bf16.mxu0 %v3385
    %3670 = vmatpush2.bf16.msra.mxu0 %v3384
    %3671 = vmatprep.subr.bf16.mxu0 %v3381
    %3672 = vmatpush2.bf16.msra.mxu0 %v3380
    %3673 = vmatprep.mubr.bf16.mxu0 %v2725
    %3674 = vmatmul.mubr.bf16.gmra.mxu0 %v2724
    %v3675 = vpop.f32.mrf.mxu0
    %v3676 = vadd.f32 %v3575, %v3675
    %v3677 = vpop.f32.mrf.mxu0
    %v3678 = vadd.f32 %v3577, %v3677
    %v3679 = vpop.f32.mrf.mxu0
    %v3680 = vadd.f32 %v3579, %v3679
    %v3681 = vpop.f32.mrf.mxu0
    %v3682 = vadd.f32 %v3581, %v3681
    %3683 = vmatprep.mubr.bf16.mxu0 %v2729
    %3684 = vmatmul.mubr.bf16.gmra.mxu0 %v2728
    %v3685 = vpop.f32.mrf.mxu0
    %v3686 = vadd.f32 %v3585, %v3685
    %v3687 = vpop.f32.mrf.mxu0
    %v3688 = vadd.f32 %v3587, %v3687
    %v3689 = vpop.f32.mrf.mxu0
    %v3690 = vadd.f32 %v3589, %v3689
    %v3691 = vpop.f32.mrf.mxu0
    %v3692 = vadd.f32 %v3591, %v3691
    %3693 = vmatprep.mubr.bf16.mxu0 %v2733
    %3694 = vmatmul.mubr.bf16.gmra.mxu0 %v2732
    %v3695 = vpop.f32.mrf.mxu0
    %v3696 = vadd.f32 %v3595, %v3695
    %v3697 = vpop.f32.mrf.mxu0
    %v3698 = vadd.f32 %v3597, %v3697
    %v3699 = vpop.f32.mrf.mxu0
    %v3700 = vadd.f32 %v3599, %v3699
    %v3701 = vpop.f32.mrf.mxu0
    %v3702 = vadd.f32 %v3601, %v3701
    %3703 = vmatprep.mubr.bf16.mxu0 %v2737
    %3704 = vmatmul.mubr.bf16.gmra.mxu0 %v2736
    %v3705 = vpop.f32.mrf.mxu0
    %v3706 = vadd.f32 %v3605, %v3705
    %v3707 = vpop.f32.mrf.mxu0
    %v3708 = vadd.f32 %v3607, %v3707
    %v3709 = vpop.f32.mrf.mxu0
    %v3710 = vadd.f32 %v3609, %v3709
    %v3711 = vpop.f32.mrf.mxu0
    %v3712 = vadd.f32 %v3611, %v3711
    %3713 = vmatprep.mubr.bf16.mxu0 %v2741
    %3714 = vmatmul.mubr.bf16.gmra.mxu0 %v2740
    %v3715 = vpop.f32.mrf.mxu0
    %v3716 = vadd.f32 %v3615, %v3715
    %v3717 = vpop.f32.mrf.mxu0
    %v3718 = vadd.f32 %v3617, %v3717
    %v3719 = vpop.f32.mrf.mxu0
    %v3720 = vadd.f32 %v3619, %v3719
    %v3721 = vpop.f32.mrf.mxu0
    %v3722 = vadd.f32 %v3621, %v3721
    %3723 = vmatprep.mubr.bf16.mxu0 %v2745
    %3724 = vmatmul.mubr.bf16.gmra.mxu0 %v2744
    %v3725 = vpop.f32.mrf.mxu0
    %v3726 = vadd.f32 %v3625, %v3725
    %v3727 = vpop.f32.mrf.mxu0
    %v3728 = vadd.f32 %v3627, %v3727
    %v3729 = vpop.f32.mrf.mxu0
    %v3730 = vadd.f32 %v3629, %v3729
    %v3731 = vpop.f32.mrf.mxu0
    %v3732 = vadd.f32 %v3631, %v3731
    %3733 = vmatprep.mubr.bf16.mxu0 %v2749
    %3734 = vmatmul.mubr.bf16.gmra.mxu0 %v2748
    %v3735 = vpop.f32.mrf.mxu0
    %v3736 = vadd.f32 %v3635, %v3735
    %v3737 = vpop.f32.mrf.mxu0
    %v3738 = vadd.f32 %v3637, %v3737
    %v3739 = vpop.f32.mrf.mxu0
    %v3740 = vpop.f32.mrf.mxu0
    %3741 = vdwg.mxu0
    %3742 = vmatprep.subr.bf16.mxu0 %v3315
    %3743 = vmatpush1.bf16.msra.mxu0 %v3314
    %3744 = vmatprep.subr.bf16.mxu0 %v3311
    %3745 = vmatpush1.bf16.msra.mxu0 %v3310
    %3746 = vmatprep.subr.bf16.mxu0 %v3307
    %3747 = vmatpush1.bf16.msra.mxu0 %v3306
    %3748 = vmatprep.subr.bf16.mxu0 %v3303
    %3749 = vmatpush1.bf16.msra.mxu0 %v3302
    %3750 = vmatprep.subr.bf16.mxu0 %v3299
    %3751 = vmatpush1.bf16.msra.mxu0 %v3298
    %3752 = vmatprep.subr.bf16.mxu0 %v3295
    %3753 = vmatpush1.bf16.msra.mxu0 %v3294
    %3754 = vmatprep.subr.bf16.mxu0 %v3291
    %3755 = vmatpush1.bf16.msra.mxu0 %v3290
    %3756 = vmatprep.subr.bf16.mxu0 %v3287
    %3757 = vmatpush1.bf16.msra.mxu0 %v3286
    %3758 = vmatprep.subr.bf16.mxu0 %v3347
    %3759 = vmatpush2.bf16.msra.mxu0 %v3346
    %3760 = vmatprep.subr.bf16.mxu0 %v3343
    %3761 = vmatpush2.bf16.msra.mxu0 %v3342
    %3762 = vmatprep.subr.bf16.mxu0 %v3339
    %3763 = vmatpush2.bf16.msra.mxu0 %v3338
    %3764 = vmatprep.subr.bf16.mxu0 %v3335
    %3765 = vmatpush2.bf16.msra.mxu0 %v3334
    %3766 = vmatprep.subr.bf16.mxu0 %v3331
    %3767 = vmatpush2.bf16.msra.mxu0 %v3330
    %3768 = vmatprep.subr.bf16.mxu0 %v3327
    %3769 = vmatpush2.bf16.msra.mxu0 %v3326
    %3770 = vmatprep.subr.bf16.mxu0 %v3323
    %3771 = vmatpush2.bf16.msra.mxu0 %v3322
    %3772 = vmatprep.subr.bf16.mxu0 %v3319
    %3773 = vmatpush2.bf16.msra.mxu0 %v3318
    %3774 = vmatprep.mubr.bf16.mxu0 %v2723
    %3775 = vmatmul.mubr.bf16.gmra.mxu0 %v2722
    %v3776 = vpop.f32.mrf.mxu0
    %v3777 = vadd.f32 %v2891, %v3776
    %v3778 = vpop.f32.mrf.mxu0
    %v3779 = vadd.f32 %v2895, %v3778
    %v3780 = vpop.f32.mrf.mxu0
    %v3781 = vadd.f32 %v2891, %v3780
    %v3782 = vpop.f32.mrf.mxu0
    %v3783 = vadd.f32 %v2895, %v3782
    %3784 = vmatprep.mubr.bf16.mxu0 %v2727
    %3785 = vmatmul.mubr.bf16.gmra.mxu0 %v2726
    %v3786 = vpop.f32.mrf.mxu0
    %v3787 = vadd.f32 %v2891, %v3786
    %v3788 = vpop.f32.mrf.mxu0
    %v3789 = vadd.f32 %v2895, %v3788
    %v3790 = vpop.f32.mrf.mxu0
    %v3791 = vadd.f32 %v2891, %v3790
    %v3792 = vpop.f32.mrf.mxu0
    %v3793 = vadd.f32 %v2895, %v3792
    %3794 = vmatprep.mubr.bf16.mxu0 %v2731
    %3795 = vmatmul.mubr.bf16.gmra.mxu0 %v2730
    %v3796 = vpop.f32.mrf.mxu0
    %v3797 = vadd.f32 %v2891, %v3796
    %v3798 = vpop.f32.mrf.mxu0
    %v3799 = vadd.f32 %v2895, %v3798
    %v3800 = vpop.f32.mrf.mxu0
    %v3801 = vadd.f32 %v2891, %v3800
    %v3802 = vpop.f32.mrf.mxu0
    %v3803 = vadd.f32 %v2895, %v3802
    %3804 = vmatprep.mubr.bf16.mxu0 %v2735
    %3805 = vmatmul.mubr.bf16.gmra.mxu0 %v2734
    %v3806 = vpop.f32.mrf.mxu0
    %v3807 = vadd.f32 %v2891, %v3806
    %v3808 = vpop.f32.mrf.mxu0
    %v3809 = vadd.f32 %v2895, %v3808
    %v3810 = vpop.f32.mrf.mxu0
    %v3811 = vadd.f32 %v2891, %v3810
    %v3812 = vpop.f32.mrf.mxu0
    %v3813 = vadd.f32 %v2895, %v3812
    %3814 = vmatprep.mubr.bf16.mxu0 %v2739
    %3815 = vmatmul.mubr.bf16.gmra.mxu0 %v2738
    %v3816 = vpop.f32.mrf.mxu0
    %v3817 = vadd.f32 %v2891, %v3816
    %v3818 = vpop.f32.mrf.mxu0
    %v3819 = vadd.f32 %v2895, %v3818
    %v3820 = vpop.f32.mrf.mxu0
    %v3821 = vadd.f32 %v2891, %v3820
    %v3822 = vpop.f32.mrf.mxu0
    %v3823 = vadd.f32 %v2895, %v3822
    %3824 = vmatprep.mubr.bf16.mxu0 %v2743
    %3825 = vmatmul.mubr.bf16.gmra.mxu0 %v2742
    %v3826 = vpop.f32.mrf.mxu0
    %v3827 = vadd.f32 %v2891, %v3826
    %v3828 = vpop.f32.mrf.mxu0
    %v3829 = vadd.f32 %v2895, %v3828
    %v3830 = vpop.f32.mrf.mxu0
    %v3831 = vadd.f32 %v2891, %v3830
    %v3832 = vpop.f32.mrf.mxu0
    %v3833 = vadd.f32 %v2895, %v3832
    %3834 = vmatprep.mubr.bf16.mxu0 %v2747
    %3835 = vmatmul.mubr.bf16.gmra.mxu0 %v2746
    %v3836 = vpop.f32.mrf.mxu0
    %v3837 = vadd.f32 %v2891, %v3836
    %v3838 = vpop.f32.mrf.mxu0
    %v3839 = vadd.f32 %v2895, %v3838
    %v3840 = vpop.f32.mrf.mxu0
    %v3841 = vpop.f32.mrf.mxu0
    %3842 = vdwg.mxu0
    %3843 = vmatprep.subr.bf16.mxu0 %v3379
    %3844 = vmatpush1.bf16.msra.mxu0 %v3378
    %3845 = vmatprep.subr.bf16.mxu0 %v3375
    %3846 = vmatpush1.bf16.msra.mxu0 %v3374
    %3847 = vmatprep.subr.bf16.mxu0 %v3371
    %3848 = vmatpush1.bf16.msra.mxu0 %v3370
    %3849 = vmatprep.subr.bf16.mxu0 %v3367
    %3850 = vmatpush1.bf16.msra.mxu0 %v3366
    %3851 = vmatprep.subr.bf16.mxu0 %v3363
    %3852 = vmatpush1.bf16.msra.mxu0 %v3362
    %3853 = vmatprep.subr.bf16.mxu0 %v3359
    %3854 = vmatpush1.bf16.msra.mxu0 %v3358
    %3855 = vmatprep.subr.bf16.mxu0 %v3355
    %3856 = vmatpush1.bf16.msra.mxu0 %v3354
    %3857 = vmatprep.subr.bf16.mxu0 %v3351
    %3858 = vmatpush1.bf16.msra.mxu0 %v3350
    %3859 = vmatprep.subr.bf16.mxu0 %v3411
    %3860 = vmatpush2.bf16.msra.mxu0 %v3410
    %3861 = vmatprep.subr.bf16.mxu0 %v3407
    %3862 = vmatpush2.bf16.msra.mxu0 %v3406
    %3863 = vmatprep.subr.bf16.mxu0 %v3403
    %3864 = vmatpush2.bf16.msra.mxu0 %v3402
    %3865 = vmatprep.subr.bf16.mxu0 %v3399
    %3866 = vmatpush2.bf16.msra.mxu0 %v3398
    %3867 = vmatprep.subr.bf16.mxu0 %v3395
    %3868 = vmatpush2.bf16.msra.mxu0 %v3394
    %3869 = vmatprep.subr.bf16.mxu0 %v3391
    %3870 = vmatpush2.bf16.msra.mxu0 %v3390
    %3871 = vmatprep.subr.bf16.mxu0 %v3387
    %3872 = vmatpush2.bf16.msra.mxu0 %v3386
    %3873 = vmatprep.subr.bf16.mxu0 %v3383
    %3874 = vmatpush2.bf16.msra.mxu0 %v3382
    %3875 = vmatprep.mubr.bf16.mxu0 %v2725
    %3876 = vmatmul.mubr.bf16.gmra.mxu0 %v2724
    %v3877 = vpop.f32.mrf.mxu0
    %v3878 = vadd.f32 %v3777, %v3877
    %v3879 = vpop.f32.mrf.mxu0
    %v3880 = vadd.f32 %v3779, %v3879
    %v3881 = vpop.f32.mrf.mxu0
    %v3882 = vadd.f32 %v3781, %v3881
    %v3883 = vpop.f32.mrf.mxu0
    %v3884 = vadd.f32 %v3783, %v3883
    %3885 = vmatprep.mubr.bf16.mxu0 %v2729
    %3886 = vmatmul.mubr.bf16.gmra.mxu0 %v2728
    %v3887 = vpop.f32.mrf.mxu0
    %v3888 = vadd.f32 %v3787, %v3887
    %v3889 = vpop.f32.mrf.mxu0
    %v3890 = vadd.f32 %v3789, %v3889
    %v3891 = vpop.f32.mrf.mxu0
    %v3892 = vadd.f32 %v3791, %v3891
    %v3893 = vpop.f32.mrf.mxu0
    %v3894 = vadd.f32 %v3793, %v3893
    %3895 = vmatprep.mubr.bf16.mxu0 %v2733
    %3896 = vmatmul.mubr.bf16.gmra.mxu0 %v2732
    %v3897 = vpop.f32.mrf.mxu0
    %v3898 = vadd.f32 %v3797, %v3897
    %v3899 = vpop.f32.mrf.mxu0
    %v3900 = vadd.f32 %v3799, %v3899
    %v3901 = vpop.f32.mrf.mxu0
    %v3902 = vadd.f32 %v3801, %v3901
    %v3903 = vpop.f32.mrf.mxu0
    %v3904 = vadd.f32 %v3803, %v3903
    %3905 = vmatprep.mubr.bf16.mxu0 %v2737
    %3906 = vmatmul.mubr.bf16.gmra.mxu0 %v2736
    %v3907 = vpop.f32.mrf.mxu0
    %v3908 = vadd.f32 %v3807, %v3907
    %v3909 = vpop.f32.mrf.mxu0
    %v3910 = vadd.f32 %v3809, %v3909
    %v3911 = vpop.f32.mrf.mxu0
    %v3912 = vadd.f32 %v3811, %v3911
    %v3913 = vpop.f32.mrf.mxu0
    %v3914 = vadd.f32 %v3813, %v3913
    %3915 = vmatprep.mubr.bf16.mxu0 %v2741
    %3916 = vmatmul.mubr.bf16.gmra.mxu0 %v2740
    %v3917 = vpop.f32.mrf.mxu0
    %v3918 = vadd.f32 %v3817, %v3917
    %v3919 = vpop.f32.mrf.mxu0
    %v3920 = vadd.f32 %v3819, %v3919
    %v3921 = vpop.f32.mrf.mxu0
    %v3922 = vadd.f32 %v3821, %v3921
    %v3923 = vpop.f32.mrf.mxu0
    %v3924 = vadd.f32 %v3823, %v3923
    %3925 = vmatprep.mubr.bf16.mxu0 %v2745
    %3926 = vmatmul.mubr.bf16.gmra.mxu0 %v2744
    %v3927 = vpop.f32.mrf.mxu0
    %v3928 = vadd.f32 %v3827, %v3927
    %v3929 = vpop.f32.mrf.mxu0
    %v3930 = vadd.f32 %v3829, %v3929
    %v3931 = vpop.f32.mrf.mxu0
    %v3932 = vadd.f32 %v3831, %v3931
    %v3933 = vpop.f32.mrf.mxu0
    %v3934 = vadd.f32 %v3833, %v3933
    %3935 = vmatprep.mubr.bf16.mxu0 %v2749
    %3936 = vmatmul.mubr.bf16.gmra.mxu0 %v2748
    %v3937 = vpop.f32.mrf.mxu0
    %v3938 = vadd.f32 %v3837, %v3937
    %v3939 = vpop.f32.mrf.mxu0
    %v3940 = vadd.f32 %v3839, %v3939
    %v3941 = vpop.f32.mrf.mxu0
    %v3942 = vpop.f32.mrf.mxu0
    %3943 = vdwg.mxu0
    %v3944 = vmax.f32 %v3676, 0.0
    %v3945 = vmax.f32 %v3678, 0.0
    %v3946 = vmax.f32 %v3878, 0.0
    %v3947 = vmax.f32 %v3880, 0.0
    %v3948 = vmax.f32 %v3680, 0.0
    %v3949 = vmax.f32 %v3682, 0.0
    %v3950 = vmax.f32 %v3882, 0.0
    %v3951 = vmax.f32 %v3884, 0.0
    %v3952 = vmax.f32 %v3686, 0.0
    %v3953 = vmax.f32 %v3688, 0.0
    %v3954 = vmax.f32 %v3888, 0.0
    %v3955 = vmax.f32 %v3890, 0.0
    %v3956 = vmax.f32 %v3690, 0.0
    %v3957 = vmax.f32 %v3692, 0.0
    %v3958 = vmax.f32 %v3892, 0.0
    %v3959 = vmax.f32 %v3894, 0.0
    %v3960 = vmax.f32 %v3696, 0.0
    %v3961 = vmax.f32 %v3698, 0.0
    %v3962 = vmax.f32 %v3898, 0.0
    %v3963 = vmax.f32 %v3900, 0.0
    %v3964 = vmax.f32 %v3700, 0.0
    %v3965 = vmax.f32 %v3702, 0.0
    %v3966 = vmax.f32 %v3902, 0.0
    %v3967 = vmax.f32 %v3904, 0.0
    %v3968 = vmax.f32 %v3706, 0.0
    %v3969 = vmax.f32 %v3708, 0.0
    %v3970 = vmax.f32 %v3908, 0.0
    %v3971 = vmax.f32 %v3910, 0.0
    %v3972 = vmax.f32 %v3710, 0.0
    %v3973 = vmax.f32 %v3712, 0.0
    %v3974 = vmax.f32 %v3912, 0.0
    %v3975 = vmax.f32 %v3914, 0.0
    %v3976 = vmax.f32 %v3716, 0.0
    %v3977 = vmax.f32 %v3718, 0.0
    %v3978 = vmax.f32 %v3918, 0.0
    %v3979 = vmax.f32 %v3920, 0.0
    %v3980 = vmax.f32 %v3720, 0.0
    %v3981 = vmax.f32 %v3722, 0.0
    %v3982 = vmax.f32 %v3922, 0.0
    %v3983 = vmax.f32 %v3924, 0.0
    %v3984 = vmax.f32 %v3726, 0.0
    %v3985 = vmax.f32 %v3728, 0.0
    %v3986 = vmax.f32 %v3928, 0.0
    %v3987 = vmax.f32 %v3930, 0.0
    %v3988 = vmax.f32 %v3730, 0.0
    %v3989 = vmax.f32 %v3732, 0.0
    %v3990 = vmax.f32 %v3932, 0.0
    %v3991 = vmax.f32 %v3934, 0.0
    %v3992 = vmax.f32 %v3736, 0.0
    %v3993 = vmax.f32 %v3738, 0.0
    %v3994 = vmax.f32 %v3938, 0.0
    %v3995 = vmax.f32 %v3940, 0.0
    %v3996 = vpack.c.bf16 %v3948, %v3944
    %v3997 = vpack.c.bf16 %v3949, %v3945
    %v3998 = vpack.c.bf16 %v3950, %v3946
    %v3999 = vpack.c.bf16 %v3951, %v3947
    %v4000 = vpack.c.bf16 %v3956, %v3952
    %v4001 = vpack.c.bf16 %v3957, %v3953
    %v4002 = vpack.c.bf16 %v3958, %v3954
    %v4003 = vpack.c.bf16 %v3959, %v3955
    %v4004 = vpack.c.bf16 %v3964, %v3960
    %v4005 = vpack.c.bf16 %v3965, %v3961
    %v4006 = vpack.c.bf16 %v3966, %v3962
    %v4007 = vpack.c.bf16 %v3967, %v3963
    %v4008 = vpack.c.bf16 %v3972, %v3968
    %v4009 = vpack.c.bf16 %v3973, %v3969
    %v4010 = vpack.c.bf16 %v3974, %v3970
    %v4011 = vpack.c.bf16 %v3975, %v3971
    %v4012 = vpack.c.bf16 %v3980, %v3976
    %v4013 = vpack.c.bf16 %v3981, %v3977
    %v4014 = vpack.c.bf16 %v3982, %v3978
    %v4015 = vpack.c.bf16 %v3983, %v3979
    %v4016 = vpack.c.bf16 %v3988, %v3984
    %v4017 = vpack.c.bf16 %v3989, %v3985
    %v4018 = vpack.c.bf16 %v3990, %v3986
    %v4019 = vpack.c.bf16 %v3991, %v3987
    %v4020 = vpack.c.bf16 %v3992, %v3992
    %v4021 = vpack.c.bf16 %v3993, %v3993
    %v4022 = vpack.c.bf16 %v3994, %v3994
    %v4023 = vpack.c.bf16 %v3995, %v3995
    %v4024 = vld [vmem:[%s7] sm:$0xff]
    %v4025 = vld [vmem:[%s7 + $0x8] sm:$0xff]
    %v4026 = vld [vmem:[%s7 + $0x10] sm:$0xff]
    %v4027 = vld [vmem:[%s7 + $0x18] sm:$0xff]
    %v4028 = vld [vmem:[%s7 + $0x20] sm:$0xff]
    %v4029 = vld [vmem:[%s7 + $0x28] sm:$0xff]
    %v4030 = vld [vmem:[%s7 + $0x30] sm:$0xff]
    %v4031 = vld [vmem:[%s7 + $0x38] sm:$0xff]
    %v4032 = vld [vmem:[%s7 + $0x40] sm:$0xff]
    %v4033 = vld [vmem:[%s7 + $0x48] sm:$0xff]
    %v4034 = vld [vmem:[%s7 + $0x50] sm:$0xff]
    %v4035 = vld [vmem:[%s7 + $0x58] sm:$0xff]
    %v4036 = vld [vmem:[%s7 + $0x60] sm:$0xff]
    %v4037 = vld [vmem:[%s7 + $0x68] sm:$0xff]
    %v4038 = vld [vmem:[%s7 + $0x70] sm:$0xff]
    %v4039 = vld [vmem:[%s7 + $0x78] sm:$0xff]
    %v4040 = vld [vmem:[%s7 + $0x80] sm:$0xff]
    %v4041 = vld [vmem:[%s7 + $0x88] sm:$0xff]
    %v4042 = vld [vmem:[%s7 + $0x90] sm:$0xff]
    %v4043 = vld [vmem:[%s7 + $0x98] sm:$0xff]
    %v4044 = vld [vmem:[%s7 + $0xa0] sm:$0xff]
    %v4045 = vld [vmem:[%s7 + $0xa8] sm:$0xff]
    %v4046 = vld [vmem:[%s7 + $0xb0] sm:$0xff]
    %v4047 = vld [vmem:[%s7 + $0xb8] sm:$0xff]
    %v4048 = vld [vmem:[%s7 + $0xc0] sm:$0xff]
    %v4049 = vld [vmem:[%s7 + $0xc8] sm:$0xff]
    %v4050 = vld [vmem:[%s7 + $0xd0] sm:$0xff]
    %v4051 = vld [vmem:[%s7 + $0xd8] sm:$0xff]
    %v4052 = vld [vmem:[%s7 + $0xe0] sm:$0xff]
    %v4053 = vld [vmem:[%s7 + $0xe8] sm:$0xff]
    %v4054 = vld [vmem:[%s7 + $0xf0] sm:$0xff]
    %v4055 = vld [vmem:[%s7 + $0xf8] sm:$0xff]
    %v4056 = vld [vmem:[%s7 + $0x100] sm:$0xff]
    %v4057 = vld [vmem:[%s7 + $0x108] sm:$0xff]
    %v4058 = vld [vmem:[%s7 + $0x110] sm:$0xff]
    %v4059 = vld [vmem:[%s7 + $0x118] sm:$0xff]
    %v4060 = vld [vmem:[%s7 + $0x120] sm:$0xff]
    %v4061 = vld [vmem:[%s7 + $0x128] sm:$0xff]
    %v4062 = vld [vmem:[%s7 + $0x130] sm:$0xff]
    %v4063 = vld [vmem:[%s7 + $0x138] sm:$0xff]
    %v4064 = vld [vmem:[%s7 + $0x140] sm:$0xff]
    %v4065 = vld [vmem:[%s7 + $0x148] sm:$0xff]
    %v4066 = vld [vmem:[%s7 + $0x150] sm:$0xff]
    %v4067 = vld [vmem:[%s7 + $0x158] sm:$0xff]
    %v4068 = vld [vmem:[%s7 + $0x160] sm:$0xff]
    %v4069 = vld [vmem:[%s7 + $0x168] sm:$0xff]
    %v4070 = vld [vmem:[%s7 + $0x170] sm:$0xff]
    %v4071 = vld [vmem:[%s7 + $0x178] sm:$0xff]
    %v4072 = vld [vmem:[%s7 + $0x180] sm:$0xff]
    %v4073 = vld [vmem:[%s7 + $0x188] sm:$0xff]
    %v4074 = vld [vmem:[%s7 + $0x190] sm:$0xff]
    %v4075 = vld [vmem:[%s7 + $0x198] sm:$0xff]
    %v4076 = vld [vmem:[%s7 + $0x1a0] sm:$0xff]
    %v4077 = vld [vmem:[%s7 + $0x1a8] sm:$0xff]
    %v4078 = vld [vmem:[%s7 + $0x1b0] sm:$0xff]
    %v4079 = vld [vmem:[%s7 + $0x1b8] sm:$0xff]
    %v4080 = vld [vmem:[%s7 + $0x1c0] sm:$0xff]
    %v4081 = vld [vmem:[%s7 + $0x1c8] sm:$0xff]
    %v4082 = vld [vmem:[%s7 + $0x1d0] sm:$0xff]
    %v4083 = vld [vmem:[%s7 + $0x1d8] sm:$0xff]
    %v4084 = vld [vmem:[%s7 + $0x1e0] sm:$0xff]
    %v4085 = vld [vmem:[%s7 + $0x1e8] sm:$0xff]
    %v4086 = vld [vmem:[%s7 + $0x1f0] sm:$0xff]
    %v4087 = vld [vmem:[%s7 + $0x1f8] sm:$0xff]
    %v4088 = vld [vmem:[%s7 + $0x200] sm:$0xff]
    %v4089 = vld [vmem:[%s7 + $0x208] sm:$0xff]
    %v4090 = vld [vmem:[%s7 + $0x210] sm:$0xff]
    %v4091 = vld [vmem:[%s7 + $0x218] sm:$0xff]
    %v4092 = vld [vmem:[%s7 + $0x220] sm:$0xff]
    %v4093 = vld [vmem:[%s7 + $0x228] sm:$0xff]
    %v4094 = vld [vmem:[%s7 + $0x230] sm:$0xff]
    %v4095 = vld [vmem:[%s7 + $0x238] sm:$0xff]
    %v4096 = vld [vmem:[%s7 + $0x240] sm:$0xff]
    %v4097 = vld [vmem:[%s7 + $0x248] sm:$0xff]
    %v4098 = vld [vmem:[%s7 + $0x250] sm:$0xff]
    %v4099 = vld [vmem:[%s7 + $0x258] sm:$0xff]
    %v4100 = vld [vmem:[%s7 + $0x260] sm:$0xff]
    %v4101 = vld [vmem:[%s7 + $0x268] sm:$0xff]
    %v4102 = vld [vmem:[%s7 + $0x270] sm:$0xff]
    %v4103 = vld [vmem:[%s7 + $0x278] sm:$0xff]
    %v4104 = vld [vmem:[%s7 + $0x280] sm:$0xff]
    %v4105 = vld [vmem:[%s7 + $0x288] sm:$0xff]
    %v4106 = vld [vmem:[%s7 + $0x290] sm:$0xff]
    %v4107 = vld [vmem:[%s7 + $0x298] sm:$0xff]
    %v4108 = vld [vmem:[%s7 + $0x2a0] sm:$0xff]
    %v4109 = vld [vmem:[%s7 + $0x2a8] sm:$0xff]
    %v4110 = vld [vmem:[%s7 + $0x2b0] sm:$0xff]
    %v4111 = vld [vmem:[%s7 + $0x2b8] sm:$0xff]
    %v4112 = vld [vmem:[%s7 + $0x2c0] sm:$0xff]
    %v4113 = vld [vmem:[%s7 + $0x2c8] sm:$0xff]
    %v4114 = vld [vmem:[%s7 + $0x2d0] sm:$0xff]
    %v4115 = vld [vmem:[%s7 + $0x2d8] sm:$0xff]
    %v4116 = vld [vmem:[%s7 + $0x2e0] sm:$0xff]
    %v4117 = vld [vmem:[%s7 + $0x2e8] sm:$0xff]
    %v4118 = vld [vmem:[%s7 + $0x2f0] sm:$0xff]
    %v4119 = vld [vmem:[%s7 + $0x2f8] sm:$0xff]
    %v4120 = vld [vmem:[%s7 + $0x300] sm:$0xff]
    %v4121 = vld [vmem:[%s7 + $0x308] sm:$0xff]
    %v4122 = vld [vmem:[%s7 + $0x310] sm:$0xff]
    %v4123 = vld [vmem:[%s7 + $0x318] sm:$0xff]
    %v4124 = vld [vmem:[%s7 + $0x320] sm:$0xff]
    %v4125 = vld [vmem:[%s7 + $0x328] sm:$0xff]
    %v4126 = vld [vmem:[%s7 + $0x330] sm:$0xff]
    %v4127 = vld [vmem:[%s7 + $0x338] sm:$0xff]
    %v4128 = vld [vmem:[%s7 + $0x340] sm:$0xff]
    %v4129 = vld [vmem:[%s7 + $0x348] sm:$0xff]
    %v4130 = vld [vmem:[%s7 + $0x350] sm:$0xff]
    %v4131 = vld [vmem:[%s7 + $0x358] sm:$0xff]
    %v4132 = vld [vmem:[%s7 + $0x360] sm:$0xff]
    %v4133 = vld [vmem:[%s7 + $0x368] sm:$0xff]
    %v4134 = vld [vmem:[%s7 + $0x370] sm:$0xff]
    %v4135 = vld [vmem:[%s7 + $0x378] sm:$0xff]
    %v4136 = vld [vmem:[%s7 + $0x380] sm:$0xff]
    %v4137 = vld [vmem:[%s7 + $0x388] sm:$0xff]
    %v4138 = vld [vmem:[%s7 + $0x390] sm:$0xff]
    %v4139 = vld [vmem:[%s7 + $0x398] sm:$0xff]
    %v4140 = vld [vmem:[%s7 + $0x3a0] sm:$0xff]
    %v4141 = vld [vmem:[%s7 + $0x3a8] sm:$0xff]
    %v4142 = vld [vmem:[%s7 + $0x3b0] sm:$0xff]
    %v4143 = vld [vmem:[%s7 + $0x3b8] sm:$0xff]
    %v4144 = vld [vmem:[%s7 + $0x3c0] sm:$0xff]
    %v4145 = vld [vmem:[%s7 + $0x3c8] sm:$0xff]
    %v4146 = vld [vmem:[%s7 + $0x3d0] sm:$0xff]
    %v4147 = vld [vmem:[%s7 + $0x3d8] sm:$0xff]
    %v4148 = vld [vmem:[%s7 + $0x3e0] sm:$0xff]
    %v4149 = vld [vmem:[%s7 + $0x3e8] sm:$0xff]
    %v4150 = vld [vmem:[%s7 + $0x3f0] sm:$0xff]
    %v4151 = vld [vmem:[%s7 + $0x3f8] sm:$0xff]
    %v4152 = vld [vmem:[%s8] sm:$0xf]
    %v4154 = vlaneseq
    %v4155 = vshrl.u32 %v4154, 7
    %v4156 = vsub.s32 0, %v4155
    %v4157 = vrot.slane %v4152, %v4156
    %v4158 = vlaneseq
    %v4159 = vshrl.u32 %v4158, 7
    %v4160 = vsub.s32 1, %v4159
    %v4161 = vrot.slane %v4152, %v4160
    %v4162 = vlaneseq
    %v4163 = vshrl.u32 %v4162, 7
    %v4164 = vsub.s32 2, %v4163
    %v4165 = vrot.slane %v4152, %v4164
    %v4166 = vlaneseq
    %v4167 = vshrl.u32 %v4166, 7
    %v4168 = vsub.s32 3, %v4167
    %v4169 = vrot.slane %v4152, %v4168
    %v4302 = vunpack.c.l.b16 %v4024
    %v4303 = vunpack.c.h.b16 %v4024
    %v4304 = vunpack.c.l.b16 %v4025
    %v4305 = vunpack.c.h.b16 %v4025
    %v4306 = vunpack.c.l.b16 %v4026
    %v4307 = vunpack.c.h.b16 %v4026
    %v4308 = vunpack.c.l.b16 %v4027
    %v4309 = vunpack.c.h.b16 %v4027
    %v4310 = vunpack.c.l.b16 %v4028
    %v4311 = vunpack.c.h.b16 %v4028
    %v4312 = vunpack.c.l.b16 %v4029
    %v4313 = vunpack.c.h.b16 %v4029
    %v4314 = vunpack.c.l.b16 %v4030
    %v4315 = vunpack.c.h.b16 %v4030
    %v4316 = vunpack.c.l.b16 %v4031
    %v4317 = vunpack.c.h.b16 %v4031
    %v4318 = vunpack.c.l.b16 %v4032
    %v4319 = vunpack.c.h.b16 %v4032
    %v4320 = vunpack.c.l.b16 %v4033
    %v4321 = vunpack.c.h.b16 %v4033
    %v4322 = vunpack.c.l.b16 %v4034
    %v4323 = vunpack.c.h.b16 %v4034
    %v4324 = vunpack.c.l.b16 %v4035
    %v4325 = vunpack.c.h.b16 %v4035
    %v4326 = vunpack.c.l.b16 %v4036
    %v4327 = vunpack.c.h.b16 %v4036
    %v4328 = vunpack.c.l.b16 %v4037
    %v4329 = vunpack.c.h.b16 %v4037
    %v4330 = vunpack.c.l.b16 %v4038
    %v4331 = vunpack.c.h.b16 %v4038
    %v4332 = vunpack.c.l.b16 %v4039
    %v4333 = vunpack.c.h.b16 %v4039
    %v4334 = vunpack.c.l.b16 %v4040
    %v4335 = vunpack.c.h.b16 %v4040
    %v4336 = vunpack.c.l.b16 %v4041
    %v4337 = vunpack.c.h.b16 %v4041
    %v4338 = vunpack.c.l.b16 %v4042
    %v4339 = vunpack.c.h.b16 %v4042
    %v4340 = vunpack.c.l.b16 %v4043
    %v4341 = vunpack.c.h.b16 %v4043
    %v4342 = vunpack.c.l.b16 %v4044
    %v4343 = vunpack.c.h.b16 %v4044
    %v4344 = vunpack.c.l.b16 %v4045
    %v4345 = vunpack.c.h.b16 %v4045
    %v4346 = vunpack.c.l.b16 %v4046
    %v4347 = vunpack.c.h.b16 %v4046
    %v4348 = vunpack.c.l.b16 %v4047
    %v4349 = vunpack.c.h.b16 %v4047
    %v4350 = vunpack.c.l.b16 %v4048
    %v4351 = vunpack.c.h.b16 %v4048
    %v4352 = vunpack.c.l.b16 %v4049
    %v4353 = vunpack.c.h.b16 %v4049
    %v4354 = vunpack.c.l.b16 %v4050
    %v4355 = vunpack.c.h.b16 %v4050
    %v4356 = vunpack.c.l.b16 %v4051
    %v4357 = vunpack.c.h.b16 %v4051
    %v4358 = vunpack.c.l.b16 %v4052
    %v4359 = vunpack.c.h.b16 %v4052
    %v4360 = vunpack.c.l.b16 %v4053
    %v4361 = vunpack.c.h.b16 %v4053
    %v4362 = vunpack.c.l.b16 %v4054
    %v4363 = vunpack.c.h.b16 %v4054
    %v4364 = vunpack.c.l.b16 %v4055
    %v4365 = vunpack.c.h.b16 %v4055
    %v4366 = vunpack.c.l.b16 %v4056
    %v4367 = vunpack.c.h.b16 %v4056
    %v4368 = vunpack.c.l.b16 %v4057
    %v4369 = vunpack.c.h.b16 %v4057
    %v4370 = vunpack.c.l.b16 %v4058
    %v4371 = vunpack.c.h.b16 %v4058
    %v4372 = vunpack.c.l.b16 %v4059
    %v4373 = vunpack.c.h.b16 %v4059
    %v4374 = vunpack.c.l.b16 %v4060
    %v4375 = vunpack.c.h.b16 %v4060
    %v4376 = vunpack.c.l.b16 %v4061
    %v4377 = vunpack.c.h.b16 %v4061
    %v4378 = vunpack.c.l.b16 %v4062
    %v4379 = vunpack.c.h.b16 %v4062
    %v4380 = vunpack.c.l.b16 %v4063
    %v4381 = vunpack.c.h.b16 %v4063
    %v4382 = vunpack.c.l.b16 %v4064
    %v4383 = vunpack.c.h.b16 %v4064
    %v4384 = vunpack.c.l.b16 %v4065
    %v4385 = vunpack.c.h.b16 %v4065
    %v4386 = vunpack.c.l.b16 %v4066
    %v4387 = vunpack.c.h.b16 %v4066
    %v4388 = vunpack.c.l.b16 %v4067
    %v4389 = vunpack.c.h.b16 %v4067
    %v4390 = vunpack.c.l.b16 %v4068
    %v4391 = vunpack.c.h.b16 %v4068
    %v4392 = vunpack.c.l.b16 %v4069
    %v4393 = vunpack.c.h.b16 %v4069
    %v4394 = vunpack.c.l.b16 %v4070
    %v4395 = vunpack.c.h.b16 %v4070
    %v4396 = vunpack.c.l.b16 %v4071
    %v4397 = vunpack.c.h.b16 %v4071
    %v4398 = vunpack.c.l.b16 %v4072
    %v4399 = vunpack.c.h.b16 %v4072
    %v4400 = vunpack.c.l.b16 %v4073
    %v4401 = vunpack.c.h.b16 %v4073
    %v4402 = vunpack.c.l.b16 %v4074
    %v4403 = vunpack.c.h.b16 %v4074
    %v4404 = vunpack.c.l.b16 %v4075
    %v4405 = vunpack.c.h.b16 %v4075
    %v4406 = vunpack.c.l.b16 %v4076
    %v4407 = vunpack.c.h.b16 %v4076
    %v4408 = vunpack.c.l.b16 %v4077
    %v4409 = vunpack.c.h.b16 %v4077
    %v4410 = vunpack.c.l.b16 %v4078
    %v4411 = vunpack.c.h.b16 %v4078
    %v4412 = vunpack.c.l.b16 %v4079
    %v4413 = vunpack.c.h.b16 %v4079
    %v4414 = vunpack.c.l.b16 %v4080
    %v4415 = vunpack.c.h.b16 %v4080
    %v4416 = vunpack.c.l.b16 %v4081
    %v4417 = vunpack.c.h.b16 %v4081
    %v4418 = vunpack.c.l.b16 %v4082
    %v4419 = vunpack.c.h.b16 %v4082
    %v4420 = vunpack.c.l.b16 %v4083
    %v4421 = vunpack.c.h.b16 %v4083
    %v4422 = vunpack.c.l.b16 %v4084
    %v4423 = vunpack.c.h.b16 %v4084
    %v4424 = vunpack.c.l.b16 %v4085
    %v4425 = vunpack.c.h.b16 %v4085
    %v4426 = vunpack.c.l.b16 %v4086
    %v4427 = vunpack.c.h.b16 %v4086
    %v4428 = vunpack.c.l.b16 %v4087
    %v4429 = vunpack.c.h.b16 %v4087
    %v4430 = vunpack.c.l.b16 %v4088
    %v4431 = vunpack.c.h.b16 %v4088
    %v4432 = vunpack.c.l.b16 %v4089
    %v4433 = vunpack.c.h.b16 %v4089
    %v4434 = vunpack.c.l.b16 %v4090
    %v4435 = vunpack.c.h.b16 %v4090
    %v4436 = vunpack.c.l.b16 %v4091
    %v4437 = vunpack.c.h.b16 %v4091
    %v4438 = vunpack.c.l.b16 %v4092
    %v4439 = vunpack.c.h.b16 %v4092
    %v4440 = vunpack.c.l.b16 %v4093
    %v4441 = vunpack.c.h.b16 %v4093
    %v4442 = vunpack.c.l.b16 %v4094
    %v4443 = vunpack.c.h.b16 %v4094
    %v4444 = vunpack.c.l.b16 %v4095
    %v4445 = vunpack.c.h.b16 %v4095
    %v4446 = vunpack.c.l.b16 %v4096
    %v4447 = vunpack.c.h.b16 %v4096
    %v4448 = vunpack.c.l.b16 %v4097
    %v4449 = vunpack.c.h.b16 %v4097
    %v4450 = vunpack.c.l.b16 %v4098
    %v4451 = vunpack.c.h.b16 %v4098
    %v4452 = vunpack.c.l.b16 %v4099
    %v4453 = vunpack.c.h.b16 %v4099
    %v4454 = vunpack.c.l.b16 %v4100
    %v4455 = vunpack.c.h.b16 %v4100
    %v4456 = vunpack.c.l.b16 %v4101
    %v4457 = vunpack.c.h.b16 %v4101
    %v4458 = vunpack.c.l.b16 %v4102
    %v4459 = vunpack.c.h.b16 %v4102
    %v4460 = vunpack.c.l.b16 %v4103
    %v4461 = vunpack.c.h.b16 %v4103
    %v4462 = vunpack.c.l.b16 %v4104
    %v4463 = vunpack.c.h.b16 %v4104
    %v4464 = vunpack.c.l.b16 %v4105
    %v4465 = vunpack.c.h.b16 %v4105
    %v4466 = vunpack.c.l.b16 %v4106
    %v4467 = vunpack.c.h.b16 %v4106
    %v4468 = vunpack.c.l.b16 %v4107
    %v4469 = vunpack.c.h.b16 %v4107
    %v4470 = vunpack.c.l.b16 %v4108
    %v4471 = vunpack.c.h.b16 %v4108
    %v4472 = vunpack.c.l.b16 %v4109
    %v4473 = vunpack.c.h.b16 %v4109
    %v4474 = vunpack.c.l.b16 %v4110
    %v4475 = vunpack.c.h.b16 %v4110
    %v4476 = vunpack.c.l.b16 %v4111
    %v4477 = vunpack.c.h.b16 %v4111
    %v4478 = vunpack.c.l.b16 %v4112
    %v4479 = vunpack.c.h.b16 %v4112
    %v4480 = vunpack.c.l.b16 %v4113
    %v4481 = vunpack.c.h.b16 %v4113
    %v4482 = vunpack.c.l.b16 %v4114
    %v4483 = vunpack.c.h.b16 %v4114
    %v4484 = vunpack.c.l.b16 %v4115
    %v4485 = vunpack.c.h.b16 %v4115
    %v4486 = vunpack.c.l.b16 %v4116
    %v4487 = vunpack.c.h.b16 %v4116
    %v4488 = vunpack.c.l.b16 %v4117
    %v4489 = vunpack.c.h.b16 %v4117
    %v4490 = vunpack.c.l.b16 %v4118
    %v4491 = vunpack.c.h.b16 %v4118
    %v4492 = vunpack.c.l.b16 %v4119
    %v4493 = vunpack.c.h.b16 %v4119
    %v4494 = vunpack.c.l.b16 %v4120
    %v4495 = vunpack.c.h.b16 %v4120
    %v4496 = vunpack.c.l.b16 %v4121
    %v4497 = vunpack.c.h.b16 %v4121
    %v4498 = vunpack.c.l.b16 %v4122
    %v4499 = vunpack.c.h.b16 %v4122
    %v4500 = vunpack.c.l.b16 %v4123
    %v4501 = vunpack.c.h.b16 %v4123
    %v4502 = vunpack.c.l.b16 %v4124
    %v4503 = vunpack.c.h.b16 %v4124
    %v4504 = vunpack.c.l.b16 %v4125
    %v4505 = vunpack.c.h.b16 %v4125
    %v4506 = vunpack.c.l.b16 %v4126
    %v4507 = vunpack.c.h.b16 %v4126
    %v4508 = vunpack.c.l.b16 %v4127
    %v4509 = vunpack.c.h.b16 %v4127
    %v4510 = vunpack.c.l.b16 %v4128
    %v4511 = vunpack.c.h.b16 %v4128
    %v4512 = vunpack.c.l.b16 %v4129
    %v4513 = vunpack.c.h.b16 %v4129
    %v4514 = vunpack.c.l.b16 %v4130
    %v4515 = vunpack.c.h.b16 %v4130
    %v4516 = vunpack.c.l.b16 %v4131
    %v4517 = vunpack.c.h.b16 %v4131
    %v4518 = vunpack.c.l.b16 %v4132
    %v4519 = vunpack.c.h.b16 %v4132
    %v4520 = vunpack.c.l.b16 %v4133
    %v4521 = vunpack.c.h.b16 %v4133
    %v4522 = vunpack.c.l.b16 %v4134
    %v4523 = vunpack.c.h.b16 %v4134
    %v4524 = vunpack.c.l.b16 %v4135
    %v4525 = vunpack.c.h.b16 %v4135
    %v4526 = vunpack.c.l.b16 %v4136
    %v4527 = vunpack.c.h.b16 %v4136
    %v4528 = vunpack.c.l.b16 %v4137
    %v4529 = vunpack.c.h.b16 %v4137
    %v4530 = vunpack.c.l.b16 %v4138
    %v4531 = vunpack.c.h.b16 %v4138
    %v4532 = vunpack.c.l.b16 %v4139
    %v4533 = vunpack.c.h.b16 %v4139
    %v4534 = vunpack.c.l.b16 %v4140
    %v4535 = vunpack.c.h.b16 %v4140
    %v4536 = vunpack.c.l.b16 %v4141
    %v4537 = vunpack.c.h.b16 %v4141
    %v4538 = vunpack.c.l.b16 %v4142
    %v4539 = vunpack.c.h.b16 %v4142
    %v4540 = vunpack.c.l.b16 %v4143
    %v4541 = vunpack.c.h.b16 %v4143
    %v4542 = vunpack.c.l.b16 %v4144
    %v4543 = vunpack.c.h.b16 %v4144
    %v4544 = vunpack.c.l.b16 %v4145
    %v4545 = vunpack.c.h.b16 %v4145
    %v4546 = vunpack.c.l.b16 %v4146
    %v4547 = vunpack.c.h.b16 %v4146
    %v4548 = vunpack.c.l.b16 %v4147
    %v4549 = vunpack.c.h.b16 %v4147
    %v4550 = vunpack.c.l.b16 %v4148
    %v4551 = vunpack.c.h.b16 %v4148
    %v4552 = vunpack.c.l.b16 %v4149
    %v4553 = vunpack.c.h.b16 %v4149
    %v4554 = vunpack.c.l.b16 %v4150
    %v4555 = vunpack.c.h.b16 %v4150
    %v4556 = vunpack.c.l.b16 %v4151
    %v4557 = vunpack.c.h.b16 %v4151
    %v4558 = vpack.c.b16 %v4306, %v4302
    %v4559 = vpack.c.b16 %v4307, %v4303
    %v4560 = vpack.c.b16 %v4308, %v4304
    %v4561 = vpack.c.b16 %v4309, %v4305
    %v4562 = vpack.c.b16 %v4314, %v4310
    %v4563 = vpack.c.b16 %v4315, %v4311
    %v4564 = vpack.c.b16 %v4316, %v4312
    %v4565 = vpack.c.b16 %v4317, %v4313
    %v4566 = vpack.c.b16 %v4322, %v4318
    %v4567 = vpack.c.b16 %v4323, %v4319
    %v4568 = vpack.c.b16 %v4324, %v4320
    %v4569 = vpack.c.b16 %v4325, %v4321
    %v4570 = vpack.c.b16 %v4330, %v4326
    %v4571 = vpack.c.b16 %v4331, %v4327
    %v4572 = vpack.c.b16 %v4332, %v4328
    %v4573 = vpack.c.b16 %v4333, %v4329
    %v4574 = vpack.c.b16 %v4338, %v4334
    %v4575 = vpack.c.b16 %v4339, %v4335
    %v4576 = vpack.c.b16 %v4340, %v4336
    %v4577 = vpack.c.b16 %v4341, %v4337
    %v4578 = vpack.c.b16 %v4346, %v4342
    %v4579 = vpack.c.b16 %v4347, %v4343
    %v4580 = vpack.c.b16 %v4348, %v4344
    %v4581 = vpack.c.b16 %v4349, %v4345
    %v4582 = vpack.c.b16 %v4354, %v4350
    %v4583 = vpack.c.b16 %v4355, %v4351
    %v4584 = vpack.c.b16 %v4356, %v4352
    %v4585 = vpack.c.b16 %v4357, %v4353
    %v4586 = vpack.c.b16 %v4362, %v4358
    %v4587 = vpack.c.b16 %v4363, %v4359
    %v4588 = vpack.c.b16 %v4364, %v4360
    %v4589 = vpack.c.b16 %v4365, %v4361
    %v4590 = vpack.c.b16 %v4370, %v4366
    %v4591 = vpack.c.b16 %v4371, %v4367
    %v4592 = vpack.c.b16 %v4372, %v4368
    %v4593 = vpack.c.b16 %v4373, %v4369
    %v4594 = vpack.c.b16 %v4378, %v4374
    %v4595 = vpack.c.b16 %v4379, %v4375
    %v4596 = vpack.c.b16 %v4380, %v4376
    %v4597 = vpack.c.b16 %v4381, %v4377
    %v4598 = vpack.c.b16 %v4386, %v4382
    %v4599 = vpack.c.b16 %v4387, %v4383
    %v4600 = vpack.c.b16 %v4388, %v4384
    %v4601 = vpack.c.b16 %v4389, %v4385
    %v4602 = vpack.c.b16 %v4394, %v4390
    %v4603 = vpack.c.b16 %v4395, %v4391
    %v4604 = vpack.c.b16 %v4396, %v4392
    %v4605 = vpack.c.b16 %v4397, %v4393
    %v4606 = vpack.c.b16 %v4402, %v4398
    %v4607 = vpack.c.b16 %v4403, %v4399
    %v4608 = vpack.c.b16 %v4404, %v4400
    %v4609 = vpack.c.b16 %v4405, %v4401
    %v4610 = vpack.c.b16 %v4410, %v4406
    %v4611 = vpack.c.b16 %v4411, %v4407
    %v4612 = vpack.c.b16 %v4412, %v4408
    %v4613 = vpack.c.b16 %v4413, %v4409
    %v4614 = vpack.c.b16 %v4418, %v4414
    %v4615 = vpack.c.b16 %v4419, %v4415
    %v4616 = vpack.c.b16 %v4420, %v4416
    %v4617 = vpack.c.b16 %v4421, %v4417
    %v4618 = vpack.c.b16 %v4426, %v4422
    %v4619 = vpack.c.b16 %v4427, %v4423
    %v4620 = vpack.c.b16 %v4428, %v4424
    %v4621 = vpack.c.b16 %v4429, %v4425
    %v4622 = vpack.c.b16 %v4434, %v4430
    %v4623 = vpack.c.b16 %v4435, %v4431
    %v4624 = vpack.c.b16 %v4436, %v4432
    %v4625 = vpack.c.b16 %v4437, %v4433
    %v4626 = vpack.c.b16 %v4442, %v4438
    %v4627 = vpack.c.b16 %v4443, %v4439
    %v4628 = vpack.c.b16 %v4444, %v4440
    %v4629 = vpack.c.b16 %v4445, %v4441
    %v4630 = vpack.c.b16 %v4450, %v4446
    %v4631 = vpack.c.b16 %v4451, %v4447
    %v4632 = vpack.c.b16 %v4452, %v4448
    %v4633 = vpack.c.b16 %v4453, %v4449
    %v4634 = vpack.c.b16 %v4458, %v4454
    %v4635 = vpack.c.b16 %v4459, %v4455
    %v4636 = vpack.c.b16 %v4460, %v4456
    %v4637 = vpack.c.b16 %v4461, %v4457
    %v4638 = vpack.c.b16 %v4466, %v4462
    %v4639 = vpack.c.b16 %v4467, %v4463
    %v4640 = vpack.c.b16 %v4468, %v4464
    %v4641 = vpack.c.b16 %v4469, %v4465
    %v4642 = vpack.c.b16 %v4474, %v4470
    %v4643 = vpack.c.b16 %v4475, %v4471
    %v4644 = vpack.c.b16 %v4476, %v4472
    %v4645 = vpack.c.b16 %v4477, %v4473
    %v4646 = vpack.c.b16 %v4482, %v4478
    %v4647 = vpack.c.b16 %v4483, %v4479
    %v4648 = vpack.c.b16 %v4484, %v4480
    %v4649 = vpack.c.b16 %v4485, %v4481
    %v4650 = vpack.c.b16 %v4490, %v4486
    %v4651 = vpack.c.b16 %v4491, %v4487
    %v4652 = vpack.c.b16 %v4492, %v4488
    %v4653 = vpack.c.b16 %v4493, %v4489
    %v4654 = vpack.c.b16 %v4498, %v4494
    %v4655 = vpack.c.b16 %v4499, %v4495
    %v4656 = vpack.c.b16 %v4500, %v4496
    %v4657 = vpack.c.b16 %v4501, %v4497
    %v4658 = vpack.c.b16 %v4506, %v4502
    %v4659 = vpack.c.b16 %v4507, %v4503
    %v4660 = vpack.c.b16 %v4508, %v4504
    %v4661 = vpack.c.b16 %v4509, %v4505
    %v4662 = vpack.c.b16 %v4514, %v4510
    %v4663 = vpack.c.b16 %v4515, %v4511
    %v4664 = vpack.c.b16 %v4516, %v4512
    %v4665 = vpack.c.b16 %v4517, %v4513
    %v4666 = vpack.c.b16 %v4522, %v4518
    %v4667 = vpack.c.b16 %v4523, %v4519
    %v4668 = vpack.c.b16 %v4524, %v4520
    %v4669 = vpack.c.b16 %v4525, %v4521
    %v4670 = vpack.c.b16 %v4530, %v4526
    %v4671 = vpack.c.b16 %v4531, %v4527
    %v4672 = vpack.c.b16 %v4532, %v4528
    %v4673 = vpack.c.b16 %v4533, %v4529
    %v4674 = vpack.c.b16 %v4538, %v4534
    %v4675 = vpack.c.b16 %v4539, %v4535
    %v4676 = vpack.c.b16 %v4540, %v4536
    %v4677 = vpack.c.b16 %v4541, %v4537
    %v4678 = vpack.c.b16 %v4546, %v4542
    %v4679 = vpack.c.b16 %v4547, %v4543
    %v4680 = vpack.c.b16 %v4548, %v4544
    %v4681 = vpack.c.b16 %v4549, %v4545
    %v4682 = vpack.c.b16 %v4554, %v4550
    %v4683 = vpack.c.b16 %v4555, %v4551
    %v4684 = vpack.c.b16 %v4556, %v4552
    %v4685 = vpack.c.b16 %v4557, %v4553
    %4814 = vmatprep.subr.bf16.mxu0 %v4587
    %4815 = vmatpush1.bf16.msra.mxu0 %v4586
    %4816 = vmatprep.subr.bf16.mxu0 %v4583
    %4817 = vmatpush1.bf16.msra.mxu0 %v4582
    %4818 = vmatprep.subr.bf16.mxu0 %v4579
    %4819 = vmatpush1.bf16.msra.mxu0 %v4578
    %4820 = vmatprep.subr.bf16.mxu0 %v4575
    %4821 = vmatpush1.bf16.msra.mxu0 %v4574
    %4822 = vmatprep.subr.bf16.mxu0 %v4571
    %4823 = vmatpush1.bf16.msra.mxu0 %v4570
    %4824 = vmatprep.subr.bf16.mxu0 %v4567
    %4825 = vmatpush1.bf16.msra.mxu0 %v4566
    %4826 = vmatprep.subr.bf16.mxu0 %v4563
    %4827 = vmatpush1.bf16.msra.mxu0 %v4562
    %4828 = vmatprep.subr.bf16.mxu0 %v4559
    %4829 = vmatpush1.bf16.msra.mxu0 %v4558
    %4830 = vmatprep.subr.bf16.mxu0 %v4619
    %4831 = vmatpush2.bf16.msra.mxu0 %v4618
    %4832 = vmatprep.subr.bf16.mxu0 %v4615
    %4833 = vmatpush2.bf16.msra.mxu0 %v4614
    %4834 = vmatprep.subr.bf16.mxu0 %v4611
    %4835 = vmatpush2.bf16.msra.mxu0 %v4610
    %4836 = vmatprep.subr.bf16.mxu0 %v4607
    %4837 = vmatpush2.bf16.msra.mxu0 %v4606
    %4838 = vmatprep.subr.bf16.mxu0 %v4603
    %4839 = vmatpush2.bf16.msra.mxu0 %v4602
    %4840 = vmatprep.subr.bf16.mxu0 %v4599
    %4841 = vmatpush2.bf16.msra.mxu0 %v4598
    %4842 = vmatprep.subr.bf16.mxu0 %v4595
    %4843 = vmatpush2.bf16.msra.mxu0 %v4594
    %4844 = vmatprep.subr.bf16.mxu0 %v4591
    %4845 = vmatpush2.bf16.msra.mxu0 %v4590
    %4846 = vmatprep.mubr.bf16.mxu0 %v3997
    %4847 = vmatmul.mubr.bf16.gmra.mxu0 %v3996
    %v4848 = vpop.f32.mrf.mxu0
    %v4849 = vadd.f32 %v4157, %v4848
    %v4850 = vpop.f32.mrf.mxu0
    %v4851 = vadd.f32 %v4161, %v4850
    %v4852 = vpop.f32.mrf.mxu0
    %v4853 = vadd.f32 %v4157, %v4852
    %v4854 = vpop.f32.mrf.mxu0
    %v4855 = vadd.f32 %v4161, %v4854
    %4856 = vmatprep.mubr.bf16.mxu0 %v4001
    %4857 = vmatmul.mubr.bf16.gmra.mxu0 %v4000
    %v4858 = vpop.f32.mrf.mxu0
    %v4859 = vadd.f32 %v4157, %v4858
    %v4860 = vpop.f32.mrf.mxu0
    %v4861 = vadd.f32 %v4161, %v4860
    %v4862 = vpop.f32.mrf.mxu0
    %v4863 = vadd.f32 %v4157, %v4862
    %v4864 = vpop.f32.mrf.mxu0
    %v4865 = vadd.f32 %v4161, %v4864
    %4866 = vmatprep.mubr.bf16.mxu0 %v4005
    %4867 = vmatmul.mubr.bf16.gmra.mxu0 %v4004
    %v4868 = vpop.f32.mrf.mxu0
    %v4869 = vadd.f32 %v4157, %v4868
    %v4870 = vpop.f32.mrf.mxu0
    %v4871 = vadd.f32 %v4161, %v4870
    %v4872 = vpop.f32.mrf.mxu0
    %v4873 = vadd.f32 %v4157, %v4872
    %v4874 = vpop.f32.mrf.mxu0
    %v4875 = vadd.f32 %v4161, %v4874
    %4876 = vmatprep.mubr.bf16.mxu0 %v4009
    %4877 = vmatmul.mubr.bf16.gmra.mxu0 %v4008
    %v4878 = vpop.f32.mrf.mxu0
    %v4879 = vadd.f32 %v4157, %v4878
    %v4880 = vpop.f32.mrf.mxu0
    %v4881 = vadd.f32 %v4161, %v4880
    %v4882 = vpop.f32.mrf.mxu0
    %v4883 = vadd.f32 %v4157, %v4882
    %v4884 = vpop.f32.mrf.mxu0
    %v4885 = vadd.f32 %v4161, %v4884
    %4886 = vmatprep.mubr.bf16.mxu0 %v4013
    %4887 = vmatmul.mubr.bf16.gmra.mxu0 %v4012
    %v4888 = vpop.f32.mrf.mxu0
    %v4889 = vadd.f32 %v4157, %v4888
    %v4890 = vpop.f32.mrf.mxu0
    %v4891 = vadd.f32 %v4161, %v4890
    %v4892 = vpop.f32.mrf.mxu0
    %v4893 = vadd.f32 %v4157, %v4892
    %v4894 = vpop.f32.mrf.mxu0
    %v4895 = vadd.f32 %v4161, %v4894
    %4896 = vmatprep.mubr.bf16.mxu0 %v4017
    %4897 = vmatmul.mubr.bf16.gmra.mxu0 %v4016
    %v4898 = vpop.f32.mrf.mxu0
    %v4899 = vadd.f32 %v4157, %v4898
    %v4900 = vpop.f32.mrf.mxu0
    %v4901 = vadd.f32 %v4161, %v4900
    %v4902 = vpop.f32.mrf.mxu0
    %v4903 = vadd.f32 %v4157, %v4902
    %v4904 = vpop.f32.mrf.mxu0
    %v4905 = vadd.f32 %v4161, %v4904
    %4906 = vmatprep.mubr.bf16.mxu0 %v4021
    %4907 = vmatmul.mubr.bf16.gmra.mxu0 %v4020
    %v4908 = vpop.f32.mrf.mxu0
    %v4909 = vadd.f32 %v4157, %v4908
    %v4910 = vpop.f32.mrf.mxu0
    %v4911 = vadd.f32 %v4161, %v4910
    %v4912 = vpop.f32.mrf.mxu0
    %v4913 = vpop.f32.mrf.mxu0
    %4914 = vdwg.mxu0
    %4915 = vmatprep.subr.bf16.mxu0 %v4651
    %4916 = vmatpush1.bf16.msra.mxu0 %v4650
    %4917 = vmatprep.subr.bf16.mxu0 %v4647
    %4918 = vmatpush1.bf16.msra.mxu0 %v4646
    %4919 = vmatprep.subr.bf16.mxu0 %v4643
    %4920 = vmatpush1.bf16.msra.mxu0 %v4642
    %4921 = vmatprep.subr.bf16.mxu0 %v4639
    %4922 = vmatpush1.bf16.msra.mxu0 %v4638
    %4923 = vmatprep.subr.bf16.mxu0 %v4635
    %4924 = vmatpush1.bf16.msra.mxu0 %v4634
    %4925 = vmatprep.subr.bf16.mxu0 %v4631
    %4926 = vmatpush1.bf16.msra.mxu0 %v4630
    %4927 = vmatprep.subr.bf16.mxu0 %v4627
    %4928 = vmatpush1.bf16.msra.mxu0 %v4626
    %4929 = vmatprep.subr.bf16.mxu0 %v4623
    %4930 = vmatpush1.bf16.msra.mxu0 %v4622
    %4931 = vmatprep.subr.bf16.mxu0 %v4683
    %4932 = vmatpush2.bf16.msra.mxu0 %v4682
    %4933 = vmatprep.subr.bf16.mxu0 %v4679
    %4934 = vmatpush2.bf16.msra.mxu0 %v4678
    %4935 = vmatprep.subr.bf16.mxu0 %v4675
    %4936 = vmatpush2.bf16.msra.mxu0 %v4674
    %4937 = vmatprep.subr.bf16.mxu0 %v4671
    %4938 = vmatpush2.bf16.msra.mxu0 %v4670
    %4939 = vmatprep.subr.bf16.mxu0 %v4667
    %4940 = vmatpush2.bf16.msra.mxu0 %v4666
    %4941 = vmatprep.subr.bf16.mxu0 %v4663
    %4942 = vmatpush2.bf16.msra.mxu0 %v4662
    %4943 = vmatprep.subr.bf16.mxu0 %v4659
    %4944 = vmatpush2.bf16.msra.mxu0 %v4658
    %4945 = vmatprep.subr.bf16.mxu0 %v4655
    %4946 = vmatpush2.bf16.msra.mxu0 %v4654
    %4947 = vmatprep.mubr.bf16.mxu0 %v3999
    %4948 = vmatmul.mubr.bf16.gmra.mxu0 %v3998
    %v4949 = vpop.f32.mrf.mxu0
    %v4950 = vadd.f32 %v4849, %v4949
    %v4951 = vpop.f32.mrf.mxu0
    %v4952 = vadd.f32 %v4851, %v4951
    %v4953 = vpop.f32.mrf.mxu0
    %v4954 = vadd.f32 %v4853, %v4953
    %v4955 = vpop.f32.mrf.mxu0
    %v4956 = vadd.f32 %v4855, %v4955
    %4957 = vmatprep.mubr.bf16.mxu0 %v4003
    %4958 = vmatmul.mubr.bf16.gmra.mxu0 %v4002
    %v4959 = vpop.f32.mrf.mxu0
    %v4960 = vadd.f32 %v4859, %v4959
    %v4961 = vpop.f32.mrf.mxu0
    %v4962 = vadd.f32 %v4861, %v4961
    %v4963 = vpop.f32.mrf.mxu0
    %v4964 = vadd.f32 %v4863, %v4963
    %v4965 = vpop.f32.mrf.mxu0
    %v4966 = vadd.f32 %v4865, %v4965
    %4967 = vmatprep.mubr.bf16.mxu0 %v4007
    %4968 = vmatmul.mubr.bf16.gmra.mxu0 %v4006
    %v4969 = vpop.f32.mrf.mxu0
    %v4970 = vadd.f32 %v4869, %v4969
    %v4971 = vpop.f32.mrf.mxu0
    %v4972 = vadd.f32 %v4871, %v4971
    %v4973 = vpop.f32.mrf.mxu0
    %v4974 = vadd.f32 %v4873, %v4973
    %v4975 = vpop.f32.mrf.mxu0
    %v4976 = vadd.f32 %v4875, %v4975
    %4977 = vmatprep.mubr.bf16.mxu0 %v4011
    %4978 = vmatmul.mubr.bf16.gmra.mxu0 %v4010
    %v4979 = vpop.f32.mrf.mxu0
    %v4980 = vadd.f32 %v4879, %v4979
    %v4981 = vpop.f32.mrf.mxu0
    %v4982 = vadd.f32 %v4881, %v4981
    %v4983 = vpop.f32.mrf.mxu0
    %v4984 = vadd.f32 %v4883, %v4983
    %v4985 = vpop.f32.mrf.mxu0
    %v4986 = vadd.f32 %v4885, %v4985
    %4987 = vmatprep.mubr.bf16.mxu0 %v4015
    %4988 = vmatmul.mubr.bf16.gmra.mxu0 %v4014
    %v4989 = vpop.f32.mrf.mxu0
    %v4990 = vadd.f32 %v4889, %v4989
    %v4991 = vpop.f32.mrf.mxu0
    %v4992 = vadd.f32 %v4891, %v4991
    %v4993 = vpop.f32.mrf.mxu0
    %v4994 = vadd.f32 %v4893, %v4993
    %v4995 = vpop.f32.mrf.mxu0
    %v4996 = vadd.f32 %v4895, %v4995
    %4997 = vmatprep.mubr.bf16.mxu0 %v4019
    %4998 = vmatmul.mubr.bf16.gmra.mxu0 %v4018
    %v4999 = vpop.f32.mrf.mxu0
    %v5000 = vadd.f32 %v4899, %v4999
    %v5001 = vpop.f32.mrf.mxu0
    %v5002 = vadd.f32 %v4901, %v5001
    %v5003 = vpop.f32.mrf.mxu0
    %v5004 = vadd.f32 %v4903, %v5003
    %v5005 = vpop.f32.mrf.mxu0
    %v5006 = vadd.f32 %v4905, %v5005
    %5007 = vmatprep.mubr.bf16.mxu0 %v4023
    %5008 = vmatmul.mubr.bf16.gmra.mxu0 %v4022
    %v5009 = vpop.f32.mrf.mxu0
    %v5010 = vadd.f32 %v4909, %v5009
    %v5011 = vpop.f32.mrf.mxu0
    %v5012 = vadd.f32 %v4911, %v5011
    %v5013 = vpop.f32.mrf.mxu0
    %v5014 = vpop.f32.mrf.mxu0
    %5015 = vdwg.mxu0
    %5016 = vmatprep.subr.bf16.mxu0 %v4589
    %5017 = vmatpush1.bf16.msra.mxu0 %v4588
    %5018 = vmatprep.subr.bf16.mxu0 %v4585
    %5019 = vmatpush1.bf16.msra.mxu0 %v4584
    %5020 = vmatprep.subr.bf16.mxu0 %v4581
    %5021 = vmatpush1.bf16.msra.mxu0 %v4580
    %5022 = vmatprep.subr.bf16.mxu0 %v4577
    %5023 = vmatpush1.bf16.msra.mxu0 %v4576
    %5024 = vmatprep.subr.bf16.mxu0 %v4573
    %5025 = vmatpush1.bf16.msra.mxu0 %v4572
    %5026 = vmatprep.subr.bf16.mxu0 %v4569
    %5027 = vmatpush1.bf16.msra.mxu0 %v4568
    %5028 = vmatprep.subr.bf16.mxu0 %v4565
    %5029 = vmatpush1.bf16.msra.mxu0 %v4564
    %5030 = vmatprep.subr.bf16.mxu0 %v4561
    %5031 = vmatpush1.bf16.msra.mxu0 %v4560
    %5032 = vmatprep.subr.bf16.mxu0 %v4621
    %5033 = vmatpush2.bf16.msra.mxu0 %v4620
    %5034 = vmatprep.subr.bf16.mxu0 %v4617
    %5035 = vmatpush2.bf16.msra.mxu0 %v4616
    %5036 = vmatprep.subr.bf16.mxu0 %v4613
    %5037 = vmatpush2.bf16.msra.mxu0 %v4612
    %5038 = vmatprep.subr.bf16.mxu0 %v4609
    %5039 = vmatpush2.bf16.msra.mxu0 %v4608
    %5040 = vmatprep.subr.bf16.mxu0 %v4605
    %5041 = vmatpush2.bf16.msra.mxu0 %v4604
    %5042 = vmatprep.subr.bf16.mxu0 %v4601
    %5043 = vmatpush2.bf16.msra.mxu0 %v4600
    %5044 = vmatprep.subr.bf16.mxu0 %v4597
    %5045 = vmatpush2.bf16.msra.mxu0 %v4596
    %5046 = vmatprep.subr.bf16.mxu0 %v4593
    %5047 = vmatpush2.bf16.msra.mxu0 %v4592
    %5048 = vmatprep.mubr.bf16.mxu0 %v3997
    %5049 = vmatmul.mubr.bf16.gmra.mxu0 %v3996
    %v5050 = vpop.f32.mrf.mxu0
    %v5051 = vadd.f32 %v4165, %v5050
    %v5052 = vpop.f32.mrf.mxu0
    %v5053 = vadd.f32 %v4169, %v5052
    %v5054 = vpop.f32.mrf.mxu0
    %v5055 = vadd.f32 %v4165, %v5054
    %v5056 = vpop.f32.mrf.mxu0
    %v5057 = vadd.f32 %v4169, %v5056
    %5058 = vmatprep.mubr.bf16.mxu0 %v4001
    %5059 = vmatmul.mubr.bf16.gmra.mxu0 %v4000
    %v5060 = vpop.f32.mrf.mxu0
    %v5061 = vadd.f32 %v4165, %v5060
    %v5062 = vpop.f32.mrf.mxu0
    %v5063 = vadd.f32 %v4169, %v5062
    %v5064 = vpop.f32.mrf.mxu0
    %v5065 = vadd.f32 %v4165, %v5064
    %v5066 = vpop.f32.mrf.mxu0
    %v5067 = vadd.f32 %v4169, %v5066
    %5068 = vmatprep.mubr.bf16.mxu0 %v4005
    %5069 = vmatmul.mubr.bf16.gmra.mxu0 %v4004
    %v5070 = vpop.f32.mrf.mxu0
    %v5071 = vadd.f32 %v4165, %v5070
    %v5072 = vpop.f32.mrf.mxu0
    %v5073 = vadd.f32 %v4169, %v5072
    %v5074 = vpop.f32.mrf.mxu0
    %v5075 = vadd.f32 %v4165, %v5074
    %v5076 = vpop.f32.mrf.mxu0
    %v5077 = vadd.f32 %v4169, %v5076
    %5078 = vmatprep.mubr.bf16.mxu0 %v4009
    %5079 = vmatmul.mubr.bf16.gmra.mxu0 %v4008
    %v5080 = vpop.f32.mrf.mxu0
    %v5081 = vadd.f32 %v4165, %v5080
    %v5082 = vpop.f32.mrf.mxu0
    %v5083 = vadd.f32 %v4169, %v5082
    %v5084 = vpop.f32.mrf.mxu0
    %v5085 = vadd.f32 %v4165, %v5084
    %v5086 = vpop.f32.mrf.mxu0
    %v5087 = vadd.f32 %v4169, %v5086
    %5088 = vmatprep.mubr.bf16.mxu0 %v4013
    %5089 = vmatmul.mubr.bf16.gmra.mxu0 %v4012
    %v5090 = vpop.f32.mrf.mxu0
    %v5091 = vadd.f32 %v4165, %v5090
    %v5092 = vpop.f32.mrf.mxu0
    %v5093 = vadd.f32 %v4169, %v5092
    %v5094 = vpop.f32.mrf.mxu0
    %v5095 = vadd.f32 %v4165, %v5094
    %v5096 = vpop.f32.mrf.mxu0
    %v5097 = vadd.f32 %v4169, %v5096
    %5098 = vmatprep.mubr.bf16.mxu0 %v4017
    %5099 = vmatmul.mubr.bf16.gmra.mxu0 %v4016
    %v5100 = vpop.f32.mrf.mxu0
    %v5101 = vadd.f32 %v4165, %v5100
    %v5102 = vpop.f32.mrf.mxu0
    %v5103 = vadd.f32 %v4169, %v5102
    %v5104 = vpop.f32.mrf.mxu0
    %v5105 = vadd.f32 %v4165, %v5104
    %v5106 = vpop.f32.mrf.mxu0
    %v5107 = vadd.f32 %v4169, %v5106
    %5108 = vmatprep.mubr.bf16.mxu0 %v4021
    %5109 = vmatmul.mubr.bf16.gmra.mxu0 %v4020
    %v5110 = vpop.f32.mrf.mxu0
    %v5111 = vadd.f32 %v4165, %v5110
    %v5112 = vpop.f32.mrf.mxu0
    %v5113 = vadd.f32 %v4169, %v5112
    %v5114 = vpop.f32.mrf.mxu0
    %v5115 = vpop.f32.mrf.mxu0
    %5116 = vdwg.mxu0
    %5117 = vmatprep.subr.bf16.mxu0 %v4653
    %5118 = vmatpush1.bf16.msra.mxu0 %v4652
    %5119 = vmatprep.subr.bf16.mxu0 %v4649
    %5120 = vmatpush1.bf16.msra.mxu0 %v4648
    %5121 = vmatprep.subr.bf16.mxu0 %v4645
    %5122 = vmatpush1.bf16.msra.mxu0 %v4644
    %5123 = vmatprep.subr.bf16.mxu0 %v4641
    %5124 = vmatpush1.bf16.msra.mxu0 %v4640
    %5125 = vmatprep.subr.bf16.mxu0 %v4637
    %5126 = vmatpush1.bf16.msra.mxu0 %v4636
    %5127 = vmatprep.subr.bf16.mxu0 %v4633
    %5128 = vmatpush1.bf16.msra.mxu0 %v4632
    %5129 = vmatprep.subr.bf16.mxu0 %v4629
    %5130 = vmatpush1.bf16.msra.mxu0 %v4628
    %5131 = vmatprep.subr.bf16.mxu0 %v4625
    %5132 = vmatpush1.bf16.msra.mxu0 %v4624
    %5133 = vmatprep.subr.bf16.mxu0 %v4685
    %5134 = vmatpush2.bf16.msra.mxu0 %v4684
    %5135 = vmatprep.subr.bf16.mxu0 %v4681
    %5136 = vmatpush2.bf16.msra.mxu0 %v4680
    %5137 = vmatprep.subr.bf16.mxu0 %v4677
    %5138 = vmatpush2.bf16.msra.mxu0 %v4676
    %5139 = vmatprep.subr.bf16.mxu0 %v4673
    %5140 = vmatpush2.bf16.msra.mxu0 %v4672
    %5141 = vmatprep.subr.bf16.mxu0 %v4669
    %5142 = vmatpush2.bf16.msra.mxu0 %v4668
    %5143 = vmatprep.subr.bf16.mxu0 %v4665
    %5144 = vmatpush2.bf16.msra.mxu0 %v4664
    %5145 = vmatprep.subr.bf16.mxu0 %v4661
    %5146 = vmatpush2.bf16.msra.mxu0 %v4660
    %5147 = vmatprep.subr.bf16.mxu0 %v4657
    %5148 = vmatpush2.bf16.msra.mxu0 %v4656
    %5149 = vmatprep.mubr.bf16.mxu0 %v3999
    %5150 = vmatmul.mubr.bf16.gmra.mxu0 %v3998
    %v5151 = vpop.f32.mrf.mxu0
    %v5152 = vadd.f32 %v5051, %v5151
    %v5153 = vpop.f32.mrf.mxu0
    %v5154 = vadd.f32 %v5053, %v5153
    %v5155 = vpop.f32.mrf.mxu0
    %v5156 = vadd.f32 %v5055, %v5155
    %v5157 = vpop.f32.mrf.mxu0
    %v5158 = vadd.f32 %v5057, %v5157
    %5159 = vmatprep.mubr.bf16.mxu0 %v4003
    %5160 = vmatmul.mubr.bf16.gmra.mxu0 %v4002
    %v5161 = vpop.f32.mrf.mxu0
    %v5162 = vadd.f32 %v5061, %v5161
    %v5163 = vpop.f32.mrf.mxu0
    %v5164 = vadd.f32 %v5063, %v5163
    %v5165 = vpop.f32.mrf.mxu0
    %v5166 = vadd.f32 %v5065, %v5165
    %v5167 = vpop.f32.mrf.mxu0
    %v5168 = vadd.f32 %v5067, %v5167
    %5169 = vmatprep.mubr.bf16.mxu0 %v4007
    %5170 = vmatmul.mubr.bf16.gmra.mxu0 %v4006
    %v5171 = vpop.f32.mrf.mxu0
    %v5172 = vadd.f32 %v5071, %v5171
    %v5173 = vpop.f32.mrf.mxu0
    %v5174 = vadd.f32 %v5073, %v5173
    %v5175 = vpop.f32.mrf.mxu0
    %v5176 = vadd.f32 %v5075, %v5175
    %v5177 = vpop.f32.mrf.mxu0
    %v5178 = vadd.f32 %v5077, %v5177
    %5179 = vmatprep.mubr.bf16.mxu0 %v4011
    %5180 = vmatmul.mubr.bf16.gmra.mxu0 %v4010
    %v5181 = vpop.f32.mrf.mxu0
    %v5182 = vadd.f32 %v5081, %v5181
    %v5183 = vpop.f32.mrf.mxu0
    %v5184 = vadd.f32 %v5083, %v5183
    %v5185 = vpop.f32.mrf.mxu0
    %v5186 = vadd.f32 %v5085, %v5185
    %v5187 = vpop.f32.mrf.mxu0
    %v5188 = vadd.f32 %v5087, %v5187
    %5189 = vmatprep.mubr.bf16.mxu0 %v4015
    %5190 = vmatmul.mubr.bf16.gmra.mxu0 %v4014
    %v5191 = vpop.f32.mrf.mxu0
    %v5192 = vadd.f32 %v5091, %v5191
    %v5193 = vpop.f32.mrf.mxu0
    %v5194 = vadd.f32 %v5093, %v5193
    %v5195 = vpop.f32.mrf.mxu0
    %v5196 = vadd.f32 %v5095, %v5195
    %v5197 = vpop.f32.mrf.mxu0
    %v5198 = vadd.f32 %v5097, %v5197
    %5199 = vmatprep.mubr.bf16.mxu0 %v4019
    %5200 = vmatmul.mubr.bf16.gmra.mxu0 %v4018
    %v5201 = vpop.f32.mrf.mxu0
    %v5202 = vadd.f32 %v5101, %v5201
    %v5203 = vpop.f32.mrf.mxu0
    %v5204 = vadd.f32 %v5103, %v5203
    %v5205 = vpop.f32.mrf.mxu0
    %v5206 = vadd.f32 %v5105, %v5205
    %v5207 = vpop.f32.mrf.mxu0
    %v5208 = vadd.f32 %v5107, %v5207
    %5209 = vmatprep.mubr.bf16.mxu0 %v4023
    %5210 = vmatmul.mubr.bf16.gmra.mxu0 %v4022
    %v5211 = vpop.f32.mrf.mxu0
    %v5212 = vadd.f32 %v5111, %v5211
    %v5213 = vpop.f32.mrf.mxu0
    %v5214 = vadd.f32 %v5113, %v5213
    %v5215 = vpop.f32.mrf.mxu0
    %v5216 = vpop.f32.mrf.mxu0
    %5217 = vdwg.mxu0
    %v5218 = vld [vmem:[%s9] sm:$0xff]
    %v5219 = vld [vmem:[%s9 + $0x8] sm:$0xff]
    %v5220 = vld [vmem:[%s9 + $0x10] sm:$0xff]
    %v5221 = vld [vmem:[%s9 + $0x18] sm:$0xff]
    %v5222 = vld [vmem:[%s9 + $0x20] sm:$0xff]
    %v5223 = vld [vmem:[%s9 + $0x28] sm:$0xff]
    %v5224 = vld [vmem:[%s9 + $0x30] sm:$0xff]
    %v5225 = vld [vmem:[%s9 + $0x38] sm:$0xff]
    %v5226 = vld [vmem:[%s9 + $0x40] sm:$0xff]
    %v5227 = vld [vmem:[%s9 + $0x48] sm:$0xff]
    %v5228 = vld [vmem:[%s9 + $0x50] sm:$0xff]
    %v5229 = vld [vmem:[%s9 + $0x58] sm:$0xff]
    %v5230 = vld [vmem:[%s9 + $0x60] sm:$0xff]
    %v5231 = vld [vmem:[%s9 + $0x68] sm:$0xff]
    %v5232 = vld [vmem:[%s9 + $0x70] sm:$0xff]
    %v5233 = vld [vmem:[%s9 + $0x78] sm:$0xff]
    %v5234 = vld [vmem:[%s9 + $0x80] sm:$0xff]
    %v5235 = vld [vmem:[%s9 + $0x88] sm:$0xff]
    %v5236 = vld [vmem:[%s9 + $0x90] sm:$0xff]
    %v5237 = vld [vmem:[%s9 + $0x98] sm:$0xff]
    %v5238 = vld [vmem:[%s9 + $0xa0] sm:$0xff]
    %v5239 = vld [vmem:[%s9 + $0xa8] sm:$0xff]
    %v5240 = vld [vmem:[%s9 + $0xb0] sm:$0xff]
    %v5241 = vld [vmem:[%s9 + $0xb8] sm:$0xff]
    %v5242 = vld [vmem:[%s9 + $0xc0] sm:$0xff]
    %v5243 = vld [vmem:[%s9 + $0xc8] sm:$0xff]
    %v5244 = vld [vmem:[%s9 + $0xd0] sm:$0xff]
    %v5245 = vld [vmem:[%s9 + $0xd8] sm:$0xff]
    %v5246 = vld [vmem:[%s9 + $0xe0] sm:$0xff]
    %v5247 = vld [vmem:[%s9 + $0xe8] sm:$0xff]
    %v5248 = vld [vmem:[%s9 + $0xf0] sm:$0xff]
    %v5249 = vld [vmem:[%s9 + $0xf8] sm:$0xff]
    %v5250 = vld [vmem:[%s9 + $0x100] sm:$0xff]
    %v5251 = vld [vmem:[%s9 + $0x108] sm:$0xff]
    %v5252 = vld [vmem:[%s9 + $0x110] sm:$0xff]
    %v5253 = vld [vmem:[%s9 + $0x118] sm:$0xff]
    %v5254 = vld [vmem:[%s9 + $0x120] sm:$0xff]
    %v5255 = vld [vmem:[%s9 + $0x128] sm:$0xff]
    %v5256 = vld [vmem:[%s9 + $0x130] sm:$0xff]
    %v5257 = vld [vmem:[%s9 + $0x138] sm:$0xff]
    %v5258 = vld [vmem:[%s9 + $0x140] sm:$0xff]
    %v5259 = vld [vmem:[%s9 + $0x148] sm:$0xff]
    %v5260 = vld [vmem:[%s9 + $0x150] sm:$0xff]
    %v5261 = vld [vmem:[%s9 + $0x158] sm:$0xff]
    %v5262 = vld [vmem:[%s9 + $0x160] sm:$0xff]
    %v5263 = vld [vmem:[%s9 + $0x168] sm:$0xff]
    %v5264 = vld [vmem:[%s9 + $0x170] sm:$0xff]
    %v5265 = vld [vmem:[%s9 + $0x178] sm:$0xff]
    %v5266 = vld [vmem:[%s9 + $0x180] sm:$0xff]
    %v5267 = vld [vmem:[%s9 + $0x188] sm:$0xff]
    %v5268 = vld [vmem:[%s9 + $0x190] sm:$0xff]
    %v5269 = vld [vmem:[%s9 + $0x198] sm:$0xff]
    %v5270 = vld [vmem:[%s9 + $0x1a0] sm:$0xff]
    %v5271 = vld [vmem:[%s9 + $0x1a8] sm:$0xff]
    %v5272 = vld [vmem:[%s9 + $0x1b0] sm:$0xff]
    %v5273 = vld [vmem:[%s9 + $0x1b8] sm:$0xff]
    %v5274 = vld [vmem:[%s9 + $0x1c0] sm:$0xff]
    %v5275 = vld [vmem:[%s9 + $0x1c8] sm:$0xff]
    %v5276 = vld [vmem:[%s9 + $0x1d0] sm:$0xff]
    %v5277 = vld [vmem:[%s9 + $0x1d8] sm:$0xff]
    %v5278 = vld [vmem:[%s9 + $0x1e0] sm:$0xff]
    %v5279 = vld [vmem:[%s9 + $0x1e8] sm:$0xff]
    %v5280 = vld [vmem:[%s9 + $0x1f0] sm:$0xff]
    %v5281 = vld [vmem:[%s9 + $0x1f8] sm:$0xff]
    %v5282 = vld [vmem:[%s9 + $0x200] sm:$0xff]
    %v5283 = vld [vmem:[%s9 + $0x208] sm:$0xff]
    %v5284 = vld [vmem:[%s9 + $0x210] sm:$0xff]
    %v5285 = vld [vmem:[%s9 + $0x218] sm:$0xff]
    %v5286 = vld [vmem:[%s9 + $0x220] sm:$0xff]
    %v5287 = vld [vmem:[%s9 + $0x228] sm:$0xff]
    %v5288 = vld [vmem:[%s9 + $0x230] sm:$0xff]
    %v5289 = vld [vmem:[%s9 + $0x238] sm:$0xff]
    %v5290 = vld [vmem:[%s9 + $0x240] sm:$0xff]
    %v5291 = vld [vmem:[%s9 + $0x248] sm:$0xff]
    %v5292 = vld [vmem:[%s9 + $0x250] sm:$0xff]
    %v5293 = vld [vmem:[%s9 + $0x258] sm:$0xff]
    %v5294 = vld [vmem:[%s9 + $0x260] sm:$0xff]
    %v5295 = vld [vmem:[%s9 + $0x268] sm:$0xff]
    %v5296 = vld [vmem:[%s9 + $0x270] sm:$0xff]
    %v5297 = vld [vmem:[%s9 + $0x278] sm:$0xff]
    %v5298 = vld [vmem:[%s9 + $0x280] sm:$0xff]
    %v5299 = vld [vmem:[%s9 + $0x288] sm:$0xff]
    %v5300 = vld [vmem:[%s9 + $0x290] sm:$0xff]
    %v5301 = vld [vmem:[%s9 + $0x298] sm:$0xff]
    %v5302 = vld [vmem:[%s9 + $0x2a0] sm:$0xff]
    %v5303 = vld [vmem:[%s9 + $0x2a8] sm:$0xff]
    %v5304 = vld [vmem:[%s9 + $0x2b0] sm:$0xff]
    %v5305 = vld [vmem:[%s9 + $0x2b8] sm:$0xff]
    %v5306 = vld [vmem:[%s9 + $0x2c0] sm:$0xff]
    %v5307 = vld [vmem:[%s9 + $0x2c8] sm:$0xff]
    %v5308 = vld [vmem:[%s9 + $0x2d0] sm:$0xff]
    %v5309 = vld [vmem:[%s9 + $0x2d8] sm:$0xff]
    %v5310 = vld [vmem:[%s9 + $0x2e0] sm:$0xff]
    %v5311 = vld [vmem:[%s9 + $0x2e8] sm:$0xff]
    %v5312 = vld [vmem:[%s9 + $0x2f0] sm:$0xff]
    %v5313 = vld [vmem:[%s9 + $0x2f8] sm:$0xff]
    %v5314 = vld [vmem:[%s9 + $0x300] sm:$0xff]
    %v5315 = vld [vmem:[%s9 + $0x308] sm:$0xff]
    %v5316 = vld [vmem:[%s9 + $0x310] sm:$0xff]
    %v5317 = vld [vmem:[%s9 + $0x318] sm:$0xff]
    %v5318 = vld [vmem:[%s9 + $0x320] sm:$0xff]
    %v5319 = vld [vmem:[%s9 + $0x328] sm:$0xff]
    %v5320 = vld [vmem:[%s9 + $0x330] sm:$0xff]
    %v5321 = vld [vmem:[%s9 + $0x338] sm:$0xff]
    %v5322 = vld [vmem:[%s9 + $0x340] sm:$0xff]
    %v5323 = vld [vmem:[%s9 + $0x348] sm:$0xff]
    %v5324 = vld [vmem:[%s9 + $0x350] sm:$0xff]
    %v5325 = vld [vmem:[%s9 + $0x358] sm:$0xff]
    %v5326 = vld [vmem:[%s9 + $0x360] sm:$0xff]
    %v5327 = vld [vmem:[%s9 + $0x368] sm:$0xff]
    %v5328 = vld [vmem:[%s9 + $0x370] sm:$0xff]
    %v5329 = vld [vmem:[%s9 + $0x378] sm:$0xff]
    %v5330 = vld [vmem:[%s9 + $0x380] sm:$0xff]
    %v5331 = vld [vmem:[%s9 + $0x388] sm:$0xff]
    %v5332 = vld [vmem:[%s9 + $0x390] sm:$0xff]
    %v5333 = vld [vmem:[%s9 + $0x398] sm:$0xff]
    %v5334 = vld [vmem:[%s9 + $0x3a0] sm:$0xff]
    %v5335 = vld [vmem:[%s9 + $0x3a8] sm:$0xff]
    %v5336 = vld [vmem:[%s9 + $0x3b0] sm:$0xff]
    %v5337 = vld [vmem:[%s9 + $0x3b8] sm:$0xff]
    %v5338 = vld [vmem:[%s9 + $0x3c0] sm:$0xff]
    %v5339 = vld [vmem:[%s9 + $0x3c8] sm:$0xff]
    %v5340 = vld [vmem:[%s9 + $0x3d0] sm:$0xff]
    %v5341 = vld [vmem:[%s9 + $0x3d8] sm:$0xff]
    %v5342 = vld [vmem:[%s9 + $0x3e0] sm:$0xff]
    %v5343 = vld [vmem:[%s9 + $0x3e8] sm:$0xff]
    %v5344 = vld [vmem:[%s9 + $0x3f0] sm:$0xff]
    %v5345 = vld [vmem:[%s9 + $0x3f8] sm:$0xff]
    %v5346 = vld [vmem:[%s10] sm:$0xf]
    %v5348 = vlaneseq
    %v5349 = vshrl.u32 %v5348, 7
    %v5350 = vsub.s32 0, %v5349
    %v5351 = vrot.slane %v5346, %v5350
    %v5352 = vlaneseq
    %v5353 = vshrl.u32 %v5352, 7
    %v5354 = vsub.s32 1, %v5353
    %v5355 = vrot.slane %v5346, %v5354
    %v5356 = vlaneseq
    %v5357 = vshrl.u32 %v5356, 7
    %v5358 = vsub.s32 2, %v5357
    %v5359 = vrot.slane %v5346, %v5358
    %v5360 = vlaneseq
    %v5361 = vshrl.u32 %v5360, 7
    %v5362 = vsub.s32 3, %v5361
    %v5363 = vrot.slane %v5346, %v5362
    %v5496 = vunpack.c.l.b16 %v5218
    %v5497 = vunpack.c.h.b16 %v5218
    %v5498 = vunpack.c.l.b16 %v5219
    %v5499 = vunpack.c.h.b16 %v5219
    %v5500 = vunpack.c.l.b16 %v5220
    %v5501 = vunpack.c.h.b16 %v5220
    %v5502 = vunpack.c.l.b16 %v5221
    %v5503 = vunpack.c.h.b16 %v5221
    %v5504 = vunpack.c.l.b16 %v5222
    %v5505 = vunpack.c.h.b16 %v5222
    %v5506 = vunpack.c.l.b16 %v5223
    %v5507 = vunpack.c.h.b16 %v5223
    %v5508 = vunpack.c.l.b16 %v5224
    %v5509 = vunpack.c.h.b16 %v5224
    %v5510 = vunpack.c.l.b16 %v5225
    %v5511 = vunpack.c.h.b16 %v5225
    %v5512 = vunpack.c.l.b16 %v5226
    %v5513 = vunpack.c.h.b16 %v5226
    %v5514 = vunpack.c.l.b16 %v5227
    %v5515 = vunpack.c.h.b16 %v5227
    %v5516 = vunpack.c.l.b16 %v5228
    %v5517 = vunpack.c.h.b16 %v5228
    %v5518 = vunpack.c.l.b16 %v5229
    %v5519 = vunpack.c.h.b16 %v5229
    %v5520 = vunpack.c.l.b16 %v5230
    %v5521 = vunpack.c.h.b16 %v5230
    %v5522 = vunpack.c.l.b16 %v5231
    %v5523 = vunpack.c.h.b16 %v5231
    %v5524 = vunpack.c.l.b16 %v5232
    %v5525 = vunpack.c.h.b16 %v5232
    %v5526 = vunpack.c.l.b16 %v5233
    %v5527 = vunpack.c.h.b16 %v5233
    %v5528 = vunpack.c.l.b16 %v5234
    %v5529 = vunpack.c.h.b16 %v5234
    %v5530 = vunpack.c.l.b16 %v5235
    %v5531 = vunpack.c.h.b16 %v5235
    %v5532 = vunpack.c.l.b16 %v5236
    %v5533 = vunpack.c.h.b16 %v5236
    %v5534 = vunpack.c.l.b16 %v5237
    %v5535 = vunpack.c.h.b16 %v5237
    %v5536 = vunpack.c.l.b16 %v5238
    %v5537 = vunpack.c.h.b16 %v5238
    %v5538 = vunpack.c.l.b16 %v5239
    %v5539 = vunpack.c.h.b16 %v5239
    %v5540 = vunpack.c.l.b16 %v5240
    %v5541 = vunpack.c.h.b16 %v5240
    %v5542 = vunpack.c.l.b16 %v5241
    %v5543 = vunpack.c.h.b16 %v5241
    %v5544 = vunpack.c.l.b16 %v5242
    %v5545 = vunpack.c.h.b16 %v5242
    %v5546 = vunpack.c.l.b16 %v5243
    %v5547 = vunpack.c.h.b16 %v5243
    %v5548 = vunpack.c.l.b16 %v5244
    %v5549 = vunpack.c.h.b16 %v5244
    %v5550 = vunpack.c.l.b16 %v5245
    %v5551 = vunpack.c.h.b16 %v5245
    %v5552 = vunpack.c.l.b16 %v5246
    %v5553 = vunpack.c.h.b16 %v5246
    %v5554 = vunpack.c.l.b16 %v5247
    %v5555 = vunpack.c.h.b16 %v5247
    %v5556 = vunpack.c.l.b16 %v5248
    %v5557 = vunpack.c.h.b16 %v5248
    %v5558 = vunpack.c.l.b16 %v5249
    %v5559 = vunpack.c.h.b16 %v5249
    %v5560 = vunpack.c.l.b16 %v5250
    %v5561 = vunpack.c.h.b16 %v5250
    %v5562 = vunpack.c.l.b16 %v5251
    %v5563 = vunpack.c.h.b16 %v5251
    %v5564 = vunpack.c.l.b16 %v5252
    %v5565 = vunpack.c.h.b16 %v5252
    %v5566 = vunpack.c.l.b16 %v5253
    %v5567 = vunpack.c.h.b16 %v5253
    %v5568 = vunpack.c.l.b16 %v5254
    %v5569 = vunpack.c.h.b16 %v5254
    %v5570 = vunpack.c.l.b16 %v5255
    %v5571 = vunpack.c.h.b16 %v5255
    %v5572 = vunpack.c.l.b16 %v5256
    %v5573 = vunpack.c.h.b16 %v5256
    %v5574 = vunpack.c.l.b16 %v5257
    %v5575 = vunpack.c.h.b16 %v5257
    %v5576 = vunpack.c.l.b16 %v5258
    %v5577 = vunpack.c.h.b16 %v5258
    %v5578 = vunpack.c.l.b16 %v5259
    %v5579 = vunpack.c.h.b16 %v5259
    %v5580 = vunpack.c.l.b16 %v5260
    %v5581 = vunpack.c.h.b16 %v5260
    %v5582 = vunpack.c.l.b16 %v5261
    %v5583 = vunpack.c.h.b16 %v5261
    %v5584 = vunpack.c.l.b16 %v5262
    %v5585 = vunpack.c.h.b16 %v5262
    %v5586 = vunpack.c.l.b16 %v5263
    %v5587 = vunpack.c.h.b16 %v5263
    %v5588 = vunpack.c.l.b16 %v5264
    %v5589 = vunpack.c.h.b16 %v5264
    %v5590 = vunpack.c.l.b16 %v5265
    %v5591 = vunpack.c.h.b16 %v5265
    %v5592 = vunpack.c.l.b16 %v5266
    %v5593 = vunpack.c.h.b16 %v5266
    %v5594 = vunpack.c.l.b16 %v5267
    %v5595 = vunpack.c.h.b16 %v5267
    %v5596 = vunpack.c.l.b16 %v5268
    %v5597 = vunpack.c.h.b16 %v5268
    %v5598 = vunpack.c.l.b16 %v5269
    %v5599 = vunpack.c.h.b16 %v5269
    %v5600 = vunpack.c.l.b16 %v5270
    %v5601 = vunpack.c.h.b16 %v5270
    %v5602 = vunpack.c.l.b16 %v5271
    %v5603 = vunpack.c.h.b16 %v5271
    %v5604 = vunpack.c.l.b16 %v5272
    %v5605 = vunpack.c.h.b16 %v5272
    %v5606 = vunpack.c.l.b16 %v5273
    %v5607 = vunpack.c.h.b16 %v5273
    %v5608 = vunpack.c.l.b16 %v5274
    %v5609 = vunpack.c.h.b16 %v5274
    %v5610 = vunpack.c.l.b16 %v5275
    %v5611 = vunpack.c.h.b16 %v5275
    %v5612 = vunpack.c.l.b16 %v5276
    %v5613 = vunpack.c.h.b16 %v5276
    %v5614 = vunpack.c.l.b16 %v5277
    %v5615 = vunpack.c.h.b16 %v5277
    %v5616 = vunpack.c.l.b16 %v5278
    %v5617 = vunpack.c.h.b16 %v5278
    %v5618 = vunpack.c.l.b16 %v5279
    %v5619 = vunpack.c.h.b16 %v5279
    %v5620 = vunpack.c.l.b16 %v5280
    %v5621 = vunpack.c.h.b16 %v5280
    %v5622 = vunpack.c.l.b16 %v5281
    %v5623 = vunpack.c.h.b16 %v5281
    %v5624 = vunpack.c.l.b16 %v5282
    %v5625 = vunpack.c.h.b16 %v5282
    %v5626 = vunpack.c.l.b16 %v5283
    %v5627 = vunpack.c.h.b16 %v5283
    %v5628 = vunpack.c.l.b16 %v5284
    %v5629 = vunpack.c.h.b16 %v5284
    %v5630 = vunpack.c.l.b16 %v5285
    %v5631 = vunpack.c.h.b16 %v5285
    %v5632 = vunpack.c.l.b16 %v5286
    %v5633 = vunpack.c.h.b16 %v5286
    %v5634 = vunpack.c.l.b16 %v5287
    %v5635 = vunpack.c.h.b16 %v5287
    %v5636 = vunpack.c.l.b16 %v5288
    %v5637 = vunpack.c.h.b16 %v5288
    %v5638 = vunpack.c.l.b16 %v5289
    %v5639 = vunpack.c.h.b16 %v5289
    %v5640 = vunpack.c.l.b16 %v5290
    %v5641 = vunpack.c.h.b16 %v5290
    %v5642 = vunpack.c.l.b16 %v5291
    %v5643 = vunpack.c.h.b16 %v5291
    %v5644 = vunpack.c.l.b16 %v5292
    %v5645 = vunpack.c.h.b16 %v5292
    %v5646 = vunpack.c.l.b16 %v5293
    %v5647 = vunpack.c.h.b16 %v5293
    %v5648 = vunpack.c.l.b16 %v5294
    %v5649 = vunpack.c.h.b16 %v5294
    %v5650 = vunpack.c.l.b16 %v5295
    %v5651 = vunpack.c.h.b16 %v5295
    %v5652 = vunpack.c.l.b16 %v5296
    %v5653 = vunpack.c.h.b16 %v5296
    %v5654 = vunpack.c.l.b16 %v5297
    %v5655 = vunpack.c.h.b16 %v5297
    %v5656 = vunpack.c.l.b16 %v5298
    %v5657 = vunpack.c.h.b16 %v5298
    %v5658 = vunpack.c.l.b16 %v5299
    %v5659 = vunpack.c.h.b16 %v5299
    %v5660 = vunpack.c.l.b16 %v5300
    %v5661 = vunpack.c.h.b16 %v5300
    %v5662 = vunpack.c.l.b16 %v5301
    %v5663 = vunpack.c.h.b16 %v5301
    %v5664 = vunpack.c.l.b16 %v5302
    %v5665 = vunpack.c.h.b16 %v5302
    %v5666 = vunpack.c.l.b16 %v5303
    %v5667 = vunpack.c.h.b16 %v5303
    %v5668 = vunpack.c.l.b16 %v5304
    %v5669 = vunpack.c.h.b16 %v5304
    %v5670 = vunpack.c.l.b16 %v5305
    %v5671 = vunpack.c.h.b16 %v5305
    %v5672 = vunpack.c.l.b16 %v5306
    %v5673 = vunpack.c.h.b16 %v5306
    %v5674 = vunpack.c.l.b16 %v5307
    %v5675 = vunpack.c.h.b16 %v5307
    %v5676 = vunpack.c.l.b16 %v5308
    %v5677 = vunpack.c.h.b16 %v5308
    %v5678 = vunpack.c.l.b16 %v5309
    %v5679 = vunpack.c.h.b16 %v5309
    %v5680 = vunpack.c.l.b16 %v5310
    %v5681 = vunpack.c.h.b16 %v5310
    %v5682 = vunpack.c.l.b16 %v5311
    %v5683 = vunpack.c.h.b16 %v5311
    %v5684 = vunpack.c.l.b16 %v5312
    %v5685 = vunpack.c.h.b16 %v5312
    %v5686 = vunpack.c.l.b16 %v5313
    %v5687 = vunpack.c.h.b16 %v5313
    %v5688 = vunpack.c.l.b16 %v5314
    %v5689 = vunpack.c.h.b16 %v5314
    %v5690 = vunpack.c.l.b16 %v5315
    %v5691 = vunpack.c.h.b16 %v5315
    %v5692 = vunpack.c.l.b16 %v5316
    %v5693 = vunpack.c.h.b16 %v5316
    %v5694 = vunpack.c.l.b16 %v5317
    %v5695 = vunpack.c.h.b16 %v5317
    %v5696 = vunpack.c.l.b16 %v5318
    %v5697 = vunpack.c.h.b16 %v5318
    %v5698 = vunpack.c.l.b16 %v5319
    %v5699 = vunpack.c.h.b16 %v5319
    %v5700 = vunpack.c.l.b16 %v5320
    %v5701 = vunpack.c.h.b16 %v5320
    %v5702 = vunpack.c.l.b16 %v5321
    %v5703 = vunpack.c.h.b16 %v5321
    %v5704 = vunpack.c.l.b16 %v5322
    %v5705 = vunpack.c.h.b16 %v5322
    %v5706 = vunpack.c.l.b16 %v5323
    %v5707 = vunpack.c.h.b16 %v5323
    %v5708 = vunpack.c.l.b16 %v5324
    %v5709 = vunpack.c.h.b16 %v5324
    %v5710 = vunpack.c.l.b16 %v5325
    %v5711 = vunpack.c.h.b16 %v5325
    %v5712 = vunpack.c.l.b16 %v5326
    %v5713 = vunpack.c.h.b16 %v5326
    %v5714 = vunpack.c.l.b16 %v5327
    %v5715 = vunpack.c.h.b16 %v5327
    %v5716 = vunpack.c.l.b16 %v5328
    %v5717 = vunpack.c.h.b16 %v5328
    %v5718 = vunpack.c.l.b16 %v5329
    %v5719 = vunpack.c.h.b16 %v5329
    %v5720 = vunpack.c.l.b16 %v5330
    %v5721 = vunpack.c.h.b16 %v5330
    %v5722 = vunpack.c.l.b16 %v5331
    %v5723 = vunpack.c.h.b16 %v5331
    %v5724 = vunpack.c.l.b16 %v5332
    %v5725 = vunpack.c.h.b16 %v5332
    %v5726 = vunpack.c.l.b16 %v5333
    %v5727 = vunpack.c.h.b16 %v5333
    %v5728 = vunpack.c.l.b16 %v5334
    %v5729 = vunpack.c.h.b16 %v5334
    %v5730 = vunpack.c.l.b16 %v5335
    %v5731 = vunpack.c.h.b16 %v5335
    %v5732 = vunpack.c.l.b16 %v5336
    %v5733 = vunpack.c.h.b16 %v5336
    %v5734 = vunpack.c.l.b16 %v5337
    %v5735 = vunpack.c.h.b16 %v5337
    %v5736 = vunpack.c.l.b16 %v5338
    %v5737 = vunpack.c.h.b16 %v5338
    %v5738 = vunpack.c.l.b16 %v5339
    %v5739 = vunpack.c.h.b16 %v5339
    %v5740 = vunpack.c.l.b16 %v5340
    %v5741 = vunpack.c.h.b16 %v5340
    %v5742 = vunpack.c.l.b16 %v5341
    %v5743 = vunpack.c.h.b16 %v5341
    %v5744 = vunpack.c.l.b16 %v5342
    %v5745 = vunpack.c.h.b16 %v5342
    %v5746 = vunpack.c.l.b16 %v5343
    %v5747 = vunpack.c.h.b16 %v5343
    %v5748 = vunpack.c.l.b16 %v5344
    %v5749 = vunpack.c.h.b16 %v5344
    %v5750 = vunpack.c.l.b16 %v5345
    %v5751 = vunpack.c.h.b16 %v5345
    %v5752 = vpack.c.b16 %v5500, %v5496
    %v5753 = vpack.c.b16 %v5501, %v5497
    %v5754 = vpack.c.b16 %v5502, %v5498
    %v5755 = vpack.c.b16 %v5503, %v5499
    %v5756 = vpack.c.b16 %v5508, %v5504
    %v5757 = vpack.c.b16 %v5509, %v5505
    %v5758 = vpack.c.b16 %v5510, %v5506
    %v5759 = vpack.c.b16 %v5511, %v5507
    %v5760 = vpack.c.b16 %v5516, %v5512
    %v5761 = vpack.c.b16 %v5517, %v5513
    %v5762 = vpack.c.b16 %v5518, %v5514
    %v5763 = vpack.c.b16 %v5519, %v5515
    %v5764 = vpack.c.b16 %v5524, %v5520
    %v5765 = vpack.c.b16 %v5525, %v5521
    %v5766 = vpack.c.b16 %v5526, %v5522
    %v5767 = vpack.c.b16 %v5527, %v5523
    %v5768 = vpack.c.b16 %v5532, %v5528
    %v5769 = vpack.c.b16 %v5533, %v5529
    %v5770 = vpack.c.b16 %v5534, %v5530
    %v5771 = vpack.c.b16 %v5535, %v5531
    %v5772 = vpack.c.b16 %v5540, %v5536
    %v5773 = vpack.c.b16 %v5541, %v5537
    %v5774 = vpack.c.b16 %v5542, %v5538
    %v5775 = vpack.c.b16 %v5543, %v5539
    %v5776 = vpack.c.b16 %v5548, %v5544
    %v5777 = vpack.c.b16 %v5549, %v5545
    %v5778 = vpack.c.b16 %v5550, %v5546
    %v5779 = vpack.c.b16 %v5551, %v5547
    %v5780 = vpack.c.b16 %v5556, %v5552
    %v5781 = vpack.c.b16 %v5557, %v5553
    %v5782 = vpack.c.b16 %v5558, %v5554
    %v5783 = vpack.c.b16 %v5559, %v5555
    %v5784 = vpack.c.b16 %v5564, %v5560
    %v5785 = vpack.c.b16 %v5565, %v5561
    %v5786 = vpack.c.b16 %v5566, %v5562
    %v5787 = vpack.c.b16 %v5567, %v5563
    %v5788 = vpack.c.b16 %v5572, %v5568
    %v5789 = vpack.c.b16 %v5573, %v5569
    %v5790 = vpack.c.b16 %v5574, %v5570
    %v5791 = vpack.c.b16 %v5575, %v5571
    %v5792 = vpack.c.b16 %v5580, %v5576
    %v5793 = vpack.c.b16 %v5581, %v5577
    %v5794 = vpack.c.b16 %v5582, %v5578
    %v5795 = vpack.c.b16 %v5583, %v5579
    %v5796 = vpack.c.b16 %v5588, %v5584
    %v5797 = vpack.c.b16 %v5589, %v5585
    %v5798 = vpack.c.b16 %v5590, %v5586
    %v5799 = vpack.c.b16 %v5591, %v5587
    %v5800 = vpack.c.b16 %v5596, %v5592
    %v5801 = vpack.c.b16 %v5597, %v5593
    %v5802 = vpack.c.b16 %v5598, %v5594
    %v5803 = vpack.c.b16 %v5599, %v5595
    %v5804 = vpack.c.b16 %v5604, %v5600
    %v5805 = vpack.c.b16 %v5605, %v5601
    %v5806 = vpack.c.b16 %v5606, %v5602
    %v5807 = vpack.c.b16 %v5607, %v5603
    %v5808 = vpack.c.b16 %v5612, %v5608
    %v5809 = vpack.c.b16 %v5613, %v5609
    %v5810 = vpack.c.b16 %v5614, %v5610
    %v5811 = vpack.c.b16 %v5615, %v5611
    %v5812 = vpack.c.b16 %v5620, %v5616
    %v5813 = vpack.c.b16 %v5621, %v5617
    %v5814 = vpack.c.b16 %v5622, %v5618
    %v5815 = vpack.c.b16 %v5623, %v5619
    %v5816 = vpack.c.b16 %v5628, %v5624
    %v5817 = vpack.c.b16 %v5629, %v5625
    %v5818 = vpack.c.b16 %v5630, %v5626
    %v5819 = vpack.c.b16 %v5631, %v5627
    %v5820 = vpack.c.b16 %v5636, %v5632
    %v5821 = vpack.c.b16 %v5637, %v5633
    %v5822 = vpack.c.b16 %v5638, %v5634
    %v5823 = vpack.c.b16 %v5639, %v5635
    %v5824 = vpack.c.b16 %v5644, %v5640
    %v5825 = vpack.c.b16 %v5645, %v5641
    %v5826 = vpack.c.b16 %v5646, %v5642
    %v5827 = vpack.c.b16 %v5647, %v5643
    %v5828 = vpack.c.b16 %v5652, %v5648
    %v5829 = vpack.c.b16 %v5653, %v5649
    %v5830 = vpack.c.b16 %v5654, %v5650
    %v5831 = vpack.c.b16 %v5655, %v5651
    %v5832 = vpack.c.b16 %v5660, %v5656
    %v5833 = vpack.c.b16 %v5661, %v5657
    %v5834 = vpack.c.b16 %v5662, %v5658
    %v5835 = vpack.c.b16 %v5663, %v5659
    %v5836 = vpack.c.b16 %v5668, %v5664
    %v5837 = vpack.c.b16 %v5669, %v5665
    %v5838 = vpack.c.b16 %v5670, %v5666
    %v5839 = vpack.c.b16 %v5671, %v5667
    %v5840 = vpack.c.b16 %v5676, %v5672
    %v5841 = vpack.c.b16 %v5677, %v5673
    %v5842 = vpack.c.b16 %v5678, %v5674
    %v5843 = vpack.c.b16 %v5679, %v5675
    %v5844 = vpack.c.b16 %v5684, %v5680
    %v5845 = vpack.c.b16 %v5685, %v5681
    %v5846 = vpack.c.b16 %v5686, %v5682
    %v5847 = vpack.c.b16 %v5687, %v5683
    %v5848 = vpack.c.b16 %v5692, %v5688
    %v5849 = vpack.c.b16 %v5693, %v5689
    %v5850 = vpack.c.b16 %v5694, %v5690
    %v5851 = vpack.c.b16 %v5695, %v5691
    %v5852 = vpack.c.b16 %v5700, %v5696
    %v5853 = vpack.c.b16 %v5701, %v5697
    %v5854 = vpack.c.b16 %v5702, %v5698
    %v5855 = vpack.c.b16 %v5703, %v5699
    %v5856 = vpack.c.b16 %v5708, %v5704
    %v5857 = vpack.c.b16 %v5709, %v5705
    %v5858 = vpack.c.b16 %v5710, %v5706
    %v5859 = vpack.c.b16 %v5711, %v5707
    %v5860 = vpack.c.b16 %v5716, %v5712
    %v5861 = vpack.c.b16 %v5717, %v5713
    %v5862 = vpack.c.b16 %v5718, %v5714
    %v5863 = vpack.c.b16 %v5719, %v5715
    %v5864 = vpack.c.b16 %v5724, %v5720
    %v5865 = vpack.c.b16 %v5725, %v5721
    %v5866 = vpack.c.b16 %v5726, %v5722
    %v5867 = vpack.c.b16 %v5727, %v5723
    %v5868 = vpack.c.b16 %v5732, %v5728
    %v5869 = vpack.c.b16 %v5733, %v5729
    %v5870 = vpack.c.b16 %v5734, %v5730
    %v5871 = vpack.c.b16 %v5735, %v5731
    %v5872 = vpack.c.b16 %v5740, %v5736
    %v5873 = vpack.c.b16 %v5741, %v5737
    %v5874 = vpack.c.b16 %v5742, %v5738
    %v5875 = vpack.c.b16 %v5743, %v5739
    %v5876 = vpack.c.b16 %v5748, %v5744
    %v5877 = vpack.c.b16 %v5749, %v5745
    %v5878 = vpack.c.b16 %v5750, %v5746
    %v5879 = vpack.c.b16 %v5751, %v5747
    %6008 = vmatprep.subr.bf16.mxu0 %v5781
    %6009 = vmatpush1.bf16.msra.mxu0 %v5780
    %6010 = vmatprep.subr.bf16.mxu0 %v5777
    %6011 = vmatpush1.bf16.msra.mxu0 %v5776
    %6012 = vmatprep.subr.bf16.mxu0 %v5773
    %6013 = vmatpush1.bf16.msra.mxu0 %v5772
    %6014 = vmatprep.subr.bf16.mxu0 %v5769
    %6015 = vmatpush1.bf16.msra.mxu0 %v5768
    %6016 = vmatprep.subr.bf16.mxu0 %v5765
    %6017 = vmatpush1.bf16.msra.mxu0 %v5764
    %6018 = vmatprep.subr.bf16.mxu0 %v5761
    %6019 = vmatpush1.bf16.msra.mxu0 %v5760
    %6020 = vmatprep.subr.bf16.mxu0 %v5757
    %6021 = vmatpush1.bf16.msra.mxu0 %v5756
    %6022 = vmatprep.subr.bf16.mxu0 %v5753
    %6023 = vmatpush1.bf16.msra.mxu0 %v5752
    %6024 = vmatprep.subr.bf16.mxu0 %v5813
    %6025 = vmatpush2.bf16.msra.mxu0 %v5812
    %6026 = vmatprep.subr.bf16.mxu0 %v5809
    %6027 = vmatpush2.bf16.msra.mxu0 %v5808
    %6028 = vmatprep.subr.bf16.mxu0 %v5805
    %6029 = vmatpush2.bf16.msra.mxu0 %v5804
    %6030 = vmatprep.subr.bf16.mxu0 %v5801
    %6031 = vmatpush2.bf16.msra.mxu0 %v5800
    %6032 = vmatprep.subr.bf16.mxu0 %v5797
    %6033 = vmatpush2.bf16.msra.mxu0 %v5796
    %6034 = vmatprep.subr.bf16.mxu0 %v5793
    %6035 = vmatpush2.bf16.msra.mxu0 %v5792
    %6036 = vmatprep.subr.bf16.mxu0 %v5789
    %6037 = vmatpush2.bf16.msra.mxu0 %v5788
    %6038 = vmatprep.subr.bf16.mxu0 %v5785
    %6039 = vmatpush2.bf16.msra.mxu0 %v5784
    %6040 = vmatprep.mubr.bf16.mxu0 %v3997
    %6041 = vmatmul.mubr.bf16.gmra.mxu0 %v3996
    %v6042 = vpop.f32.mrf.mxu0
    %v6043 = vadd.f32 %v5351, %v6042
    %v6044 = vpop.f32.mrf.mxu0
    %v6045 = vadd.f32 %v5355, %v6044
    %v6046 = vpop.f32.mrf.mxu0
    %v6047 = vadd.f32 %v5351, %v6046
    %v6048 = vpop.f32.mrf.mxu0
    %v6049 = vadd.f32 %v5355, %v6048
    %6050 = vmatprep.mubr.bf16.mxu0 %v4001
    %6051 = vmatmul.mubr.bf16.gmra.mxu0 %v4000
    %v6052 = vpop.f32.mrf.mxu0
    %v6053 = vadd.f32 %v5351, %v6052
    %v6054 = vpop.f32.mrf.mxu0
    %v6055 = vadd.f32 %v5355, %v6054
    %v6056 = vpop.f32.mrf.mxu0
    %v6057 = vadd.f32 %v5351, %v6056
    %v6058 = vpop.f32.mrf.mxu0
    %v6059 = vadd.f32 %v5355, %v6058
    %6060 = vmatprep.mubr.bf16.mxu0 %v4005
    %6061 = vmatmul.mubr.bf16.gmra.mxu0 %v4004
    %v6062 = vpop.f32.mrf.mxu0
    %v6063 = vadd.f32 %v5351, %v6062
    %v6064 = vpop.f32.mrf.mxu0
    %v6065 = vadd.f32 %v5355, %v6064
    %v6066 = vpop.f32.mrf.mxu0
    %v6067 = vadd.f32 %v5351, %v6066
    %v6068 = vpop.f32.mrf.mxu0
    %v6069 = vadd.f32 %v5355, %v6068
    %6070 = vmatprep.mubr.bf16.mxu0 %v4009
    %6071 = vmatmul.mubr.bf16.gmra.mxu0 %v4008
    %v6072 = vpop.f32.mrf.mxu0
    %v6073 = vadd.f32 %v5351, %v6072
    %v6074 = vpop.f32.mrf.mxu0
    %v6075 = vadd.f32 %v5355, %v6074
    %v6076 = vpop.f32.mrf.mxu0
    %v6077 = vadd.f32 %v5351, %v6076
    %v6078 = vpop.f32.mrf.mxu0
    %v6079 = vadd.f32 %v5355, %v6078
    %6080 = vmatprep.mubr.bf16.mxu0 %v4013
    %6081 = vmatmul.mubr.bf16.gmra.mxu0 %v4012
    %v6082 = vpop.f32.mrf.mxu0
    %v6083 = vadd.f32 %v5351, %v6082
    %v6084 = vpop.f32.mrf.mxu0
    %v6085 = vadd.f32 %v5355, %v6084
    %v6086 = vpop.f32.mrf.mxu0
    %v6087 = vadd.f32 %v5351, %v6086
    %v6088 = vpop.f32.mrf.mxu0
    %v6089 = vadd.f32 %v5355, %v6088
    %6090 = vmatprep.mubr.bf16.mxu0 %v4017
    %6091 = vmatmul.mubr.bf16.gmra.mxu0 %v4016
    %v6092 = vpop.f32.mrf.mxu0
    %v6093 = vadd.f32 %v5351, %v6092
    %v6094 = vpop.f32.mrf.mxu0
    %v6095 = vadd.f32 %v5355, %v6094
    %v6096 = vpop.f32.mrf.mxu0
    %v6097 = vadd.f32 %v5351, %v6096
    %v6098 = vpop.f32.mrf.mxu0
    %v6099 = vadd.f32 %v5355, %v6098
    %6100 = vmatprep.mubr.bf16.mxu0 %v4021
    %6101 = vmatmul.mubr.bf16.gmra.mxu0 %v4020
    %v6102 = vpop.f32.mrf.mxu0
    %v6103 = vadd.f32 %v5351, %v6102
    %v6104 = vpop.f32.mrf.mxu0
    %v6105 = vadd.f32 %v5355, %v6104
    %v6106 = vpop.f32.mrf.mxu0
    %v6107 = vpop.f32.mrf.mxu0
    %6108 = vdwg.mxu0
    %6109 = vmatprep.subr.bf16.mxu0 %v5845
    %6110 = vmatpush1.bf16.msra.mxu0 %v5844
    %6111 = vmatprep.subr.bf16.mxu0 %v5841
    %6112 = vmatpush1.bf16.msra.mxu0 %v5840
    %6113 = vmatprep.subr.bf16.mxu0 %v5837
    %6114 = vmatpush1.bf16.msra.mxu0 %v5836
    %6115 = vmatprep.subr.bf16.mxu0 %v5833
    %6116 = vmatpush1.bf16.msra.mxu0 %v5832
    %6117 = vmatprep.subr.bf16.mxu0 %v5829
    %6118 = vmatpush1.bf16.msra.mxu0 %v5828
    %6119 = vmatprep.subr.bf16.mxu0 %v5825
    %6120 = vmatpush1.bf16.msra.mxu0 %v5824
    %6121 = vmatprep.subr.bf16.mxu0 %v5821
    %6122 = vmatpush1.bf16.msra.mxu0 %v5820
    %6123 = vmatprep.subr.bf16.mxu0 %v5817
    %6124 = vmatpush1.bf16.msra.mxu0 %v5816
    %6125 = vmatprep.subr.bf16.mxu0 %v5877
    %6126 = vmatpush2.bf16.msra.mxu0 %v5876
    %6127 = vmatprep.subr.bf16.mxu0 %v5873
    %6128 = vmatpush2.bf16.msra.mxu0 %v5872
    %6129 = vmatprep.subr.bf16.mxu0 %v5869
    %6130 = vmatpush2.bf16.msra.mxu0 %v5868
    %6131 = vmatprep.subr.bf16.mxu0 %v5865
    %6132 = vmatpush2.bf16.msra.mxu0 %v5864
    %6133 = vmatprep.subr.bf16.mxu0 %v5861
    %6134 = vmatpush2.bf16.msra.mxu0 %v5860
    %6135 = vmatprep.subr.bf16.mxu0 %v5857
    %6136 = vmatpush2.bf16.msra.mxu0 %v5856
    %6137 = vmatprep.subr.bf16.mxu0 %v5853
    %6138 = vmatpush2.bf16.msra.mxu0 %v5852
    %6139 = vmatprep.subr.bf16.mxu0 %v5849
    %6140 = vmatpush2.bf16.msra.mxu0 %v5848
    %6141 = vmatprep.mubr.bf16.mxu0 %v3999
    %6142 = vmatmul.mubr.bf16.gmra.mxu0 %v3998
    %v6143 = vpop.f32.mrf.mxu0
    %v6144 = vadd.f32 %v6043, %v6143
    %v6145 = vpop.f32.mrf.mxu0
    %v6146 = vadd.f32 %v6045, %v6145
    %v6147 = vpop.f32.mrf.mxu0
    %v6148 = vadd.f32 %v6047, %v6147
    %v6149 = vpop.f32.mrf.mxu0
    %v6150 = vadd.f32 %v6049, %v6149
    %6151 = vmatprep.mubr.bf16.mxu0 %v4003
    %6152 = vmatmul.mubr.bf16.gmra.mxu0 %v4002
    %v6153 = vpop.f32.mrf.mxu0
    %v6154 = vadd.f32 %v6053, %v6153
    %v6155 = vpop.f32.mrf.mxu0
    %v6156 = vadd.f32 %v6055, %v6155
    %v6157 = vpop.f32.mrf.mxu0
    %v6158 = vadd.f32 %v6057, %v6157
    %v6159 = vpop.f32.mrf.mxu0
    %v6160 = vadd.f32 %v6059, %v6159
    %6161 = vmatprep.mubr.bf16.mxu0 %v4007
    %6162 = vmatmul.mubr.bf16.gmra.mxu0 %v4006
    %v6163 = vpop.f32.mrf.mxu0
    %v6164 = vadd.f32 %v6063, %v6163
    %v6165 = vpop.f32.mrf.mxu0
    %v6166 = vadd.f32 %v6065, %v6165
    %v6167 = vpop.f32.mrf.mxu0
    %v6168 = vadd.f32 %v6067, %v6167
    %v6169 = vpop.f32.mrf.mxu0
    %v6170 = vadd.f32 %v6069, %v6169
    %6171 = vmatprep.mubr.bf16.mxu0 %v4011
    %6172 = vmatmul.mubr.bf16.gmra.mxu0 %v4010
    %v6173 = vpop.f32.mrf.mxu0
    %v6174 = vadd.f32 %v6073, %v6173
    %v6175 = vpop.f32.mrf.mxu0
    %v6176 = vadd.f32 %v6075, %v6175
    %v6177 = vpop.f32.mrf.mxu0
    %v6178 = vadd.f32 %v6077, %v6177
    %v6179 = vpop.f32.mrf.mxu0
    %v6180 = vadd.f32 %v6079, %v6179
    %6181 = vmatprep.mubr.bf16.mxu0 %v4015
    %6182 = vmatmul.mubr.bf16.gmra.mxu0 %v4014
    %v6183 = vpop.f32.mrf.mxu0
    %v6184 = vadd.f32 %v6083, %v6183
    %v6185 = vpop.f32.mrf.mxu0
    %v6186 = vadd.f32 %v6085, %v6185
    %v6187 = vpop.f32.mrf.mxu0
    %v6188 = vadd.f32 %v6087, %v6187
    %v6189 = vpop.f32.mrf.mxu0
    %v6190 = vadd.f32 %v6089, %v6189
    %6191 = vmatprep.mubr.bf16.mxu0 %v4019
    %6192 = vmatmul.mubr.bf16.gmra.mxu0 %v4018
    %v6193 = vpop.f32.mrf.mxu0
    %v6194 = vadd.f32 %v6093, %v6193
    %v6195 = vpop.f32.mrf.mxu0
    %v6196 = vadd.f32 %v6095, %v6195
    %v6197 = vpop.f32.mrf.mxu0
    %v6198 = vadd.f32 %v6097, %v6197
    %v6199 = vpop.f32.mrf.mxu0
    %v6200 = vadd.f32 %v6099, %v6199
    %6201 = vmatprep.mubr.bf16.mxu0 %v4023
    %6202 = vmatmul.mubr.bf16.gmra.mxu0 %v4022
    %v6203 = vpop.f32.mrf.mxu0
    %v6204 = vadd.f32 %v6103, %v6203
    %v6205 = vpop.f32.mrf.mxu0
    %v6206 = vadd.f32 %v6105, %v6205
    %v6207 = vpop.f32.mrf.mxu0
    %v6208 = vpop.f32.mrf.mxu0
    %6209 = vdwg.mxu0
    %6210 = vmatprep.subr.bf16.mxu0 %v5783
    %6211 = vmatpush1.bf16.msra.mxu0 %v5782
    %6212 = vmatprep.subr.bf16.mxu0 %v5779
    %6213 = vmatpush1.bf16.msra.mxu0 %v5778
    %6214 = vmatprep.subr.bf16.mxu0 %v5775
    %6215 = vmatpush1.bf16.msra.mxu0 %v5774
    %6216 = vmatprep.subr.bf16.mxu0 %v5771
    %6217 = vmatpush1.bf16.msra.mxu0 %v5770
    %6218 = vmatprep.subr.bf16.mxu0 %v5767
    %6219 = vmatpush1.bf16.msra.mxu0 %v5766
    %6220 = vmatprep.subr.bf16.mxu0 %v5763
    %6221 = vmatpush1.bf16.msra.mxu0 %v5762
    %6222 = vmatprep.subr.bf16.mxu0 %v5759
    %6223 = vmatpush1.bf16.msra.mxu0 %v5758
    %6224 = vmatprep.subr.bf16.mxu0 %v5755
    %6225 = vmatpush1.bf16.msra.mxu0 %v5754
    %6226 = vmatprep.subr.bf16.mxu0 %v5815
    %6227 = vmatpush2.bf16.msra.mxu0 %v5814
    %6228 = vmatprep.subr.bf16.mxu0 %v5811
    %6229 = vmatpush2.bf16.msra.mxu0 %v5810
    %6230 = vmatprep.subr.bf16.mxu0 %v5807
    %6231 = vmatpush2.bf16.msra.mxu0 %v5806
    %6232 = vmatprep.subr.bf16.mxu0 %v5803
    %6233 = vmatpush2.bf16.msra.mxu0 %v5802
    %6234 = vmatprep.subr.bf16.mxu0 %v5799
    %6235 = vmatpush2.bf16.msra.mxu0 %v5798
    %6236 = vmatprep.subr.bf16.mxu0 %v5795
    %6237 = vmatpush2.bf16.msra.mxu0 %v5794
    %6238 = vmatprep.subr.bf16.mxu0 %v5791
    %6239 = vmatpush2.bf16.msra.mxu0 %v5790
    %6240 = vmatprep.subr.bf16.mxu0 %v5787
    %6241 = vmatpush2.bf16.msra.mxu0 %v5786
    %6242 = vmatprep.mubr.bf16.mxu0 %v3997
    %6243 = vmatmul.mubr.bf16.gmra.mxu0 %v3996
    %v6244 = vpop.f32.mrf.mxu0
    %v6245 = vadd.f32 %v5359, %v6244
    %v6246 = vpop.f32.mrf.mxu0
    %v6247 = vadd.f32 %v5363, %v6246
    %v6248 = vpop.f32.mrf.mxu0
    %v6249 = vadd.f32 %v5359, %v6248
    %v6250 = vpop.f32.mrf.mxu0
    %v6251 = vadd.f32 %v5363, %v6250
    %6252 = vmatprep.mubr.bf16.mxu0 %v4001
    %6253 = vmatmul.mubr.bf16.gmra.mxu0 %v4000
    %v6254 = vpop.f32.mrf.mxu0
    %v6255 = vadd.f32 %v5359, %v6254
    %v6256 = vpop.f32.mrf.mxu0
    %v6257 = vadd.f32 %v5363, %v6256
    %v6258 = vpop.f32.mrf.mxu0
    %v6259 = vadd.f32 %v5359, %v6258
    %v6260 = vpop.f32.mrf.mxu0
    %v6261 = vadd.f32 %v5363, %v6260
    %6262 = vmatprep.mubr.bf16.mxu0 %v4005
    %6263 = vmatmul.mubr.bf16.gmra.mxu0 %v4004
    %v6264 = vpop.f32.mrf.mxu0
    %v6265 = vadd.f32 %v5359, %v6264
    %v6266 = vpop.f32.mrf.mxu0
    %v6267 = vadd.f32 %v5363, %v6266
    %v6268 = vpop.f32.mrf.mxu0
    %v6269 = vadd.f32 %v5359, %v6268
    %v6270 = vpop.f32.mrf.mxu0
    %v6271 = vadd.f32 %v5363, %v6270
    %6272 = vmatprep.mubr.bf16.mxu0 %v4009
    %6273 = vmatmul.mubr.bf16.gmra.mxu0 %v4008
    %v6274 = vpop.f32.mrf.mxu0
    %v6275 = vadd.f32 %v5359, %v6274
    %v6276 = vpop.f32.mrf.mxu0
    %v6277 = vadd.f32 %v5363, %v6276
    %v6278 = vpop.f32.mrf.mxu0
    %v6279 = vadd.f32 %v5359, %v6278
    %v6280 = vpop.f32.mrf.mxu0
    %v6281 = vadd.f32 %v5363, %v6280
    %6282 = vmatprep.mubr.bf16.mxu0 %v4013
    %6283 = vmatmul.mubr.bf16.gmra.mxu0 %v4012
    %v6284 = vpop.f32.mrf.mxu0
    %v6285 = vadd.f32 %v5359, %v6284
    %v6286 = vpop.f32.mrf.mxu0
    %v6287 = vadd.f32 %v5363, %v6286
    %v6288 = vpop.f32.mrf.mxu0
    %v6289 = vadd.f32 %v5359, %v6288
    %v6290 = vpop.f32.mrf.mxu0
    %v6291 = vadd.f32 %v5363, %v6290
    %6292 = vmatprep.mubr.bf16.mxu0 %v4017
    %6293 = vmatmul.mubr.bf16.gmra.mxu0 %v4016
    %v6294 = vpop.f32.mrf.mxu0
    %v6295 = vadd.f32 %v5359, %v6294
    %v6296 = vpop.f32.mrf.mxu0
    %v6297 = vadd.f32 %v5363, %v6296
    %v6298 = vpop.f32.mrf.mxu0
    %v6299 = vadd.f32 %v5359, %v6298
    %v6300 = vpop.f32.mrf.mxu0
    %v6301 = vadd.f32 %v5363, %v6300
    %6302 = vmatprep.mubr.bf16.mxu0 %v4021
    %6303 = vmatmul.mubr.bf16.gmra.mxu0 %v4020
    %v6304 = vpop.f32.mrf.mxu0
    %v6305 = vadd.f32 %v5359, %v6304
    %v6306 = vpop.f32.mrf.mxu0
    %v6307 = vadd.f32 %v5363, %v6306
    %v6308 = vpop.f32.mrf.mxu0
    %v6309 = vpop.f32.mrf.mxu0
    %6310 = vdwg.mxu0
    %6311 = vmatprep.subr.bf16.mxu0 %v5847
    %6312 = vmatpush1.bf16.msra.mxu0 %v5846
    %6313 = vmatprep.subr.bf16.mxu0 %v5843
    %6314 = vmatpush1.bf16.msra.mxu0 %v5842
    %6315 = vmatprep.subr.bf16.mxu0 %v5839
    %6316 = vmatpush1.bf16.msra.mxu0 %v5838
    %6317 = vmatprep.subr.bf16.mxu0 %v5835
    %6318 = vmatpush1.bf16.msra.mxu0 %v5834
    %6319 = vmatprep.subr.bf16.mxu0 %v5831
    %6320 = vmatpush1.bf16.msra.mxu0 %v5830
    %6321 = vmatprep.subr.bf16.mxu0 %v5827
    %6322 = vmatpush1.bf16.msra.mxu0 %v5826
    %6323 = vmatprep.subr.bf16.mxu0 %v5823
    %6324 = vmatpush1.bf16.msra.mxu0 %v5822
    %6325 = vmatprep.subr.bf16.mxu0 %v5819
    %6326 = vmatpush1.bf16.msra.mxu0 %v5818
    %6327 = vmatprep.subr.bf16.mxu0 %v5879
    %6328 = vmatpush2.bf16.msra.mxu0 %v5878
    %6329 = vmatprep.subr.bf16.mxu0 %v5875
    %6330 = vmatpush2.bf16.msra.mxu0 %v5874
    %6331 = vmatprep.subr.bf16.mxu0 %v5871
    %6332 = vmatpush2.bf16.msra.mxu0 %v5870
    %6333 = vmatprep.subr.bf16.mxu0 %v5867
    %6334 = vmatpush2.bf16.msra.mxu0 %v5866
    %6335 = vmatprep.subr.bf16.mxu0 %v5863
    %6336 = vmatpush2.bf16.msra.mxu0 %v5862
    %6337 = vmatprep.subr.bf16.mxu0 %v5859
    %6338 = vmatpush2.bf16.msra.mxu0 %v5858
    %6339 = vmatprep.subr.bf16.mxu0 %v5855
    %6340 = vmatpush2.bf16.msra.mxu0 %v5854
    %6341 = vmatprep.subr.bf16.mxu0 %v5851
    %6342 = vmatpush2.bf16.msra.mxu0 %v5850
    %6343 = vmatprep.mubr.bf16.mxu0 %v3999
    %6344 = vmatmul.mubr.bf16.gmra.mxu0 %v3998
    %v6345 = vpop.f32.mrf.mxu0
    %v6346 = vadd.f32 %v6245, %v6345
    %v6347 = vpop.f32.mrf.mxu0
    %v6348 = vadd.f32 %v6247, %v6347
    %v6349 = vpop.f32.mrf.mxu0
    %v6350 = vadd.f32 %v6249, %v6349
    %v6351 = vpop.f32.mrf.mxu0
    %v6352 = vadd.f32 %v6251, %v6351
    %6353 = vmatprep.mubr.bf16.mxu0 %v4003
    %6354 = vmatmul.mubr.bf16.gmra.mxu0 %v4002
    %v6355 = vpop.f32.mrf.mxu0
    %v6356 = vadd.f32 %v6255, %v6355
    %v6357 = vpop.f32.mrf.mxu0
    %v6358 = vadd.f32 %v6257, %v6357
    %v6359 = vpop.f32.mrf.mxu0
    %v6360 = vadd.f32 %v6259, %v6359
    %v6361 = vpop.f32.mrf.mxu0
    %v6362 = vadd.f32 %v6261, %v6361
    %6363 = vmatprep.mubr.bf16.mxu0 %v4007
    %6364 = vmatmul.mubr.bf16.gmra.mxu0 %v4006
    %v6365 = vpop.f32.mrf.mxu0
    %v6366 = vadd.f32 %v6265, %v6365
    %v6367 = vpop.f32.mrf.mxu0
    %v6368 = vadd.f32 %v6267, %v6367
    %v6369 = vpop.f32.mrf.mxu0
    %v6370 = vadd.f32 %v6269, %v6369
    %v6371 = vpop.f32.mrf.mxu0
    %v6372 = vadd.f32 %v6271, %v6371
    %6373 = vmatprep.mubr.bf16.mxu0 %v4011
    %6374 = vmatmul.mubr.bf16.gmra.mxu0 %v4010
    %v6375 = vpop.f32.mrf.mxu0
    %v6376 = vadd.f32 %v6275, %v6375
    %v6377 = vpop.f32.mrf.mxu0
    %v6378 = vadd.f32 %v6277, %v6377
    %v6379 = vpop.f32.mrf.mxu0
    %v6380 = vadd.f32 %v6279, %v6379
    %v6381 = vpop.f32.mrf.mxu0
    %v6382 = vadd.f32 %v6281, %v6381
    %6383 = vmatprep.mubr.bf16.mxu0 %v4015
    %6384 = vmatmul.mubr.bf16.gmra.mxu0 %v4014
    %v6385 = vpop.f32.mrf.mxu0
    %v6386 = vadd.f32 %v6285, %v6385
    %v6387 = vpop.f32.mrf.mxu0
    %v6388 = vadd.f32 %v6287, %v6387
    %v6389 = vpop.f32.mrf.mxu0
    %v6390 = vadd.f32 %v6289, %v6389
    %v6391 = vpop.f32.mrf.mxu0
    %v6392 = vadd.f32 %v6291, %v6391
    %6393 = vmatprep.mubr.bf16.mxu0 %v4019
    %6394 = vmatmul.mubr.bf16.gmra.mxu0 %v4018
    %v6395 = vpop.f32.mrf.mxu0
    %v6396 = vadd.f32 %v6295, %v6395
    %v6397 = vpop.f32.mrf.mxu0
    %v6398 = vadd.f32 %v6297, %v6397
    %v6399 = vpop.f32.mrf.mxu0
    %v6400 = vadd.f32 %v6299, %v6399
    %v6401 = vpop.f32.mrf.mxu0
    %v6402 = vadd.f32 %v6301, %v6401
    %6403 = vmatprep.mubr.bf16.mxu0 %v4023
    %6404 = vmatmul.mubr.bf16.gmra.mxu0 %v4022
    %v6405 = vpop.f32.mrf.mxu0
    %v6406 = vadd.f32 %v6305, %v6405
    %v6407 = vpop.f32.mrf.mxu0
    %v6408 = vadd.f32 %v6307, %v6407
    %v6409 = vpop.f32.mrf.mxu0
    %v6410 = vpop.f32.mrf.mxu0
    %6411 = vdwg.mxu0
    %6412 = vst [vmem:[#allocation2] sm:$0xff] %v4950
    %6413 = vst [vmem:[#allocation2 + $0x8] sm:$0xff] %v4952
    %6414 = vst [vmem:[#allocation2 + $0x10] sm:$0xff] %v5152
    %6415 = vst [vmem:[#allocation2 + $0x18] sm:$0xff] %v5154
    %6416 = vst [vmem:[#allocation2 + $0x20] sm:$0xff] %v4954
    %6417 = vst [vmem:[#allocation2 + $0x28] sm:$0xff] %v4956
    %6418 = vst [vmem:[#allocation2 + $0x30] sm:$0xff] %v5156
    %6419 = vst [vmem:[#allocation2 + $0x38] sm:$0xff] %v5158
    %6420 = vst [vmem:[#allocation2 + $0x40] sm:$0xff] %v4960
    %6421 = vst [vmem:[#allocation2 + $0x48] sm:$0xff] %v4962
    %6422 = vst [vmem:[#allocation2 + $0x50] sm:$0xff] %v5162
    %6423 = vst [vmem:[#allocation2 + $0x58] sm:$0xff] %v5164
    %6424 = vst [vmem:[#allocation2 + $0x60] sm:$0xff] %v4964
    %6425 = vst [vmem:[#allocation2 + $0x68] sm:$0xff] %v4966
    %6426 = vst [vmem:[#allocation2 + $0x70] sm:$0xff] %v5166
    %6427 = vst [vmem:[#allocation2 + $0x78] sm:$0xff] %v5168
    %6428 = vst [vmem:[#allocation2 + $0x80] sm:$0xff] %v4970
    %6429 = vst [vmem:[#allocation2 + $0x88] sm:$0xff] %v4972
    %6430 = vst [vmem:[#allocation2 + $0x90] sm:$0xff] %v5172
    %6431 = vst [vmem:[#allocation2 + $0x98] sm:$0xff] %v5174
    %6432 = vst [vmem:[#allocation2 + $0xa0] sm:$0xff] %v4974
    %6433 = vst [vmem:[#allocation2 + $0xa8] sm:$0xff] %v4976
    %6434 = vst [vmem:[#allocation2 + $0xb0] sm:$0xff] %v5176
    %6435 = vst [vmem:[#allocation2 + $0xb8] sm:$0xff] %v5178
    %6436 = vst [vmem:[#allocation2 + $0xc0] sm:$0xff] %v4980
    %6437 = vst [vmem:[#allocation2 + $0xc8] sm:$0xff] %v4982
    %6438 = vst [vmem:[#allocation2 + $0xd0] sm:$0xff] %v5182
    %6439 = vst [vmem:[#allocation2 + $0xd8] sm:$0xff] %v5184
    %6440 = vst [vmem:[#allocation2 + $0xe0] sm:$0xff] %v4984
    %6441 = vst [vmem:[#allocation2 + $0xe8] sm:$0xff] %v4986
    %6442 = vst [vmem:[#allocation2 + $0xf0] sm:$0xff] %v5186
    %6443 = vst [vmem:[#allocation2 + $0xf8] sm:$0xff] %v5188
    %6444 = vst [vmem:[#allocation2 + $0x100] sm:$0xff] %v4990
    %6445 = vst [vmem:[#allocation2 + $0x108] sm:$0xff] %v4992
    %6446 = vst [vmem:[#allocation2 + $0x110] sm:$0xff] %v5192
    %6447 = vst [vmem:[#allocation2 + $0x118] sm:$0xff] %v5194
    %6448 = vst [vmem:[#allocation2 + $0x120] sm:$0xff] %v4994
    %6449 = vst [vmem:[#allocation2 + $0x128] sm:$0xff] %v4996
    %6450 = vst [vmem:[#allocation2 + $0x130] sm:$0xff] %v5196
    %6451 = vst [vmem:[#allocation2 + $0x138] sm:$0xff] %v5198
    %6452 = vst [vmem:[#allocation2 + $0x140] sm:$0xff] %v5000
    %6453 = vst [vmem:[#allocation2 + $0x148] sm:$0xff] %v5002
    %6454 = vst [vmem:[#allocation2 + $0x150] sm:$0xff] %v5202
    %6455 = vst [vmem:[#allocation2 + $0x158] sm:$0xff] %v5204
    %6456 = vst [vmem:[#allocation2 + $0x160] sm:$0xff] %v5004
    %6457 = vst [vmem:[#allocation2 + $0x168] sm:$0xff] %v5006
    %6458 = vst [vmem:[#allocation2 + $0x170] sm:$0xff] %v5206
    %6459 = vst [vmem:[#allocation2 + $0x178] sm:$0xff] %v5208
    %6460 = vst [vmem:[#allocation2 + $0x180] sm:$0xff] %v5010
    %6461 = vst [vmem:[#allocation2 + $0x188] sm:$0xff] %v5012
    %6462 = vst [vmem:[#allocation2 + $0x190] sm:$0xff] %v5212
    %6463 = vst [vmem:[#allocation2 + $0x198] sm:$0xff] %v5214
    %6464 = vst [vmem:[#allocation4] sm:$0xff] %v6144
    %6465 = vst [vmem:[#allocation4 + $0x8] sm:$0xff] %v6146
    %6466 = vst [vmem:[#allocation4 + $0x10] sm:$0xff] %v6346
    %6467 = vst [vmem:[#allocation4 + $0x18] sm:$0xff] %v6348
    %6468 = vst [vmem:[#allocation4 + $0x20] sm:$0xff] %v6148
    %6469 = vst [vmem:[#allocation4 + $0x28] sm:$0xff] %v6150
    %6470 = vst [vmem:[#allocation4 + $0x30] sm:$0xff] %v6350
    %6471 = vst [vmem:[#allocation4 + $0x38] sm:$0xff] %v6352
    %6472 = vst [vmem:[#allocation4 + $0x40] sm:$0xff] %v6154
    %6473 = vst [vmem:[#allocation4 + $0x48] sm:$0xff] %v6156
    %6474 = vst [vmem:[#allocation4 + $0x50] sm:$0xff] %v6356
    %6475 = vst [vmem:[#allocation4 + $0x58] sm:$0xff] %v6358
    %6476 = vst [vmem:[#allocation4 + $0x60] sm:$0xff] %v6158
    %6477 = vst [vmem:[#allocation4 + $0x68] sm:$0xff] %v6160
    %6478 = vst [vmem:[#allocation4 + $0x70] sm:$0xff] %v6360
    %6479 = vst [vmem:[#allocation4 + $0x78] sm:$0xff] %v6362
    %6480 = vst [vmem:[#allocation4 + $0x80] sm:$0xff] %v6164
    %6481 = vst [vmem:[#allocation4 + $0x88] sm:$0xff] %v6166
    %6482 = vst [vmem:[#allocation4 + $0x90] sm:$0xff] %v6366
    %6483 = vst [vmem:[#allocation4 + $0x98] sm:$0xff] %v6368
    %6484 = vst [vmem:[#allocation4 + $0xa0] sm:$0xff] %v6168
    %6485 = vst [vmem:[#allocation4 + $0xa8] sm:$0xff] %v6170
    %6486 = vst [vmem:[#allocation4 + $0xb0] sm:$0xff] %v6370
    %6487 = vst [vmem:[#allocation4 + $0xb8] sm:$0xff] %v6372
    %6488 = vst [vmem:[#allocation4 + $0xc0] sm:$0xff] %v6174
    %6489 = vst [vmem:[#allocation4 + $0xc8] sm:$0xff] %v6176
    %6490 = vst [vmem:[#allocation4 + $0xd0] sm:$0xff] %v6376
    %6491 = vst [vmem:[#allocation4 + $0xd8] sm:$0xff] %v6378
    %6492 = vst [vmem:[#allocation4 + $0xe0] sm:$0xff] %v6178
    %6493 = vst [vmem:[#allocation4 + $0xe8] sm:$0xff] %v6180
    %6494 = vst [vmem:[#allocation4 + $0xf0] sm:$0xff] %v6380
    %6495 = vst [vmem:[#allocation4 + $0xf8] sm:$0xff] %v6382
    %6496 = vst [vmem:[#allocation4 + $0x100] sm:$0xff] %v6184
    %6497 = vst [vmem:[#allocation4 + $0x108] sm:$0xff] %v6186
    %6498 = vst [vmem:[#allocation4 + $0x110] sm:$0xff] %v6386
    %6499 = vst [vmem:[#allocation4 + $0x118] sm:$0xff] %v6388
    %6500 = vst [vmem:[#allocation4 + $0x120] sm:$0xff] %v6188
    %6501 = vst [vmem:[#allocation4 + $0x128] sm:$0xff] %v6190
    %6502 = vst [vmem:[#allocation4 + $0x130] sm:$0xff] %v6390
    %6503 = vst [vmem:[#allocation4 + $0x138] sm:$0xff] %v6392
    %6504 = vst [vmem:[#allocation4 + $0x140] sm:$0xff] %v6194
    %6505 = vst [vmem:[#allocation4 + $0x148] sm:$0xff] %v6196
    %6506 = vst [vmem:[#allocation4 + $0x150] sm:$0xff] %v6396
    %6507 = vst [vmem:[#allocation4 + $0x158] sm:$0xff] %v6398
    %6508 = vst [vmem:[#allocation4 + $0x160] sm:$0xff] %v6198
    %6509 = vst [vmem:[#allocation4 + $0x168] sm:$0xff] %v6200
    %6510 = vst [vmem:[#allocation4 + $0x170] sm:$0xff] %v6400
    %6511 = vst [vmem:[#allocation4 + $0x178] sm:$0xff] %v6402
    %6512 = vst [vmem:[#allocation4 + $0x180] sm:$0xff] %v6204
    %6513 = vst [vmem:[#allocation4 + $0x188] sm:$0xff] %v6206
    %6514 = vst [vmem:[#allocation4 + $0x190] sm:$0xff] %v6406
    %6515 = vst [vmem:[#allocation4 + $0x198] sm:$0xff] %v6408
    // Predicated region
    $region46: #{inverse_mapping_network.1} parent=1 // pred_check
      _
    $region47: #{inverse_mapping_network.1} parent=1 // pred_check_branch
      %6517 = sbr.rel (0) target = $region49
    $region48: #{inverse_mapping_network.1} parent=1 // pred_region
      %s6519 = ssub.s32 6656, 6656
      %6520 = vsyncadd [#allocation3], %s6519
      %s6521 = sshll.u32 [#allocation2], 4
      %s6522 = int_to_ptr.vmem [resolvable:$true] %s6521
      %6527 = dma.vmem_to_hbm [thread:$0]  %s6522, 6656, %s11, [#allocation3], 512, 512, 32
    $region49: #{inverse_mapping_network.1} parent=1 // pred_fallthru
      _
    // Predicated region
    $region50: #{inverse_mapping_network.1} parent=1 // pred_check
      _
    $region51: #{inverse_mapping_network.1} parent=1 // pred_check_branch
      %6529 = sbr.rel (0) target = $region53
    $region52: #{inverse_mapping_network.1} parent=1 // pred_region
      %s6531 = ssub.s32 6656, 6656
      %6532 = vsyncadd [#allocation5], %s6531
      %s6533 = sshll.u32 [#allocation4], 4
      %s6534 = int_to_ptr.vmem [resolvable:$true] %s6533
      %6539 = dma.vmem_to_hbm [thread:$0]  %s6534, 6656, %s12, [#allocation5], 512, 512, 32
    $region53: #{inverse_mapping_network.1} parent=1 // pred_fallthru
      _
    // Predicated region
    $region54: #{inverse_mapping_network.1} parent=1 // pred_check
      _
    $region55: #{inverse_mapping_network.1} parent=1 // pred_check_branch
      %6541 = sbr.rel (0) target = $region57
    $region56: #{inverse_mapping_network.1} parent=1 // pred_region
      %6542 = dma.done [#allocation3], 6656
    $region57: #{inverse_mapping_network.1} parent=1 // pred_fallthru
      _
    // Predicated region
    $region58: #{inverse_mapping_network.1} parent=1 // pred_check
      _
    $region59: #{inverse_mapping_network.1} parent=1 // pred_check_branch
      %6544 = sbr.rel (0) target = $region61
    $region60: #{inverse_mapping_network.1} parent=1 // pred_region
      %6545 = dma.done [#allocation5], 6656
    $region61: #{inverse_mapping_network.1} parent=1 // pred_fallthru
      _
    %6546 = vsyncpa [#allocation3], 1
    %6547 = vsyncpa [#allocation5], 1

</llo_original>
